<compile_context>
chip_gen: v7x
topology: tpu7x:2x2x1
jax: 0.10.0
libtpu: 0.0.40
codegen_flags: <defaults>
</compile_context>

<pallas_src>
import math
import functools

import jax
import jax.numpy as jnp
import numpy as np
from jax.experimental import pallas as pl
from jax.experimental.pallas import tpu as pltpu

# -------------------- hyper-params (small, synthetic) --------------------
BATCH   = 2
SEQ     = 8
D_MODEL = 32
N_HEADS = 4
D_K     = D_MODEL // N_HEADS


# -------------------------- Pallas kernel --------------------------------
def _mha_kernel(xq_ref, xk_ref, xv_ref, mask_ref,
                wqkv_ref, wo_ref, bqkv_ref, bo_ref,
                out_ref, attn_ref, *, n_heads: int):
    B, S, D = xq_ref.shape
    H = n_heads
    dk = D // H
    G = B * H                      # (batch, head) groups, b-major: g = b*H + h

    # ---- cheap group replication: leading-dim broadcast + leading merge ----
    def rep_heads(x):              # (B, S, D) -> (G, S, D),  group g uses x[b]
        return jnp.broadcast_to(x[:, None], (B, H, S, D)).reshape(G, S, D)

    def rep_batch(w):              # (H, ...)  -> (G, ...),   group g uses w[h]
        return jnp.broadcast_to(w[None], (B,) + w.shape).reshape(
            (G,) + w.shape[1:])

    # ---- Q/K/V projections: head-major straight out of the MXU ----
    # Head split, y = x @ W.T transpose and the 1/sqrt(dk) scale were folded
    # into the prepared per-head weights, so there is no in-kernel lane
    # slicing or transposition of activations at all.
    def project(x_ref, idx):
        xg = rep_heads(x_ref[...])                 # (G, S, D)
        wg = rep_batch(wqkv_ref[idx])              # (G, D, dk)
        bg = rep_batch(bqkv_ref[idx])              # (G, 1, dk)
        return jnp.einsum('gsd,gdk->gsk', xg, wg,
                          preferred_element_type=jnp.float32) + bg

    q = project(xq_ref, 0)                         # (G, S, dk)
    k = project(xk_ref, 1)                         # (G, S, dk)
    v = project(xv_ref, 2)                         # (G, S, dk)

    # ---- scores for every (batch, head) group in one batched contraction ----
    scores = jnp.einsum('gqd,gkd->gqk', q, k,
                        preferred_element_type=jnp.float32)       # (G, S, S)
    mask_g = jnp.broadcast_to(mask_ref[...][:, None],
                              (B, H, S, S)).reshape(G, S, S)
    scores = scores + mask_g                                      # additive mask

    # ---- numerically-stable softmax in f32 ----
    m = jnp.max(scores, axis=-1, keepdims=True)
    e = jnp.exp(scores - m)
    l = jnp.sum(e, axis=-1, keepdims=True)
    attn = e * pl.reciprocal(l, approx=False)                     # (G, S, S)

    # Attention-map output: b-major (G,S,S) == (B,H,S,S) after a free
    # leading-dim split; written once for the whole problem.
    attn_ref[...] = attn.reshape(B, H, S, S).astype(attn_ref.dtype)

    # ---- context, batched over groups ----
    ctx = jnp.einsum('gqk,gkd->gqd', attn, v,
                     preferred_element_type=jnp.float32)          # (G, S, dk)

    # ---- output projection ----
    # One batched MXU contraction with the head-split fc weight produces the
    # per-head partials; accumulating them over H is numerically identical to
    # the single K = H*dk contraction (kept in this form to avoid an
    # in-kernel head-interleave relayout of ctx).
    part = jnp.einsum('gsd,gdn->gsn', ctx, rep_batch(wo_ref[...]),
                      preferred_element_type=jnp.float32)         # (G, S, D)
    part = part.reshape(B, H, S, D)                               # free split
    out = part[:, 0]
    for h in range(1, H):
        out = out + part[:, h]
    out = out + bo_ref[...]
    out_ref[...] = out.astype(out_ref.dtype)


# ------------------- one-time parameter preprocessing ---------------------
def prepare_mha_params(params, n_heads=N_HEADS):
    """Hoisted out of the per-call path (run once at init):
       - pre-transpose every nn.Linear weight (y = x @ W.T),
       - split Q/K/V/fc weights and Q/K/V biases per head,
       - fold the 1/sqrt(d_k) attention scale into the Q projection."""
    wq, bq, wk, bk, wv, bv, wo, bo = params
    D = wq.shape[0]
    H = n_heads
    dk = D // H
    scale = jnp.float32(1.0 / math.sqrt(dk))

    def split_w(w, s=jnp.float32(1.0)):
        # (D, D) PyTorch Linear weight -> (H, D, dk), W.T pre-applied.
        return (w.T * s).reshape(D, H, dk).transpose(1, 0, 2)

    def split_b(b, s=jnp.float32(1.0)):
        # (1, D) bias -> (H, 1, dk)
        return (b.reshape(H, dk) * s)[:, None, :]

    wqkv_h = jnp.stack([split_w(wq, scale), split_w(wk), split_w(wv)], axis=0)
    bqkv_h = jnp.stack([split_b(bq, scale), split_b(bk), split_b(bv)], axis=0)
    wo_h = wo.T.reshape(H, dk, D)          # per-head rows of fc's W.T
    bo2 = bo.reshape(1, D)
    return wqkv_h, wo_h, bqkv_h, bo2       # (3,H,D,dk), (H,dk,D), (3,H,1,dk), (1,D)


# ----------------------------- wrapper ------------------------------------
def multi_head_attention(xq, xk, xv, attn_mask, prepared):
    """xq/xk/xv: [B,S,D] f32; attn_mask: [B,S,S] int (nonzero == masked)."""
    B, S, D = xq.shape
    wqkv_h, wo_h, bqkv_h, bo2 = prepared
    H = wo_h.shape[0]
    dk = D // H

    # Per-call mask prep: int mask -> additive f32 mask (single in-kernel add).
    mask_add = jnp.where(attn_mask != 0, jnp.float32(-1e9), jnp.float32(0.0))

    def full(shape):
        return pl.BlockSpec(shape, lambda i, _s=shape: (0,) * len(_s))

    kernel = functools.partial(_mha_kernel, n_heads=H)

    out, attn = pl.pallas_call(
        kernel,
        out_shape=[jax.ShapeDtypeStruct((B, S, D), jnp.float32),
                   jax.ShapeDtypeStruct((B, H, S, S), jnp.float32)],
        grid=(1,),                                  # single step: whole problem
        in_specs=[full((B, S, D)), full((B, S, D)), full((B, S, D)),
                  full((B, S, S)),
                  full((3, H, D, dk)), full((H, dk, D)),
                  full((3, H, 1, dk)), full((1, D))],
        out_specs=[full((B, S, D)), full((B, H, S, S))],
        compiler_params=pltpu.CompilerParams(
            dimension_semantics=("arbitrary",)),
    )(xq, xk, xv, mask_add, wqkv_h, wo_h, bqkv_h, bo2)
    return out, attn


# --------------------- pure-JAX reference (for checking) ------------------
def reference_mha(xq, xk, xv, attn_mask, params):
    wq, bq, wk, bk, wv, bv, wo, bo = params
    B, S, D = xq.shape
    H, dk = N_HEADS, D_K

    def proj(x, w, b):
        return x @ w.T + b[0]

    q = proj(xq, wq, bq).reshape(B, S, H, dk).transpose(0, 2, 1, 3)
    k = proj(xk, wk, bk).reshape(B, S, H, dk).transpose(0, 2, 1, 3)
    v = proj(xv, wv, bv).reshape(B, S, H, dk).transpose(0, 2, 1, 3)

    scores = jnp.einsum('bhqd,bhkd->bhqk', q, k) / math.sqrt(dk)
    mask4 = (attn_mask != 0)[:, None, :, :]
    scores = jnp.where(mask4, -1e9, scores)
    attn = jax.nn.softmax(scores, axis=-1)
    ctx = jnp.einsum('bhqk,bhkd->bhqd', attn, v)
    ctx = ctx.transpose(0, 2, 1, 3).reshape(B, S, D)
    out = ctx @ wo.T + bo[0]
    return out, attn


# ------------------------------- main --------------------------------------
if __name__ == "__main__":
    key = jax.random.PRNGKey(0)
    ks = jax.random.split(key, 12)

    bound = 1.0 / math.sqrt(D_MODEL)  # PyTorch nn.Linear default init range

    def init_w(k):
        return jax.random.uniform(k, (D_MODEL, D_MODEL), jnp.float32, -bound, bound)

    def init_b(k):
        return jax.random.uniform(k, (1, D_MODEL), jnp.float32, -bound, bound)

    params = (init_w(ks[0]), init_b(ks[1]),   # W_Q, b_Q
              init_w(ks[2]), init_b(ks[3]),   # W_K, b_K
              init_w(ks[4]), init_b(ks[5]),   # W_V, b_V
              init_w(ks[6]), init_b(ks[7]))   # fc

    # One-time preprocessing (hoisted out of the per-call path).
    prepared = prepare_mha_params(params, N_HEADS)
    prepared = jax.block_until_ready(prepared)

    xq = jax.random.normal(ks[8],  (BATCH, SEQ, D_MODEL), jnp.float32)
    xk = jax.random.normal(ks[9],  (BATCH, SEQ, D_MODEL), jnp.float32)
    xv = jax.random.normal(ks[10], (BATCH, SEQ, D_MODEL), jnp.float32)

    # causal-style boolean mask (nonzero == masked), as int32
    tri = jnp.triu(jnp.ones((SEQ, SEQ), jnp.int32), k=1)
    attn_mask = jnp.broadcast_to(tri, (BATCH, SEQ, SEQ)).astype(jnp.int32)

    out, attn = multi_head_attention(xq, xk, xv, attn_mask, prepared)
    jax.block_until_ready((out, attn))

    out_ref, attn_ref = reference_mha(xq, xk, xv, attn_mask, params)
    np.testing.assert_allclose(np.asarray(out), np.asarray(out_ref),
                               rtol=1e-4, atol=1e-4)
    np.testing.assert_allclose(np.asarray(attn), np.asarray(attn_ref),
                               rtol=1e-4, atol=1e-4)

    print("KERNEL_OK")
</pallas_src>

<mosaic_0001>
module attributes {stable_mosaic.version = 11 : i64} {
  func.func @_mha_kernel(%arg0: i32, %arg1: memref<2x8x32xf32, #tpu.memory_space<vmem>>, %arg2: memref<2x8x32xf32, #tpu.memory_space<vmem>>, %arg3: memref<2x8x32xf32, #tpu.memory_space<vmem>>, %arg4: memref<2x8x8xf32, #tpu.memory_space<vmem>>, %arg5: memref<3x4x32x8xf32, #tpu.memory_space<vmem>>, %arg6: memref<4x8x32xf32, #tpu.memory_space<vmem>>, %arg7: memref<3x4x1x8xf32, #tpu.memory_space<vmem>>, %arg8: memref<1x32xf32, #tpu.memory_space<vmem>>, %arg9: memref<2x8x32xf32, #tpu.memory_space<vmem>>, %arg10: memref<2x4x8x8xf32, #tpu.memory_space<vmem>>) attributes {dimension_semantics = [#tpu.dimension_semantics<arbitrary>], iteration_bounds = array<i64: 1>, scalar_prefetch = 0 : i64, scratch_operands = 0 : i64, tpu.core_type = #tpu.core_type<tc>, window_params = [{pipeline_mode = #tpu.pipeline_mode<synchronous>, transform_indices = @transform_0, window_bounds = array<i64: 2, 8, 32>}, {pipeline_mode = #tpu.pipeline_mode<synchronous>, transform_indices = @transform_1, window_bounds = array<i64: 2, 8, 32>}, {pipeline_mode = #tpu.pipeline_mode<synchronous>, transform_indices = @transform_2, window_bounds = array<i64: 2, 8, 32>}, {pipeline_mode = #tpu.pipeline_mode<synchronous>, transform_indices = @transform_3, window_bounds = array<i64: 2, 8, 8>}, {pipeline_mode = #tpu.pipeline_mode<synchronous>, transform_indices = @transform_4, window_bounds = array<i64: 3, 4, 32, 8>}, {pipeline_mode = #tpu.pipeline_mode<synchronous>, transform_indices = @transform_5, window_bounds = array<i64: 4, 8, 32>}, {pipeline_mode = #tpu.pipeline_mode<synchronous>, transform_indices = @transform_6, window_bounds = array<i64: 3, 4, 1, 8>}, {pipeline_mode = #tpu.pipeline_mode<synchronous>, transform_indices = @transform_7, window_bounds = array<i64: 1, 32>}, {pipeline_mode = #tpu.pipeline_mode<synchronous>, transform_indices = @transform_8, window_bounds = array<i64: 2, 8, 32>}, {pipeline_mode = #tpu.pipeline_mode<synchronous>, transform_indices = @transform_9, window_bounds = array<i64: 2, 4, 8, 8>}]} {
    %c0 = arith.constant 0 : index
    %c0_0 = arith.constant 0 : index
    %c0_1 = arith.constant 0 : index
    %0 = vector.load %arg1[%c0, %c0_0, %c0_1] : memref<2x8x32xf32, #tpu.memory_space<vmem>>, vector<2x8x32xf32>
    %1 = vector.shape_cast %0 : vector<2x8x32xf32> to vector<2x1x8x32xf32>
    %2 = vector.shape_cast %1 : vector<2x1x8x32xf32> to vector<2x1x8x32xf32>
    %3 = vector.broadcast %2 : vector<2x1x8x32xf32> to vector<2x4x8x32xf32>
    %4 = vector.shape_cast %3 : vector<2x4x8x32xf32> to vector<8x8x32xf32>
    %c0_2 = arith.constant 0 : index
    %c0_3 = arith.constant 0 : index
    %c0_4 = arith.constant 0 : index
    %c0_5 = arith.constant 0 : index
    %5 = vector.load %arg5[%c0_2, %c0_3, %c0_4, %c0_5] : memref<3x4x32x8xf32, #tpu.memory_space<vmem>>, vector<1x4x32x8xf32>
    %6 = vector.shape_cast %5 : vector<1x4x32x8xf32> to vector<4x32x8xf32>
    %7 = vector.shape_cast %6 : vector<4x32x8xf32> to vector<1x4x32x8xf32>
    %8 = vector.shape_cast %7 : vector<1x4x32x8xf32> to vector<1x4x32x8xf32>
    %9 = vector.broadcast %8 : vector<1x4x32x8xf32> to vector<2x4x32x8xf32>
    %10 = vector.shape_cast %9 : vector<2x4x32x8xf32> to vector<8x32x8xf32>
    %c0_6 = arith.constant 0 : index
    %c0_7 = arith.constant 0 : index
    %c0_8 = arith.constant 0 : index
    %c0_9 = arith.constant 0 : index
    %11 = vector.load %arg7[%c0_6, %c0_7, %c0_8, %c0_9] : memref<3x4x1x8xf32, #tpu.memory_space<vmem>>, vector<1x4x1x8xf32>
    %12 = vector.shape_cast %11 : vector<1x4x1x8xf32> to vector<4x1x8xf32>
    %13 = vector.shape_cast %12 : vector<4x1x8xf32> to vector<1x4x1x8xf32>
    %14 = vector.shape_cast %13 : vector<1x4x1x8xf32> to vector<1x4x1x8xf32>
    %15 = vector.broadcast %14 : vector<1x4x1x8xf32> to vector<2x4x1x8xf32>
    %16 = vector.shape_cast %15 : vector<2x4x1x8xf32> to vector<8x1x8xf32>
    "tpu.trace_start"() <{level = 10 : i32, message = "gsd,gdk->gsk"}> : () -> ()
    %cst = arith.constant dense<0.000000e+00> : vector<8x8x8xf32>
    %17 = tpu.matmul %4, %10, %cst {dimension_numbers = #tpu.dot_dimension_numbers<[2], [1], [1], [2], [0, 0, 0, 1, 1, 2], [0], [0]>} : vector<8x8x32xf32>, vector<8x32x8xf32>, vector<8x8x8xf32> -> vector<8x8x8xf32>
    "tpu.trace_stop"() : () -> ()
    %18 = vector.broadcast %16 : vector<8x1x8xf32> to vector<8x8x8xf32>
    %19 = arith.addf %17, %18 : vector<8x8x8xf32>
    %c0_10 = arith.constant 0 : index
    %c0_11 = arith.constant 0 : index
    %c0_12 = arith.constant 0 : index
    %20 = vector.load %arg2[%c0_10, %c0_11, %c0_12] : memref<2x8x32xf32, #tpu.memory_space<vmem>>, vector<2x8x32xf32>
    %21 = vector.shape_cast %20 : vector<2x8x32xf32> to vector<2x1x8x32xf32>
    %22 = vector.shape_cast %21 : vector<2x1x8x32xf32> to vector<2x1x8x32xf32>
    %23 = vector.broadcast %22 : vector<2x1x8x32xf32> to vector<2x4x8x32xf32>
    %24 = vector.shape_cast %23 : vector<2x4x8x32xf32> to vector<8x8x32xf32>
    %c1 = arith.constant 1 : index
    %c0_13 = arith.constant 0 : index
    %c0_14 = arith.constant 0 : index
    %c0_15 = arith.constant 0 : index
    %25 = vector.load %arg5[%c1, %c0_13, %c0_14, %c0_15] : memref<3x4x32x8xf32, #tpu.memory_space<vmem>>, vector<1x4x32x8xf32>
    %26 = vector.shape_cast %25 : vector<1x4x32x8xf32> to vector<4x32x8xf32>
    %27 = vector.shape_cast %26 : vector<4x32x8xf32> to vector<1x4x32x8xf32>
    %28 = vector.shape_cast %27 : vector<1x4x32x8xf32> to vector<1x4x32x8xf32>
    %29 = vector.broadcast %28 : vector<1x4x32x8xf32> to vector<2x4x32x8xf32>
    %30 = vector.shape_cast %29 : vector<2x4x32x8xf32> to vector<8x32x8xf32>
    %c1_16 = arith.constant 1 : index
    %c0_17 = arith.constant 0 : index
    %c0_18 = arith.constant 0 : index
    %c0_19 = arith.constant 0 : index
    %31 = vector.load %arg7[%c1_16, %c0_17, %c0_18, %c0_19] : memref<3x4x1x8xf32, #tpu.memory_space<vmem>>, vector<1x4x1x8xf32>
    %32 = vector.shape_cast %31 : vector<1x4x1x8xf32> to vector<4x1x8xf32>
    %33 = vector.shape_cast %32 : vector<4x1x8xf32> to vector<1x4x1x8xf32>
    %34 = vector.shape_cast %33 : vector<1x4x1x8xf32> to vector<1x4x1x8xf32>
    %35 = vector.broadcast %34 : vector<1x4x1x8xf32> to vector<2x4x1x8xf32>
    %36 = vector.shape_cast %35 : vector<2x4x1x8xf32> to vector<8x1x8xf32>
    "tpu.trace_start"() <{level = 10 : i32, message = "gsd,gdk->gsk"}> : () -> ()
    %cst_20 = arith.constant dense<0.000000e+00> : vector<8x8x8xf32>
    %37 = tpu.matmul %24, %30, %cst_20 {dimension_numbers = #tpu.dot_dimension_numbers<[2], [1], [1], [2], [0, 0, 0, 1, 1, 2], [0], [0]>} : vector<8x8x32xf32>, vector<8x32x8xf32>, vector<8x8x8xf32> -> vector<8x8x8xf32>
    "tpu.trace_stop"() : () -> ()
    %38 = vector.broadcast %36 : vector<8x1x8xf32> to vector<8x8x8xf32>
    %39 = arith.addf %37, %38 : vector<8x8x8xf32>
    %c0_21 = arith.constant 0 : index
    %c0_22 = arith.constant 0 : index
    %c0_23 = arith.constant 0 : index
    %40 = vector.load %arg3[%c0_21, %c0_22, %c0_23] : memref<2x8x32xf32, #tpu.memory_space<vmem>>, vector<2x8x32xf32>
    %41 = vector.shape_cast %40 : vector<2x8x32xf32> to vector<2x1x8x32xf32>
    %42 = vector.shape_cast %41 : vector<2x1x8x32xf32> to vector<2x1x8x32xf32>
    %43 = vector.broadcast %42 : vector<2x1x8x32xf32> to vector<2x4x8x32xf32>
    %44 = vector.shape_cast %43 : vector<2x4x8x32xf32> to vector<8x8x32xf32>
    %c2 = arith.constant 2 : index
    %c0_24 = arith.constant 0 : index
    %c0_25 = arith.constant 0 : index
    %c0_26 = arith.constant 0 : index
    %45 = vector.load %arg5[%c2, %c0_24, %c0_25, %c0_26] : memref<3x4x32x8xf32, #tpu.memory_space<vmem>>, vector<1x4x32x8xf32>
    %46 = vector.shape_cast %45 : vector<1x4x32x8xf32> to vector<4x32x8xf32>
    %47 = vector.shape_cast %46 : vector<4x32x8xf32> to vector<1x4x32x8xf32>
    %48 = vector.shape_cast %47 : vector<1x4x32x8xf32> to vector<1x4x32x8xf32>
    %49 = vector.broadcast %48 : vector<1x4x32x8xf32> to vector<2x4x32x8xf32>
    %50 = vector.shape_cast %49 : vector<2x4x32x8xf32> to vector<8x32x8xf32>
    %c2_27 = arith.constant 2 : index
    %c0_28 = arith.constant 0 : index
    %c0_29 = arith.constant 0 : index
    %c0_30 = arith.constant 0 : index
    %51 = vector.load %arg7[%c2_27, %c0_28, %c0_29, %c0_30] : memref<3x4x1x8xf32, #tpu.memory_space<vmem>>, vector<1x4x1x8xf32>
    %52 = vector.shape_cast %51 : vector<1x4x1x8xf32> to vector<4x1x8xf32>
    %53 = vector.shape_cast %52 : vector<4x1x8xf32> to vector<1x4x1x8xf32>
    %54 = vector.shape_cast %53 : vector<1x4x1x8xf32> to vector<1x4x1x8xf32>
    %55 = vector.broadcast %54 : vector<1x4x1x8xf32> to vector<2x4x1x8xf32>
    %56 = vector.shape_cast %55 : vector<2x4x1x8xf32> to vector<8x1x8xf32>
    "tpu.trace_start"() <{level = 10 : i32, message = "gsd,gdk->gsk"}> : () -> ()
    %cst_31 = arith.constant dense<0.000000e+00> : vector<8x8x8xf32>
    %57 = tpu.matmul %44, %50, %cst_31 {dimension_numbers = #tpu.dot_dimension_numbers<[2], [1], [1], [2], [0, 0, 0, 1, 1, 2], [0], [0]>} : vector<8x8x32xf32>, vector<8x32x8xf32>, vector<8x8x8xf32> -> vector<8x8x8xf32>
    "tpu.trace_stop"() : () -> ()
    %58 = vector.broadcast %56 : vector<8x1x8xf32> to vector<8x8x8xf32>
    %59 = arith.addf %57, %58 : vector<8x8x8xf32>
    "tpu.trace_start"() <{level = 10 : i32, message = "gqd,gkd->gqk"}> : () -> ()
    %cst_32 = arith.constant dense<0.000000e+00> : vector<8x8x8xf32>
    %60 = tpu.matmul %19, %39, %cst_32 {dimension_numbers = #tpu.dot_dimension_numbers<[2], [2], [1], [1], [0, 0, 0, 1, 1, 1], [0], [0]>} : vector<8x8x8xf32>, vector<8x8x8xf32>, vector<8x8x8xf32> -> vector<8x8x8xf32>
    "tpu.trace_stop"() : () -> ()
    %c0_33 = arith.constant 0 : index
    %c0_34 = arith.constant 0 : index
    %c0_35 = arith.constant 0 : index
    %61 = vector.load %arg4[%c0_33, %c0_34, %c0_35] : memref<2x8x8xf32, #tpu.memory_space<vmem>>, vector<2x8x8xf32>
    %62 = vector.shape_cast %61 : vector<2x8x8xf32> to vector<2x1x8x8xf32>
    %63 = vector.shape_cast %62 : vector<2x1x8x8xf32> to vector<2x1x8x8xf32>
    %64 = vector.broadcast %63 : vector<2x1x8x8xf32> to vector<2x4x8x8xf32>
    %65 = vector.shape_cast %64 : vector<2x4x8x8xf32> to vector<8x8x8xf32>
    %66 = arith.addf %60, %65 : vector<8x8x8xf32>
    %cst_36 = arith.constant dense<0xFF800000> : vector<8x8xf32>
    %67 = vector.multi_reduction <maximumf>, %66, %cst_36 [2] : vector<8x8x8xf32> to vector<8x8xf32>
    %68 = vector.shape_cast %67 : vector<8x8xf32> to vector<8x8x1xf32>
    %69 = vector.broadcast %68 : vector<8x8x1xf32> to vector<8x8x8xf32>
    %70 = arith.subf %66, %69 : vector<8x8x8xf32>
    %71 = math.exp %70 : vector<8x8x8xf32>
    %cst_37 = arith.constant dense<0.000000e+00> : vector<8x8xf32>
    %72 = vector.multi_reduction <add>, %71, %cst_37 [2] : vector<8x8x8xf32> to vector<8x8xf32>
    %73 = vector.shape_cast %72 : vector<8x8xf32> to vector<8x8x1xf32>
    %74 = tpu.reciprocal %73 : vector<8x8x1xf32> -> vector<8x8x1xf32>
    %75 = vector.broadcast %74 : vector<8x8x1xf32> to vector<8x8x8xf32>
    %76 = arith.mulf %71, %75 : vector<8x8x8xf32>
    %77 = vector.shape_cast %76 : vector<8x8x8xf32> to vector<2x4x8x8xf32>
    %c0_38 = arith.constant 0 : index
    %c0_39 = arith.constant 0 : index
    %c0_40 = arith.constant 0 : index
    %c0_41 = arith.constant 0 : index
    %78 = vector.load %arg10[%c0_38, %c0_39, %c0_40, %c0_41] : memref<2x4x8x8xf32, #tpu.memory_space<vmem>>, vector<2x4x8x8xf32>
    tpu.vector_store %arg10[%c0_38, %c0_39, %c0_40, %c0_41], %77 {strides = array<i32>} : memref<2x4x8x8xf32, #tpu.memory_space<vmem>>, vector<2x4x8x8xf32>,
    "tpu.trace_start"() <{level = 10 : i32, message = "gqk,gkd->gqd"}> : () -> ()
    %cst_42 = arith.constant dense<0.000000e+00> : vector<8x8x8xf32>
    %79 = tpu.matmul %76, %59, %cst_42 {dimension_numbers = #tpu.dot_dimension_numbers<[2], [1], [1], [2], [0, 0, 0, 1, 1, 2], [0], [0]>} : vector<8x8x8xf32>, vector<8x8x8xf32>, vector<8x8x8xf32> -> vector<8x8x8xf32>
    "tpu.trace_stop"() : () -> ()
    %c0_43 = arith.constant 0 : index
    %c0_44 = arith.constant 0 : index
    %c0_45 = arith.constant 0 : index
    %80 = vector.load %arg6[%c0_43, %c0_44, %c0_45] : memref<4x8x32xf32, #tpu.memory_space<vmem>>, vector<4x8x32xf32>
    %81 = vector.shape_cast %80 : vector<4x8x32xf32> to vector<1x4x8x32xf32>
    %82 = vector.shape_cast %81 : vector<1x4x8x32xf32> to vector<1x4x8x32xf32>
    %83 = vector.broadcast %82 : vector<1x4x8x32xf32> to vector<2x4x8x32xf32>
    %84 = vector.shape_cast %83 : vector<2x4x8x32xf32> to vector<8x8x32xf32>
    "tpu.trace_start"() <{level = 10 : i32, message = "gsd,gdn->gsn"}> : () -> ()
    %cst_46 = arith.constant dense<0.000000e+00> : vector<8x8x32xf32>
    %85 = tpu.matmul %79, %84, %cst_46 {dimension_numbers = #tpu.dot_dimension_numbers<[2], [1], [1], [2], [0, 0, 0, 1, 1, 2], [0], [0]>} : vector<8x8x8xf32>, vector<8x8x32xf32>, vector<8x8x32xf32> -> vector<8x8x32xf32>
    "tpu.trace_stop"() : () -> ()
    %86 = vector.shape_cast %85 : vector<8x8x32xf32> to vector<2x4x8x32xf32>
    %87 = vector.extract_strided_slice %86 {offsets = [0, 0, 0, 0], sizes = [2, 1, 8, 32], strides = [1, 1, 1, 1]} : vector<2x4x8x32xf32> to vector<2x1x8x32xf32>
    %88 = vector.shape_cast %87 : vector<2x1x8x32xf32> to vector<2x8x32xf32>
    %89 = vector.extract_strided_slice %86 {offsets = [0, 1, 0, 0], sizes = [2, 1, 8, 32], strides = [1, 1, 1, 1]} : vector<2x4x8x32xf32> to vector<2x1x8x32xf32>
    %90 = vector.shape_cast %89 : vector<2x1x8x32xf32> to vector<2x8x32xf32>
    %91 = arith.addf %88, %90 : vector<2x8x32xf32>
    %92 = vector.extract_strided_slice %86 {offsets = [0, 2, 0, 0], sizes = [2, 1, 8, 32], strides = [1, 1, 1, 1]} : vector<2x4x8x32xf32> to vector<2x1x8x32xf32>
    %93 = vector.shape_cast %92 : vector<2x1x8x32xf32> to vector<2x8x32xf32>
    %94 = arith.addf %91, %93 : vector<2x8x32xf32>
    %95 = vector.extract_strided_slice %86 {offsets = [0, 3, 0, 0], sizes = [2, 1, 8, 32], strides = [1, 1, 1, 1]} : vector<2x4x8x32xf32> to vector<2x1x8x32xf32>
    %96 = vector.shape_cast %95 : vector<2x1x8x32xf32> to vector<2x8x32xf32>
    %97 = arith.addf %94, %96 : vector<2x8x32xf32>
    %c0_47 = arith.constant 0 : index
    %c0_48 = arith.constant 0 : index
    %98 = vector.load %arg8[%c0_47, %c0_48] : memref<1x32xf32, #tpu.memory_space<vmem>>, vector<1x32xf32>
    %99 = vector.shape_cast %98 : vector<1x32xf32> to vector<1x1x32xf32>
    %100 = vector.broadcast %99 : vector<1x1x32xf32> to vector<2x8x32xf32>
    %101 = arith.addf %97, %100 : vector<2x8x32xf32>
    %c0_49 = arith.constant 0 : index
    %c0_50 = arith.constant 0 : index
    %c0_51 = arith.constant 0 : index
    %102 = vector.load %arg9[%c0_49, %c0_50, %c0_51] : memref<2x8x32xf32, #tpu.memory_space<vmem>>, vector<2x8x32xf32>
    tpu.vector_store %arg9[%c0_49, %c0_50, %c0_51], %101 {strides = array<i32>} : memref<2x8x32xf32, #tpu.memory_space<vmem>>, vector<2x8x32xf32>,
    return
  }
  func.func @transform_0(%arg0: i32) -> (i32, i32, i32) {
    %c0_i32 = arith.constant 0 : i32
    %c0_i32_0 = arith.constant 0 : i32
    %c0_i32_1 = arith.constant 0 : i32
    %c0_i32_2 = arith.constant 0 : i32
    return %c0_i32, %c0_i32_0, %c0_i32_1 : i32, i32, i32
  }
  func.func @transform_1(%arg0: i32) -> (i32, i32, i32) {
    %c0_i32 = arith.constant 0 : i32
    %c0_i32_0 = arith.constant 0 : i32
    %c0_i32_1 = arith.constant 0 : i32
    %c0_i32_2 = arith.constant 0 : i32
    return %c0_i32, %c0_i32_0, %c0_i32_1 : i32, i32, i32
  }
  func.func @transform_2(%arg0: i32) -> (i32, i32, i32) {
    %c0_i32 = arith.constant 0 : i32
    %c0_i32_0 = arith.constant 0 : i32
    %c0_i32_1 = arith.constant 0 : i32
    %c0_i32_2 = arith.constant 0 : i32
    return %c0_i32, %c0_i32_0, %c0_i32_1 : i32, i32, i32
  }
  func.func @transform_3(%arg0: i32) -> (i32, i32, i32) {
    %c0_i32 = arith.constant 0 : i32
    %c0_i32_0 = arith.constant 0 : i32
    %c0_i32_1 = arith.constant 0 : i32
    %c0_i32_2 = arith.constant 0 : i32
    return %c0_i32, %c0_i32_0, %c0_i32_1 : i32, i32, i32
  }
  func.func @transform_4(%arg0: i32) -> (i32, i32, i32, i32) {
    %c0_i32 = arith.constant 0 : i32
    %c0_i32_0 = arith.constant 0 : i32
    %c0_i32_1 = arith.constant 0 : i32
    %c0_i32_2 = arith.constant 0 : i32
    %c0_i32_3 = arith.constant 0 : i32
    return %c0_i32, %c0_i32_0, %c0_i32_1, %c0_i32_2 : i32, i32, i32, i32
  }
  func.func @transform_5(%arg0: i32) -> (i32, i32, i32) {
    %c0_i32 = arith.constant 0 : i32
    %c0_i32_0 = arith.constant 0 : i32
    %c0_i32_1 = arith.constant 0 : i32
    %c0_i32_2 = arith.constant 0 : i32
    return %c0_i32, %c0_i32_0, %c0_i32_1 : i32, i32, i32
  }
  func.func @transform_6(%arg0: i32) -> (i32, i32, i32, i32) {
    %c0_i32 = arith.constant 0 : i32
    %c0_i32_0 = arith.constant 0 : i32
    %c0_i32_1 = arith.constant 0 : i32
    %c0_i32_2 = arith.constant 0 : i32
    %c0_i32_3 = arith.constant 0 : i32
    return %c0_i32, %c0_i32_0, %c0_i32_1, %c0_i32_2 : i32, i32, i32, i32
  }
  func.func @transform_7(%arg0: i32) -> (i32, i32) {
    %c0_i32 = arith.constant 0 : i32
    %c0_i32_0 = arith.constant 0 : i32
    %c0_i32_1 = arith.constant 0 : i32
    return %c0_i32, %c0_i32_0 : i32, i32
  }
  func.func @transform_8(%arg0: i32) -> (i32, i32, i32) {
    %c0_i32 = arith.constant 0 : i32
    %c0_i32_0 = arith.constant 0 : i32
    %c0_i32_1 = arith.constant 0 : i32
    %c0_i32_2 = arith.constant 0 : i32
    return %c0_i32, %c0_i32_0, %c0_i32_1 : i32, i32, i32
  }
  func.func @transform_9(%arg0: i32) -> (i32, i32, i32, i32) {
    %c0_i32 = arith.constant 0 : i32
    %c0_i32_0 = arith.constant 0 : i32
    %c0_i32_1 = arith.constant 0 : i32
    %c0_i32_2 = arith.constant 0 : i32
    %c0_i32_3 = arith.constant 0 : i32
    return %c0_i32, %c0_i32_0, %c0_i32_1, %c0_i32_2 : i32, i32, i32, i32
  }
}

</mosaic_0001>

<llo_original>
// kernel: tpu_custom_call.1
$region0: #{tpu_custom_call.1}
  #allocation0 [shape = 'u32[]', space=smem, size = 0x4, offset = 0x4, fixed_abs, tag = 'smem constant byte address 0x4 - core index']
  #allocation1 [shape = 'u32[144,128]{1,0:T(1,128)}', space=vmem, size = 0x12000, scoped, tag = 'internal scratch']
  %s0 = inlined_call_operand.vmem [shape: f32[2,8,32], index: 0, kind: input, shape index: {}]
  %s1 = inlined_call_operand.vmem [shape: f32[2,8,32], index: 1, kind: input, shape index: {}]
  %s2 = inlined_call_operand.vmem [shape: f32[2,8,32], index: 2, kind: input, shape index: {}]
  %s3 = inlined_call_operand.vmem [shape: f32[2,8,8], index: 3, kind: input, shape index: {}]
  %s4 = inlined_call_operand.vmem [shape: f32[3,4,32,8], index: 4, kind: input, shape index: {}]
  %s5 = inlined_call_operand.vmem [shape: f32[4,8,32], index: 5, kind: input, shape index: {}]
  %s6 = inlined_call_operand.vmem [shape: f32[3,4,1,8], index: 6, kind: input, shape index: {}]
  %s7 = inlined_call_operand.vmem [shape: f32[1,32], index: 7, kind: input, shape index: {}]
  %s8 = inlined_call_operand.hbm [shape: f32[2,8,32], index: 8, kind: output, shape index: {0}]
  %s9 = inlined_call_operand.hbm [shape: f32[2,4,8,8], index: 9, kind: output, shape index: {1}]
  %10 = xla_tuple %s8, %s9
  %s11 = sld [smem:[#allocation0]]
  $region50: #{tpu_custom_call.1} parent=0
    _
  %s13 = ssub.s32 1, %s11
  %s14 = scalar_select 0, %s13, %s11
  $region1: #{tpu_custom_call.1} parent=0
    #allocation2 [shape = 'u8[8192]{0}', space=vmem, size = 0x2000, scoped, tag = 'output window, operand 0, single buffered']
    #allocation3 [shape = 's32[1]{0}', space=sflag, size = 0x4, scoped, tag = 'scoped memory for tpu_custom_call.1']
    #allocation4 [shape = 'u8[32768]{0}', space=vmem, size = 0x8000, scoped, tag = 'output window, operand 1, single buffered']
    #allocation5 [shape = 's32[1]{0}', space=sflag, size = 0x4, scoped, tag = 'scoped memory for tpu_custom_call.1']
    %15 = vsyncpa [#allocation3], 0
    %16 = vsyncpa [#allocation5], 0
    // Predicated region
    $region2: #{tpu_custom_call.1} parent=1 // pred_check
      _
    $region3: #{tpu_custom_call.1} parent=1 // pred_check_branch
      %18 = sbr.rel (0) target = $region5
    $region4: #{tpu_custom_call.1} parent=1 // pred_region
      _
    $region5: #{tpu_custom_call.1} parent=1 // pred_fallthru
      _
    // Predicated region
    $region6: #{tpu_custom_call.1} parent=1 // pred_check
      _
    $region7: #{tpu_custom_call.1} parent=1 // pred_check_branch
      %20 = sbr.rel (0) target = $region9
    $region8: #{tpu_custom_call.1} parent=1 // pred_region
      _
    $region9: #{tpu_custom_call.1} parent=1 // pred_fallthru
      _
    // Predicated region
    $region10: #{tpu_custom_call.1} parent=1 // pred_check
      _
    $region11: #{tpu_custom_call.1} parent=1 // pred_check_branch
      %22 = sbr.rel (0) target = $region13
    $region12: #{tpu_custom_call.1} parent=1 // pred_region
      _
    $region13: #{tpu_custom_call.1} parent=1 // pred_fallthru
      _
    // Predicated region
    $region14: #{tpu_custom_call.1} parent=1 // pred_check
      _
    $region15: #{tpu_custom_call.1} parent=1 // pred_check_branch
      %24 = sbr.rel (0) target = $region17
    $region16: #{tpu_custom_call.1} parent=1 // pred_region
      _
    $region17: #{tpu_custom_call.1} parent=1 // pred_fallthru
      _
    // Predicated region
    $region18: #{tpu_custom_call.1} parent=1 // pred_check
      _
    $region19: #{tpu_custom_call.1} parent=1 // pred_check_branch
      %26 = sbr.rel (0) target = $region21
    $region20: #{tpu_custom_call.1} parent=1 // pred_region
      _
    $region21: #{tpu_custom_call.1} parent=1 // pred_fallthru
      _
    // Predicated region
    $region22: #{tpu_custom_call.1} parent=1 // pred_check
      _
    $region23: #{tpu_custom_call.1} parent=1 // pred_check_branch
      %28 = sbr.rel (0) target = $region25
    $region24: #{tpu_custom_call.1} parent=1 // pred_region
      _
    $region25: #{tpu_custom_call.1} parent=1 // pred_fallthru
      _
    // Predicated region
    $region26: #{tpu_custom_call.1} parent=1 // pred_check
      _
    $region27: #{tpu_custom_call.1} parent=1 // pred_check_branch
      %30 = sbr.rel (0) target = $region29
    $region28: #{tpu_custom_call.1} parent=1 // pred_region
      _
    $region29: #{tpu_custom_call.1} parent=1 // pred_fallthru
      _
    // Predicated region
    $region30: #{tpu_custom_call.1} parent=1 // pred_check
      _
    $region31: #{tpu_custom_call.1} parent=1 // pred_check_branch
      %32 = sbr.rel (0) target = $region33
    $region32: #{tpu_custom_call.1} parent=1 // pred_region
      _
    $region33: #{tpu_custom_call.1} parent=1 // pred_fallthru
      _
    %v33 = vld [vmem:[%s0] sm:$0xff]
    %v34 = vld [vmem:[%s0 + $0x8] sm:$0xff]
    %v35 = vld [vmem:[%s4] sm:$0xff]
    %v36 = vld [vmem:[%s4 + $0x8] sm:$0xff]
    %v37 = vld [vmem:[%s4 + $0x10] sm:$0xff]
    %v38 = vld [vmem:[%s4 + $0x18] sm:$0xff]
    %v39 = vld [vmem:[%s4 + $0x20] sm:$0xff]
    %v40 = vld [vmem:[%s4 + $0x28] sm:$0xff]
    %v41 = vld [vmem:[%s4 + $0x30] sm:$0xff]
    %v42 = vld [vmem:[%s4 + $0x38] sm:$0xff]
    %v43 = vld [vmem:[%s4 + $0x40] sm:$0xff]
    %v44 = vld [vmem:[%s4 + $0x48] sm:$0xff]
    %v45 = vld [vmem:[%s4 + $0x50] sm:$0xff]
    %v46 = vld [vmem:[%s4 + $0x58] sm:$0xff]
    %v47 = vld [vmem:[%s4 + $0x60] sm:$0xff]
    %v48 = vld [vmem:[%s4 + $0x68] sm:$0xff]
    %v49 = vld [vmem:[%s4 + $0x70] sm:$0xff]
    %v50 = vld [vmem:[%s4 + $0x78] sm:$0xff]
    %v51 = vld [vmem:[%s6] sm:$0x1]
    %v52 = vld [vmem:[%s6 + $0x1] sm:$0x1]
    %v53 = vld [vmem:[%s6 + $0x2] sm:$0x1]
    %v54 = vld [vmem:[%s6 + $0x3] sm:$0x1]
    %v59 = vlaneseq
    %v60 = vshrl.u32 %v59, 7
    %v61 = vsub.s32 0, %v60
    %v62 = vrot.slane %v51, %v61
    %v63 = vlaneseq
    %v64 = vshrl.u32 %v63, 7
    %v65 = vsub.s32 0, %v64
    %v66 = vrot.slane %v52, %v65
    %v67 = vlaneseq
    %v68 = vshrl.u32 %v67, 7
    %v69 = vsub.s32 0, %v68
    %v70 = vrot.slane %v53, %v69
    %v71 = vlaneseq
    %v72 = vshrl.u32 %v71, 7
    %v73 = vsub.s32 0, %v72
    %v74 = vrot.slane %v54, %v73
    %vm79 = vcmask 261120
    %v81 = vsel %vm79, %v33, 0
    %83 = vmatprep.subr.mxu0 0.0
    %84 = vmatpush1.msra.mxu0 %v35
    %85 = vmatprep.subr.mxu0 0.0
    %86 = vmatpush1.msra.mxu0 %v36
    %87 = vmatprep.subr.mxu0 0.0
    %88 = vmatpush1.msra.mxu0 %v37
    %89 = vmatprep.subr.mxu0 0.0
    %90 = vmatpush1.msra.mxu0 %v38
    %91 = vmatprep.subr.mxu0 0.0
    %92 = vmatpush1.msra.mxu0 0.0
    %93 = vmatprep.subr.mxu0 0.0
    %94 = vmatpush1.msra.mxu0 0.0
    %95 = vmatprep.subr.mxu0 0.0
    %96 = vmatpush1.msra.mxu0 0.0
    %97 = vmatprep.subr.mxu0 0.0
    %98 = vmatpush1.msra.mxu0 0.0
    %99 = vmatprep.subr.mxu0 0.0
    %100 = vmatpush1.msra.mxu0 0.0
    %101 = vmatprep.subr.mxu0 0.0
    %102 = vmatpush1.msra.mxu0 0.0
    %103 = vmatprep.subr.mxu0 0.0
    %104 = vmatpush1.msra.mxu0 0.0
    %105 = vmatprep.subr.mxu0 0.0
    %106 = vmatpush1.msra.mxu0 0.0
    %107 = vmatprep.subr.mxu0 0.0
    %108 = vmatpush1.msra.mxu0 0.0
    %109 = vmatprep.subr.mxu0 0.0
    %110 = vmatpush1.msra.mxu0 0.0
    %111 = vmatprep.subr.mxu0 0.0
    %112 = vmatpush1.msra.mxu0 0.0
    %113 = vmatprep.subr.mxu0 0.0
    %114 = vmatpush1.msra.mxu0 0.0
    %115 = vmatprep.subr.mxu0 0.0
    %116 = vmatpush1.msra.mxu0 0.0
    %117 = vmatprep.subr.mxu0 0.0
    %118 = vmatpush1.msra.mxu0 0.0
    %119 = vmatprep.subr.mxu0 0.0
    %120 = vmatpush1.msra.mxu0 0.0
    %121 = vmatprep.subr.mxu0 0.0
    %122 = vmatpush1.msra.mxu0 0.0
    %123 = vmatprep.subr.mxu0 0.0
    %124 = vmatpush1.msra.mxu0 0.0
    %125 = vmatprep.subr.mxu0 0.0
    %126 = vmatpush1.msra.mxu0 0.0
    %127 = vmatprep.subr.mxu0 0.0
    %128 = vmatpush1.msra.mxu0 0.0
    %129 = vmatprep.subr.mxu0 0.0
    %130 = vmatpush1.msra.mxu0 0.0
    %131 = vmatprep.subr.mxu0 0.0
    %132 = vmatpush1.msra.mxu0 0.0
    %133 = vmatprep.subr.mxu0 0.0
    %134 = vmatpush1.msra.mxu0 0.0
    %135 = vmatprep.subr.mxu0 0.0
    %136 = vmatpush1.msra.mxu0 0.0
    %137 = vmatprep.subr.mxu0 0.0
    %138 = vmatpush1.msra.mxu0 0.0
    %139 = vmatprep.subr.mxu0 0.0
    %140 = vmatpush1.msra.mxu0 0.0
    %141 = vmatprep.subr.mxu0 0.0
    %142 = vmatpush1.msra.mxu0 0.0
    %143 = vmatprep.subr.mxu0 0.0
    %144 = vmatpush1.msra.mxu0 0.0
    %145 = vmatprep.subr.mxu0 0.0
    %146 = vmatpush1.msra.mxu0 0.0
    %147 = vmatprep.mubr.f32.mxu0 0.0
    %148 = vmatmul.mubr.f32.gmra.mrb[0].mxu0 %v81
    %v149 = vpop.f32.mrb[0].mxu0
    %v150 = vadd.f32 %v62, %v149
    %v151 = vpop.f32.mrb[0].mxu0
    %152 = vdwg.mxu0
    %153 = vmatprep.subr.mxu0 0.0
    %154 = vmatpush1.msra.mxu0 %v39
    %155 = vmatprep.subr.mxu0 0.0
    %156 = vmatpush1.msra.mxu0 %v40
    %157 = vmatprep.subr.mxu0 0.0
    %158 = vmatpush1.msra.mxu0 %v41
    %159 = vmatprep.subr.mxu0 0.0
    %160 = vmatpush1.msra.mxu0 %v42
    %161 = vmatprep.subr.mxu0 0.0
    %162 = vmatpush1.msra.mxu0 0.0
    %163 = vmatprep.subr.mxu0 0.0
    %164 = vmatpush1.msra.mxu0 0.0
    %165 = vmatprep.subr.mxu0 0.0
    %166 = vmatpush1.msra.mxu0 0.0
    %167 = vmatprep.subr.mxu0 0.0
    %168 = vmatpush1.msra.mxu0 0.0
    %169 = vmatprep.subr.mxu0 0.0
    %170 = vmatpush1.msra.mxu0 0.0
    %171 = vmatprep.subr.mxu0 0.0
    %172 = vmatpush1.msra.mxu0 0.0
    %173 = vmatprep.subr.mxu0 0.0
    %174 = vmatpush1.msra.mxu0 0.0
    %175 = vmatprep.subr.mxu0 0.0
    %176 = vmatpush1.msra.mxu0 0.0
    %177 = vmatprep.subr.mxu0 0.0
    %178 = vmatpush1.msra.mxu0 0.0
    %179 = vmatprep.subr.mxu0 0.0
    %180 = vmatpush1.msra.mxu0 0.0
    %181 = vmatprep.subr.mxu0 0.0
    %182 = vmatpush1.msra.mxu0 0.0
    %183 = vmatprep.subr.mxu0 0.0
    %184 = vmatpush1.msra.mxu0 0.0
    %185 = vmatprep.subr.mxu0 0.0
    %186 = vmatpush1.msra.mxu0 0.0
    %187 = vmatprep.subr.mxu0 0.0
    %188 = vmatpush1.msra.mxu0 0.0
    %189 = vmatprep.subr.mxu0 0.0
    %190 = vmatpush1.msra.mxu0 0.0
    %191 = vmatprep.subr.mxu0 0.0
    %192 = vmatpush1.msra.mxu0 0.0
    %193 = vmatprep.subr.mxu0 0.0
    %194 = vmatpush1.msra.mxu0 0.0
    %195 = vmatprep.subr.mxu0 0.0
    %196 = vmatpush1.msra.mxu0 0.0
    %197 = vmatprep.subr.mxu0 0.0
    %198 = vmatpush1.msra.mxu0 0.0
    %199 = vmatprep.subr.mxu0 0.0
    %200 = vmatpush1.msra.mxu0 0.0
    %201 = vmatprep.subr.mxu0 0.0
    %202 = vmatpush1.msra.mxu0 0.0
    %203 = vmatprep.subr.mxu0 0.0
    %204 = vmatpush1.msra.mxu0 0.0
    %205 = vmatprep.subr.mxu0 0.0
    %206 = vmatpush1.msra.mxu0 0.0
    %207 = vmatprep.subr.mxu0 0.0
    %208 = vmatpush1.msra.mxu0 0.0
    %209 = vmatprep.subr.mxu0 0.0
    %210 = vmatpush1.msra.mxu0 0.0
    %211 = vmatprep.subr.mxu0 0.0
    %212 = vmatpush1.msra.mxu0 0.0
    %213 = vmatprep.subr.mxu0 0.0
    %214 = vmatpush1.msra.mxu0 0.0
    %215 = vmatprep.subr.mxu0 0.0
    %216 = vmatpush1.msra.mxu0 0.0
    %217 = vmatprep.mubr.f32.mxu0 0.0
    %218 = vmatmul.mubr.f32.gmra.mrb[0].mxu0 %v81
    %v219 = vpop.f32.mrb[0].mxu0
    %v220 = vadd.f32 %v66, %v219
    %v221 = vpop.f32.mrb[0].mxu0
    %222 = vdwg.mxu0
    %223 = vmatprep.subr.mxu0 0.0
    %224 = vmatpush1.msra.mxu0 %v43
    %225 = vmatprep.subr.mxu0 0.0
    %226 = vmatpush1.msra.mxu0 %v44
    %227 = vmatprep.subr.mxu0 0.0
    %228 = vmatpush1.msra.mxu0 %v45
    %229 = vmatprep.subr.mxu0 0.0
    %230 = vmatpush1.msra.mxu0 %v46
    %231 = vmatprep.subr.mxu0 0.0
    %232 = vmatpush1.msra.mxu0 0.0
    %233 = vmatprep.subr.mxu0 0.0
    %234 = vmatpush1.msra.mxu0 0.0
    %235 = vmatprep.subr.mxu0 0.0
    %236 = vmatpush1.msra.mxu0 0.0
    %237 = vmatprep.subr.mxu0 0.0
    %238 = vmatpush1.msra.mxu0 0.0
    %239 = vmatprep.subr.mxu0 0.0
    %240 = vmatpush1.msra.mxu0 0.0
    %241 = vmatprep.subr.mxu0 0.0
    %242 = vmatpush1.msra.mxu0 0.0
    %243 = vmatprep.subr.mxu0 0.0
    %244 = vmatpush1.msra.mxu0 0.0
    %245 = vmatprep.subr.mxu0 0.0
    %246 = vmatpush1.msra.mxu0 0.0
    %247 = vmatprep.subr.mxu0 0.0
    %248 = vmatpush1.msra.mxu0 0.0
    %249 = vmatprep.subr.mxu0 0.0
    %250 = vmatpush1.msra.mxu0 0.0
    %251 = vmatprep.subr.mxu0 0.0
    %252 = vmatpush1.msra.mxu0 0.0
    %253 = vmatprep.subr.mxu0 0.0
    %254 = vmatpush1.msra.mxu0 0.0
    %255 = vmatprep.subr.mxu0 0.0
    %256 = vmatpush1.msra.mxu0 0.0
    %257 = vmatprep.subr.mxu0 0.0
    %258 = vmatpush1.msra.mxu0 0.0
    %259 = vmatprep.subr.mxu0 0.0
    %260 = vmatpush1.msra.mxu0 0.0
    %261 = vmatprep.subr.mxu0 0.0
    %262 = vmatpush1.msra.mxu0 0.0
    %263 = vmatprep.subr.mxu0 0.0
    %264 = vmatpush1.msra.mxu0 0.0
    %265 = vmatprep.subr.mxu0 0.0
    %266 = vmatpush1.msra.mxu0 0.0
    %267 = vmatprep.subr.mxu0 0.0
    %268 = vmatpush1.msra.mxu0 0.0
    %269 = vmatprep.subr.mxu0 0.0
    %270 = vmatpush1.msra.mxu0 0.0
    %271 = vmatprep.subr.mxu0 0.0
    %272 = vmatpush1.msra.mxu0 0.0
    %273 = vmatprep.subr.mxu0 0.0
    %274 = vmatpush1.msra.mxu0 0.0
    %275 = vmatprep.subr.mxu0 0.0
    %276 = vmatpush1.msra.mxu0 0.0
    %277 = vmatprep.subr.mxu0 0.0
    %278 = vmatpush1.msra.mxu0 0.0
    %279 = vmatprep.subr.mxu0 0.0
    %280 = vmatpush1.msra.mxu0 0.0
    %281 = vmatprep.subr.mxu0 0.0
    %282 = vmatpush1.msra.mxu0 0.0
    %283 = vmatprep.subr.mxu0 0.0
    %284 = vmatpush1.msra.mxu0 0.0
    %285 = vmatprep.subr.mxu0 0.0
    %286 = vmatpush1.msra.mxu0 0.0
    %287 = vmatprep.mubr.f32.mxu0 0.0
    %288 = vmatmul.mubr.f32.gmra.mrb[0].mxu0 %v81
    %v289 = vpop.f32.mrb[0].mxu0
    %v290 = vadd.f32 %v70, %v289
    %v291 = vpop.f32.mrb[0].mxu0
    %292 = vdwg.mxu0
    %293 = vmatprep.subr.mxu0 0.0
    %294 = vmatpush1.msra.mxu0 %v47
    %295 = vmatprep.subr.mxu0 0.0
    %296 = vmatpush1.msra.mxu0 %v48
    %297 = vmatprep.subr.mxu0 0.0
    %298 = vmatpush1.msra.mxu0 %v49
    %299 = vmatprep.subr.mxu0 0.0
    %300 = vmatpush1.msra.mxu0 %v50
    %301 = vmatprep.subr.mxu0 0.0
    %302 = vmatpush1.msra.mxu0 0.0
    %303 = vmatprep.subr.mxu0 0.0
    %304 = vmatpush1.msra.mxu0 0.0
    %305 = vmatprep.subr.mxu0 0.0
    %306 = vmatpush1.msra.mxu0 0.0
    %307 = vmatprep.subr.mxu0 0.0
    %308 = vmatpush1.msra.mxu0 0.0
    %309 = vmatprep.subr.mxu0 0.0
    %310 = vmatpush1.msra.mxu0 0.0
    %311 = vmatprep.subr.mxu0 0.0
    %312 = vmatpush1.msra.mxu0 0.0
    %313 = vmatprep.subr.mxu0 0.0
    %314 = vmatpush1.msra.mxu0 0.0
    %315 = vmatprep.subr.mxu0 0.0
    %316 = vmatpush1.msra.mxu0 0.0
    %317 = vmatprep.subr.mxu0 0.0
    %318 = vmatpush1.msra.mxu0 0.0
    %319 = vmatprep.subr.mxu0 0.0
    %320 = vmatpush1.msra.mxu0 0.0
    %321 = vmatprep.subr.mxu0 0.0
    %322 = vmatpush1.msra.mxu0 0.0
    %323 = vmatprep.subr.mxu0 0.0
    %324 = vmatpush1.msra.mxu0 0.0
    %325 = vmatprep.subr.mxu0 0.0
    %326 = vmatpush1.msra.mxu0 0.0
    %327 = vmatprep.subr.mxu0 0.0
    %328 = vmatpush1.msra.mxu0 0.0
    %329 = vmatprep.subr.mxu0 0.0
    %330 = vmatpush1.msra.mxu0 0.0
    %331 = vmatprep.subr.mxu0 0.0
    %332 = vmatpush1.msra.mxu0 0.0
    %333 = vmatprep.subr.mxu0 0.0
    %334 = vmatpush1.msra.mxu0 0.0
    %335 = vmatprep.subr.mxu0 0.0
    %336 = vmatpush1.msra.mxu0 0.0
    %337 = vmatprep.subr.mxu0 0.0
    %338 = vmatpush1.msra.mxu0 0.0
    %339 = vmatprep.subr.mxu0 0.0
    %340 = vmatpush1.msra.mxu0 0.0
    %341 = vmatprep.subr.mxu0 0.0
    %342 = vmatpush1.msra.mxu0 0.0
    %343 = vmatprep.subr.mxu0 0.0
    %344 = vmatpush1.msra.mxu0 0.0
    %345 = vmatprep.subr.mxu0 0.0
    %346 = vmatpush1.msra.mxu0 0.0
    %347 = vmatprep.subr.mxu0 0.0
    %348 = vmatpush1.msra.mxu0 0.0
    %349 = vmatprep.subr.mxu0 0.0
    %350 = vmatpush1.msra.mxu0 0.0
    %351 = vmatprep.subr.mxu0 0.0
    %352 = vmatpush1.msra.mxu0 0.0
    %353 = vmatprep.subr.mxu0 0.0
    %354 = vmatpush1.msra.mxu0 0.0
    %355 = vmatprep.subr.mxu0 0.0
    %356 = vmatpush1.msra.mxu0 0.0
    %357 = vmatprep.mubr.f32.mxu0 0.0
    %358 = vmatmul.mubr.f32.gmra.mrb[0].mxu0 %v81
    %v359 = vpop.f32.mrb[0].mxu0
    %v360 = vadd.f32 %v74, %v359
    %v361 = vpop.f32.mrb[0].mxu0
    %362 = vdwg.mxu0
    %v364 = vsel %vm79, %v34, 0
    %366 = vmatprep.subr.mxu0 0.0
    %367 = vmatpush1.msra.mxu0 %v35
    %368 = vmatprep.subr.mxu0 0.0
    %369 = vmatpush1.msra.mxu0 %v36
    %370 = vmatprep.subr.mxu0 0.0
    %371 = vmatpush1.msra.mxu0 %v37
    %372 = vmatprep.subr.mxu0 0.0
    %373 = vmatpush1.msra.mxu0 %v38
    %374 = vmatprep.subr.mxu0 0.0
    %375 = vmatpush1.msra.mxu0 0.0
    %376 = vmatprep.subr.mxu0 0.0
    %377 = vmatpush1.msra.mxu0 0.0
    %378 = vmatprep.subr.mxu0 0.0
    %379 = vmatpush1.msra.mxu0 0.0
    %380 = vmatprep.subr.mxu0 0.0
    %381 = vmatpush1.msra.mxu0 0.0
    %382 = vmatprep.subr.mxu0 0.0
    %383 = vmatpush1.msra.mxu0 0.0
    %384 = vmatprep.subr.mxu0 0.0
    %385 = vmatpush1.msra.mxu0 0.0
    %386 = vmatprep.subr.mxu0 0.0
    %387 = vmatpush1.msra.mxu0 0.0
    %388 = vmatprep.subr.mxu0 0.0
    %389 = vmatpush1.msra.mxu0 0.0
    %390 = vmatprep.subr.mxu0 0.0
    %391 = vmatpush1.msra.mxu0 0.0
    %392 = vmatprep.subr.mxu0 0.0
    %393 = vmatpush1.msra.mxu0 0.0
    %394 = vmatprep.subr.mxu0 0.0
    %395 = vmatpush1.msra.mxu0 0.0
    %396 = vmatprep.subr.mxu0 0.0
    %397 = vmatpush1.msra.mxu0 0.0
    %398 = vmatprep.subr.mxu0 0.0
    %399 = vmatpush1.msra.mxu0 0.0
    %400 = vmatprep.subr.mxu0 0.0
    %401 = vmatpush1.msra.mxu0 0.0
    %402 = vmatprep.subr.mxu0 0.0
    %403 = vmatpush1.msra.mxu0 0.0
    %404 = vmatprep.subr.mxu0 0.0
    %405 = vmatpush1.msra.mxu0 0.0
    %406 = vmatprep.subr.mxu0 0.0
    %407 = vmatpush1.msra.mxu0 0.0
    %408 = vmatprep.subr.mxu0 0.0
    %409 = vmatpush1.msra.mxu0 0.0
    %410 = vmatprep.subr.mxu0 0.0
    %411 = vmatpush1.msra.mxu0 0.0
    %412 = vmatprep.subr.mxu0 0.0
    %413 = vmatpush1.msra.mxu0 0.0
    %414 = vmatprep.subr.mxu0 0.0
    %415 = vmatpush1.msra.mxu0 0.0
    %416 = vmatprep.subr.mxu0 0.0
    %417 = vmatpush1.msra.mxu0 0.0
    %418 = vmatprep.subr.mxu0 0.0
    %419 = vmatpush1.msra.mxu0 0.0
    %420 = vmatprep.subr.mxu0 0.0
    %421 = vmatpush1.msra.mxu0 0.0
    %422 = vmatprep.subr.mxu0 0.0
    %423 = vmatpush1.msra.mxu0 0.0
    %424 = vmatprep.subr.mxu0 0.0
    %425 = vmatpush1.msra.mxu0 0.0
    %426 = vmatprep.subr.mxu0 0.0
    %427 = vmatpush1.msra.mxu0 0.0
    %428 = vmatprep.subr.mxu0 0.0
    %429 = vmatpush1.msra.mxu0 0.0
    %430 = vmatprep.mubr.f32.mxu0 0.0
    %431 = vmatmul.mubr.f32.gmra.mrb[0].mxu0 %v364
    %v432 = vpop.f32.mrb[0].mxu0
    %v433 = vadd.f32 %v62, %v432
    %v434 = vpop.f32.mrb[0].mxu0
    %435 = vdwg.mxu0
    %436 = vmatprep.subr.mxu0 0.0
    %437 = vmatpush1.msra.mxu0 %v39
    %438 = vmatprep.subr.mxu0 0.0
    %439 = vmatpush1.msra.mxu0 %v40
    %440 = vmatprep.subr.mxu0 0.0
    %441 = vmatpush1.msra.mxu0 %v41
    %442 = vmatprep.subr.mxu0 0.0
    %443 = vmatpush1.msra.mxu0 %v42
    %444 = vmatprep.subr.mxu0 0.0
    %445 = vmatpush1.msra.mxu0 0.0
    %446 = vmatprep.subr.mxu0 0.0
    %447 = vmatpush1.msra.mxu0 0.0
    %448 = vmatprep.subr.mxu0 0.0
    %449 = vmatpush1.msra.mxu0 0.0
    %450 = vmatprep.subr.mxu0 0.0
    %451 = vmatpush1.msra.mxu0 0.0
    %452 = vmatprep.subr.mxu0 0.0
    %453 = vmatpush1.msra.mxu0 0.0
    %454 = vmatprep.subr.mxu0 0.0
    %455 = vmatpush1.msra.mxu0 0.0
    %456 = vmatprep.subr.mxu0 0.0
    %457 = vmatpush1.msra.mxu0 0.0
    %458 = vmatprep.subr.mxu0 0.0
    %459 = vmatpush1.msra.mxu0 0.0
    %460 = vmatprep.subr.mxu0 0.0
    %461 = vmatpush1.msra.mxu0 0.0
    %462 = vmatprep.subr.mxu0 0.0
    %463 = vmatpush1.msra.mxu0 0.0
    %464 = vmatprep.subr.mxu0 0.0
    %465 = vmatpush1.msra.mxu0 0.0
    %466 = vmatprep.subr.mxu0 0.0
    %467 = vmatpush1.msra.mxu0 0.0
    %468 = vmatprep.subr.mxu0 0.0
    %469 = vmatpush1.msra.mxu0 0.0
    %470 = vmatprep.subr.mxu0 0.0
    %471 = vmatpush1.msra.mxu0 0.0
    %472 = vmatprep.subr.mxu0 0.0
    %473 = vmatpush1.msra.mxu0 0.0
    %474 = vmatprep.subr.mxu0 0.0
    %475 = vmatpush1.msra.mxu0 0.0
    %476 = vmatprep.subr.mxu0 0.0
    %477 = vmatpush1.msra.mxu0 0.0
    %478 = vmatprep.subr.mxu0 0.0
    %479 = vmatpush1.msra.mxu0 0.0
    %480 = vmatprep.subr.mxu0 0.0
    %481 = vmatpush1.msra.mxu0 0.0
    %482 = vmatprep.subr.mxu0 0.0
    %483 = vmatpush1.msra.mxu0 0.0
    %484 = vmatprep.subr.mxu0 0.0
    %485 = vmatpush1.msra.mxu0 0.0
    %486 = vmatprep.subr.mxu0 0.0
    %487 = vmatpush1.msra.mxu0 0.0
    %488 = vmatprep.subr.mxu0 0.0
    %489 = vmatpush1.msra.mxu0 0.0
    %490 = vmatprep.subr.mxu0 0.0
    %491 = vmatpush1.msra.mxu0 0.0
    %492 = vmatprep.subr.mxu0 0.0
    %493 = vmatpush1.msra.mxu0 0.0
    %494 = vmatprep.subr.mxu0 0.0
    %495 = vmatpush1.msra.mxu0 0.0
    %496 = vmatprep.subr.mxu0 0.0
    %497 = vmatpush1.msra.mxu0 0.0
    %498 = vmatprep.subr.mxu0 0.0
    %499 = vmatpush1.msra.mxu0 0.0
    %500 = vmatprep.mubr.f32.mxu0 0.0
    %501 = vmatmul.mubr.f32.gmra.mrb[0].mxu0 %v364
    %v502 = vpop.f32.mrb[0].mxu0
    %v503 = vadd.f32 %v66, %v502
    %v504 = vpop.f32.mrb[0].mxu0
    %505 = vdwg.mxu0
    %506 = vmatprep.subr.mxu0 0.0
    %507 = vmatpush1.msra.mxu0 %v43
    %508 = vmatprep.subr.mxu0 0.0
    %509 = vmatpush1.msra.mxu0 %v44
    %510 = vmatprep.subr.mxu0 0.0
    %511 = vmatpush1.msra.mxu0 %v45
    %512 = vmatprep.subr.mxu0 0.0
    %513 = vmatpush1.msra.mxu0 %v46
    %514 = vmatprep.subr.mxu0 0.0
    %515 = vmatpush1.msra.mxu0 0.0
    %516 = vmatprep.subr.mxu0 0.0
    %517 = vmatpush1.msra.mxu0 0.0
    %518 = vmatprep.subr.mxu0 0.0
    %519 = vmatpush1.msra.mxu0 0.0
    %520 = vmatprep.subr.mxu0 0.0
    %521 = vmatpush1.msra.mxu0 0.0
    %522 = vmatprep.subr.mxu0 0.0
    %523 = vmatpush1.msra.mxu0 0.0
    %524 = vmatprep.subr.mxu0 0.0
    %525 = vmatpush1.msra.mxu0 0.0
    %526 = vmatprep.subr.mxu0 0.0
    %527 = vmatpush1.msra.mxu0 0.0
    %528 = vmatprep.subr.mxu0 0.0
    %529 = vmatpush1.msra.mxu0 0.0
    %530 = vmatprep.subr.mxu0 0.0
    %531 = vmatpush1.msra.mxu0 0.0
    %532 = vmatprep.subr.mxu0 0.0
    %533 = vmatpush1.msra.mxu0 0.0
    %534 = vmatprep.subr.mxu0 0.0
    %535 = vmatpush1.msra.mxu0 0.0
    %536 = vmatprep.subr.mxu0 0.0
    %537 = vmatpush1.msra.mxu0 0.0
    %538 = vmatprep.subr.mxu0 0.0
    %539 = vmatpush1.msra.mxu0 0.0
    %540 = vmatprep.subr.mxu0 0.0
    %541 = vmatpush1.msra.mxu0 0.0
    %542 = vmatprep.subr.mxu0 0.0
    %543 = vmatpush1.msra.mxu0 0.0
    %544 = vmatprep.subr.mxu0 0.0
    %545 = vmatpush1.msra.mxu0 0.0
    %546 = vmatprep.subr.mxu0 0.0
    %547 = vmatpush1.msra.mxu0 0.0
    %548 = vmatprep.subr.mxu0 0.0
    %549 = vmatpush1.msra.mxu0 0.0
    %550 = vmatprep.subr.mxu0 0.0
    %551 = vmatpush1.msra.mxu0 0.0
    %552 = vmatprep.subr.mxu0 0.0
    %553 = vmatpush1.msra.mxu0 0.0
    %554 = vmatprep.subr.mxu0 0.0
    %555 = vmatpush1.msra.mxu0 0.0
    %556 = vmatprep.subr.mxu0 0.0
    %557 = vmatpush1.msra.mxu0 0.0
    %558 = vmatprep.subr.mxu0 0.0
    %559 = vmatpush1.msra.mxu0 0.0
    %560 = vmatprep.subr.mxu0 0.0
    %561 = vmatpush1.msra.mxu0 0.0
    %562 = vmatprep.subr.mxu0 0.0
    %563 = vmatpush1.msra.mxu0 0.0
    %564 = vmatprep.subr.mxu0 0.0
    %565 = vmatpush1.msra.mxu0 0.0
    %566 = vmatprep.subr.mxu0 0.0
    %567 = vmatpush1.msra.mxu0 0.0
    %568 = vmatprep.subr.mxu0 0.0
    %569 = vmatpush1.msra.mxu0 0.0
    %570 = vmatprep.mubr.f32.mxu0 0.0
    %571 = vmatmul.mubr.f32.gmra.mrb[0].mxu0 %v364
    %v572 = vpop.f32.mrb[0].mxu0
    %v573 = vadd.f32 %v70, %v572
    %v574 = vpop.f32.mrb[0].mxu0
    %575 = vdwg.mxu0
    %576 = vmatprep.subr.mxu0 0.0
    %577 = vmatpush1.msra.mxu0 %v47
    %578 = vmatprep.subr.mxu0 0.0
    %579 = vmatpush1.msra.mxu0 %v48
    %580 = vmatprep.subr.mxu0 0.0
    %581 = vmatpush1.msra.mxu0 %v49
    %582 = vmatprep.subr.mxu0 0.0
    %583 = vmatpush1.msra.mxu0 %v50
    %584 = vmatprep.subr.mxu0 0.0
    %585 = vmatpush1.msra.mxu0 0.0
    %586 = vmatprep.subr.mxu0 0.0
    %587 = vmatpush1.msra.mxu0 0.0
    %588 = vmatprep.subr.mxu0 0.0
    %589 = vmatpush1.msra.mxu0 0.0
    %590 = vmatprep.subr.mxu0 0.0
    %591 = vmatpush1.msra.mxu0 0.0
    %592 = vmatprep.subr.mxu0 0.0
    %593 = vmatpush1.msra.mxu0 0.0
    %594 = vmatprep.subr.mxu0 0.0
    %595 = vmatpush1.msra.mxu0 0.0
    %596 = vmatprep.subr.mxu0 0.0
    %597 = vmatpush1.msra.mxu0 0.0
    %598 = vmatprep.subr.mxu0 0.0
    %599 = vmatpush1.msra.mxu0 0.0
    %600 = vmatprep.subr.mxu0 0.0
    %601 = vmatpush1.msra.mxu0 0.0
    %602 = vmatprep.subr.mxu0 0.0
    %603 = vmatpush1.msra.mxu0 0.0
    %604 = vmatprep.subr.mxu0 0.0
    %605 = vmatpush1.msra.mxu0 0.0
    %606 = vmatprep.subr.mxu0 0.0
    %607 = vmatpush1.msra.mxu0 0.0
    %608 = vmatprep.subr.mxu0 0.0
    %609 = vmatpush1.msra.mxu0 0.0
    %610 = vmatprep.subr.mxu0 0.0
    %611 = vmatpush1.msra.mxu0 0.0
    %612 = vmatprep.subr.mxu0 0.0
    %613 = vmatpush1.msra.mxu0 0.0
    %614 = vmatprep.subr.mxu0 0.0
    %615 = vmatpush1.msra.mxu0 0.0
    %616 = vmatprep.subr.mxu0 0.0
    %617 = vmatpush1.msra.mxu0 0.0
    %618 = vmatprep.subr.mxu0 0.0
    %619 = vmatpush1.msra.mxu0 0.0
    %620 = vmatprep.subr.mxu0 0.0
    %621 = vmatpush1.msra.mxu0 0.0
    %622 = vmatprep.subr.mxu0 0.0
    %623 = vmatpush1.msra.mxu0 0.0
    %624 = vmatprep.subr.mxu0 0.0
    %625 = vmatpush1.msra.mxu0 0.0
    %626 = vmatprep.subr.mxu0 0.0
    %627 = vmatpush1.msra.mxu0 0.0
    %628 = vmatprep.subr.mxu0 0.0
    %629 = vmatpush1.msra.mxu0 0.0
    %630 = vmatprep.subr.mxu0 0.0
    %631 = vmatpush1.msra.mxu0 0.0
    %632 = vmatprep.subr.mxu0 0.0
    %633 = vmatpush1.msra.mxu0 0.0
    %634 = vmatprep.subr.mxu0 0.0
    %635 = vmatpush1.msra.mxu0 0.0
    %636 = vmatprep.subr.mxu0 0.0
    %637 = vmatpush1.msra.mxu0 0.0
    %638 = vmatprep.subr.mxu0 0.0
    %639 = vmatpush1.msra.mxu0 0.0
    %640 = vmatprep.mubr.f32.mxu0 0.0
    %641 = vmatmul.mubr.f32.gmra.mrb[0].mxu0 %v364
    %v642 = vpop.f32.mrb[0].mxu0
    %v643 = vadd.f32 %v74, %v642
    %v644 = vpop.f32.mrb[0].mxu0
    %645 = vdwg.mxu0
    %v646 = vld [vmem:[%s1] sm:$0xff]
    %v647 = vld [vmem:[%s1 + $0x8] sm:$0xff]
    %s648 = scalar_lea.vmem %s4, 128
    %v649 = vld [vmem:[%s648] sm:$0xff]
    %v650 = vld [vmem:[%s648 + $0x8] sm:$0xff]
    %v651 = vld [vmem:[%s648 + $0x10] sm:$0xff]
    %v652 = vld [vmem:[%s648 + $0x18] sm:$0xff]
    %v653 = vld [vmem:[%s648 + $0x20] sm:$0xff]
    %v654 = vld [vmem:[%s648 + $0x28] sm:$0xff]
    %v655 = vld [vmem:[%s648 + $0x30] sm:$0xff]
    %v656 = vld [vmem:[%s648 + $0x38] sm:$0xff]
    %v657 = vld [vmem:[%s648 + $0x40] sm:$0xff]
    %v658 = vld [vmem:[%s648 + $0x48] sm:$0xff]
    %v659 = vld [vmem:[%s648 + $0x50] sm:$0xff]
    %v660 = vld [vmem:[%s648 + $0x58] sm:$0xff]
    %v661 = vld [vmem:[%s648 + $0x60] sm:$0xff]
    %v662 = vld [vmem:[%s648 + $0x68] sm:$0xff]
    %v663 = vld [vmem:[%s648 + $0x70] sm:$0xff]
    %v664 = vld [vmem:[%s648 + $0x78] sm:$0xff]
    %s665 = scalar_lea.vmem %s6, 4
    %v666 = vld [vmem:[%s665] sm:$0x1]
    %v667 = vld [vmem:[%s665 + $0x1] sm:$0x1]
    %v668 = vld [vmem:[%s665 + $0x2] sm:$0x1]
    %v669 = vld [vmem:[%s665 + $0x3] sm:$0x1]
    %v674 = vlaneseq
    %v675 = vshrl.u32 %v674, 7
    %v676 = vsub.s32 0, %v675
    %v677 = vrot.slane %v666, %v676
    %v678 = vlaneseq
    %v679 = vshrl.u32 %v678, 7
    %v680 = vsub.s32 0, %v679
    %v681 = vrot.slane %v667, %v680
    %v682 = vlaneseq
    %v683 = vshrl.u32 %v682, 7
    %v684 = vsub.s32 0, %v683
    %v685 = vrot.slane %v668, %v684
    %v686 = vlaneseq
    %v687 = vshrl.u32 %v686, 7
    %v688 = vsub.s32 0, %v687
    %v689 = vrot.slane %v669, %v688
    %v695 = vsel %vm79, %v646, 0
    %697 = vmatprep.subr.mxu0 0.0
    %698 = vmatpush1.msra.mxu0 %v649
    %699 = vmatprep.subr.mxu0 0.0
    %700 = vmatpush1.msra.mxu0 %v650
    %701 = vmatprep.subr.mxu0 0.0
    %702 = vmatpush1.msra.mxu0 %v651
    %703 = vmatprep.subr.mxu0 0.0
    %704 = vmatpush1.msra.mxu0 %v652
    %705 = vmatprep.subr.mxu0 0.0
    %706 = vmatpush1.msra.mxu0 0.0
    %707 = vmatprep.subr.mxu0 0.0
    %708 = vmatpush1.msra.mxu0 0.0
    %709 = vmatprep.subr.mxu0 0.0
    %710 = vmatpush1.msra.mxu0 0.0
    %711 = vmatprep.subr.mxu0 0.0
    %712 = vmatpush1.msra.mxu0 0.0
    %713 = vmatprep.subr.mxu0 0.0
    %714 = vmatpush1.msra.mxu0 0.0
    %715 = vmatprep.subr.mxu0 0.0
    %716 = vmatpush1.msra.mxu0 0.0
    %717 = vmatprep.subr.mxu0 0.0
    %718 = vmatpush1.msra.mxu0 0.0
    %719 = vmatprep.subr.mxu0 0.0
    %720 = vmatpush1.msra.mxu0 0.0
    %721 = vmatprep.subr.mxu0 0.0
    %722 = vmatpush1.msra.mxu0 0.0
    %723 = vmatprep.subr.mxu0 0.0
    %724 = vmatpush1.msra.mxu0 0.0
    %725 = vmatprep.subr.mxu0 0.0
    %726 = vmatpush1.msra.mxu0 0.0
    %727 = vmatprep.subr.mxu0 0.0
    %728 = vmatpush1.msra.mxu0 0.0
    %729 = vmatprep.subr.mxu0 0.0
    %730 = vmatpush1.msra.mxu0 0.0
    %731 = vmatprep.subr.mxu0 0.0
    %732 = vmatpush1.msra.mxu0 0.0
    %733 = vmatprep.subr.mxu0 0.0
    %734 = vmatpush1.msra.mxu0 0.0
    %735 = vmatprep.subr.mxu0 0.0
    %736 = vmatpush1.msra.mxu0 0.0
    %737 = vmatprep.subr.mxu0 0.0
    %738 = vmatpush1.msra.mxu0 0.0
    %739 = vmatprep.subr.mxu0 0.0
    %740 = vmatpush1.msra.mxu0 0.0
    %741 = vmatprep.subr.mxu0 0.0
    %742 = vmatpush1.msra.mxu0 0.0
    %743 = vmatprep.subr.mxu0 0.0
    %744 = vmatpush1.msra.mxu0 0.0
    %745 = vmatprep.subr.mxu0 0.0
    %746 = vmatpush1.msra.mxu0 0.0
    %747 = vmatprep.subr.mxu0 0.0
    %748 = vmatpush1.msra.mxu0 0.0
    %749 = vmatprep.subr.mxu0 0.0
    %750 = vmatpush1.msra.mxu0 0.0
    %751 = vmatprep.subr.mxu0 0.0
    %752 = vmatpush1.msra.mxu0 0.0
    %753 = vmatprep.subr.mxu0 0.0
    %754 = vmatpush1.msra.mxu0 0.0
    %755 = vmatprep.subr.mxu0 0.0
    %756 = vmatpush1.msra.mxu0 0.0
    %757 = vmatprep.subr.mxu0 0.0
    %758 = vmatpush1.msra.mxu0 0.0
    %759 = vmatprep.subr.mxu0 0.0
    %760 = vmatpush1.msra.mxu0 0.0
    %761 = vmatprep.mubr.f32.mxu0 0.0
    %762 = vmatmul.mubr.f32.gmra.mrb[0].mxu0 %v695
    %v763 = vpop.f32.mrb[0].mxu0
    %v764 = vadd.f32 %v677, %v763
    %v765 = vpop.f32.mrb[0].mxu0
    %766 = vdwg.mxu0
    %767 = vmatprep.subr.mxu0 0.0
    %768 = vmatpush1.msra.mxu0 %v653
    %769 = vmatprep.subr.mxu0 0.0
    %770 = vmatpush1.msra.mxu0 %v654
    %771 = vmatprep.subr.mxu0 0.0
    %772 = vmatpush1.msra.mxu0 %v655
    %773 = vmatprep.subr.mxu0 0.0
    %774 = vmatpush1.msra.mxu0 %v656
    %775 = vmatprep.subr.mxu0 0.0
    %776 = vmatpush1.msra.mxu0 0.0
    %777 = vmatprep.subr.mxu0 0.0
    %778 = vmatpush1.msra.mxu0 0.0
    %779 = vmatprep.subr.mxu0 0.0
    %780 = vmatpush1.msra.mxu0 0.0
    %781 = vmatprep.subr.mxu0 0.0
    %782 = vmatpush1.msra.mxu0 0.0
    %783 = vmatprep.subr.mxu0 0.0
    %784 = vmatpush1.msra.mxu0 0.0
    %785 = vmatprep.subr.mxu0 0.0
    %786 = vmatpush1.msra.mxu0 0.0
    %787 = vmatprep.subr.mxu0 0.0
    %788 = vmatpush1.msra.mxu0 0.0
    %789 = vmatprep.subr.mxu0 0.0
    %790 = vmatpush1.msra.mxu0 0.0
    %791 = vmatprep.subr.mxu0 0.0
    %792 = vmatpush1.msra.mxu0 0.0
    %793 = vmatprep.subr.mxu0 0.0
    %794 = vmatpush1.msra.mxu0 0.0
    %795 = vmatprep.subr.mxu0 0.0
    %796 = vmatpush1.msra.mxu0 0.0
    %797 = vmatprep.subr.mxu0 0.0
    %798 = vmatpush1.msra.mxu0 0.0
    %799 = vmatprep.subr.mxu0 0.0
    %800 = vmatpush1.msra.mxu0 0.0
    %801 = vmatprep.subr.mxu0 0.0
    %802 = vmatpush1.msra.mxu0 0.0
    %803 = vmatprep.subr.mxu0 0.0
    %804 = vmatpush1.msra.mxu0 0.0
    %805 = vmatprep.subr.mxu0 0.0
    %806 = vmatpush1.msra.mxu0 0.0
    %807 = vmatprep.subr.mxu0 0.0
    %808 = vmatpush1.msra.mxu0 0.0
    %809 = vmatprep.subr.mxu0 0.0
    %810 = vmatpush1.msra.mxu0 0.0
    %811 = vmatprep.subr.mxu0 0.0
    %812 = vmatpush1.msra.mxu0 0.0
    %813 = vmatprep.subr.mxu0 0.0
    %814 = vmatpush1.msra.mxu0 0.0
    %815 = vmatprep.subr.mxu0 0.0
    %816 = vmatpush1.msra.mxu0 0.0
    %817 = vmatprep.subr.mxu0 0.0
    %818 = vmatpush1.msra.mxu0 0.0
    %819 = vmatprep.subr.mxu0 0.0
    %820 = vmatpush1.msra.mxu0 0.0
    %821 = vmatprep.subr.mxu0 0.0
    %822 = vmatpush1.msra.mxu0 0.0
    %823 = vmatprep.subr.mxu0 0.0
    %824 = vmatpush1.msra.mxu0 0.0
    %825 = vmatprep.subr.mxu0 0.0
    %826 = vmatpush1.msra.mxu0 0.0
    %827 = vmatprep.subr.mxu0 0.0
    %828 = vmatpush1.msra.mxu0 0.0
    %829 = vmatprep.subr.mxu0 0.0
    %830 = vmatpush1.msra.mxu0 0.0
    %831 = vmatprep.mubr.f32.mxu0 0.0
    %832 = vmatmul.mubr.f32.gmra.mrb[0].mxu0 %v695
    %v833 = vpop.f32.mrb[0].mxu0
    %v834 = vadd.f32 %v681, %v833
    %v835 = vpop.f32.mrb[0].mxu0
    %836 = vdwg.mxu0
    %837 = vmatprep.subr.mxu0 0.0
    %838 = vmatpush1.msra.mxu0 %v657
    %839 = vmatprep.subr.mxu0 0.0
    %840 = vmatpush1.msra.mxu0 %v658
    %841 = vmatprep.subr.mxu0 0.0
    %842 = vmatpush1.msra.mxu0 %v659
    %843 = vmatprep.subr.mxu0 0.0
    %844 = vmatpush1.msra.mxu0 %v660
    %845 = vmatprep.subr.mxu0 0.0
    %846 = vmatpush1.msra.mxu0 0.0
    %847 = vmatprep.subr.mxu0 0.0
    %848 = vmatpush1.msra.mxu0 0.0
    %849 = vmatprep.subr.mxu0 0.0
    %850 = vmatpush1.msra.mxu0 0.0
    %851 = vmatprep.subr.mxu0 0.0
    %852 = vmatpush1.msra.mxu0 0.0
    %853 = vmatprep.subr.mxu0 0.0
    %854 = vmatpush1.msra.mxu0 0.0
    %855 = vmatprep.subr.mxu0 0.0
    %856 = vmatpush1.msra.mxu0 0.0
    %857 = vmatprep.subr.mxu0 0.0
    %858 = vmatpush1.msra.mxu0 0.0
    %859 = vmatprep.subr.mxu0 0.0
    %860 = vmatpush1.msra.mxu0 0.0
    %861 = vmatprep.subr.mxu0 0.0
    %862 = vmatpush1.msra.mxu0 0.0
    %863 = vmatprep.subr.mxu0 0.0
    %864 = vmatpush1.msra.mxu0 0.0
    %865 = vmatprep.subr.mxu0 0.0
    %866 = vmatpush1.msra.mxu0 0.0
    %867 = vmatprep.subr.mxu0 0.0
    %868 = vmatpush1.msra.mxu0 0.0
    %869 = vmatprep.subr.mxu0 0.0
    %870 = vmatpush1.msra.mxu0 0.0
    %871 = vmatprep.subr.mxu0 0.0
    %872 = vmatpush1.msra.mxu0 0.0
    %873 = vmatprep.subr.mxu0 0.0
    %874 = vmatpush1.msra.mxu0 0.0
    %875 = vmatprep.subr.mxu0 0.0
    %876 = vmatpush1.msra.mxu0 0.0
    %877 = vmatprep.subr.mxu0 0.0
    %878 = vmatpush1.msra.mxu0 0.0
    %879 = vmatprep.subr.mxu0 0.0
    %880 = vmatpush1.msra.mxu0 0.0
    %881 = vmatprep.subr.mxu0 0.0
    %882 = vmatpush1.msra.mxu0 0.0
    %883 = vmatprep.subr.mxu0 0.0
    %884 = vmatpush1.msra.mxu0 0.0
    %885 = vmatprep.subr.mxu0 0.0
    %886 = vmatpush1.msra.mxu0 0.0
    %887 = vmatprep.subr.mxu0 0.0
    %888 = vmatpush1.msra.mxu0 0.0
    %889 = vmatprep.subr.mxu0 0.0
    %890 = vmatpush1.msra.mxu0 0.0
    %891 = vmatprep.subr.mxu0 0.0
    %892 = vmatpush1.msra.mxu0 0.0
    %893 = vmatprep.subr.mxu0 0.0
    %894 = vmatpush1.msra.mxu0 0.0
    %895 = vmatprep.subr.mxu0 0.0
    %896 = vmatpush1.msra.mxu0 0.0
    %897 = vmatprep.subr.mxu0 0.0
    %898 = vmatpush1.msra.mxu0 0.0
    %899 = vmatprep.subr.mxu0 0.0
    %900 = vmatpush1.msra.mxu0 0.0
    %901 = vmatprep.mubr.f32.mxu0 0.0
    %902 = vmatmul.mubr.f32.gmra.mrb[0].mxu0 %v695
    %v903 = vpop.f32.mrb[0].mxu0
    %v904 = vadd.f32 %v685, %v903
    %v905 = vpop.f32.mrb[0].mxu0
    %906 = vdwg.mxu0
    %907 = vmatprep.subr.mxu0 0.0
    %908 = vmatpush1.msra.mxu0 %v661
    %909 = vmatprep.subr.mxu0 0.0
    %910 = vmatpush1.msra.mxu0 %v662
    %911 = vmatprep.subr.mxu0 0.0
    %912 = vmatpush1.msra.mxu0 %v663
    %913 = vmatprep.subr.mxu0 0.0
    %914 = vmatpush1.msra.mxu0 %v664
    %915 = vmatprep.subr.mxu0 0.0
    %916 = vmatpush1.msra.mxu0 0.0
    %917 = vmatprep.subr.mxu0 0.0
    %918 = vmatpush1.msra.mxu0 0.0
    %919 = vmatprep.subr.mxu0 0.0
    %920 = vmatpush1.msra.mxu0 0.0
    %921 = vmatprep.subr.mxu0 0.0
    %922 = vmatpush1.msra.mxu0 0.0
    %923 = vmatprep.subr.mxu0 0.0
    %924 = vmatpush1.msra.mxu0 0.0
    %925 = vmatprep.subr.mxu0 0.0
    %926 = vmatpush1.msra.mxu0 0.0
    %927 = vmatprep.subr.mxu0 0.0
    %928 = vmatpush1.msra.mxu0 0.0
    %929 = vmatprep.subr.mxu0 0.0
    %930 = vmatpush1.msra.mxu0 0.0
    %931 = vmatprep.subr.mxu0 0.0
    %932 = vmatpush1.msra.mxu0 0.0
    %933 = vmatprep.subr.mxu0 0.0
    %934 = vmatpush1.msra.mxu0 0.0
    %935 = vmatprep.subr.mxu0 0.0
    %936 = vmatpush1.msra.mxu0 0.0
    %937 = vmatprep.subr.mxu0 0.0
    %938 = vmatpush1.msra.mxu0 0.0
    %939 = vmatprep.subr.mxu0 0.0
    %940 = vmatpush1.msra.mxu0 0.0
    %941 = vmatprep.subr.mxu0 0.0
    %942 = vmatpush1.msra.mxu0 0.0
    %943 = vmatprep.subr.mxu0 0.0
    %944 = vmatpush1.msra.mxu0 0.0
    %945 = vmatprep.subr.mxu0 0.0
    %946 = vmatpush1.msra.mxu0 0.0
    %947 = vmatprep.subr.mxu0 0.0
    %948 = vmatpush1.msra.mxu0 0.0
    %949 = vmatprep.subr.mxu0 0.0
    %950 = vmatpush1.msra.mxu0 0.0
    %951 = vmatprep.subr.mxu0 0.0
    %952 = vmatpush1.msra.mxu0 0.0
    %953 = vmatprep.subr.mxu0 0.0
    %954 = vmatpush1.msra.mxu0 0.0
    %955 = vmatprep.subr.mxu0 0.0
    %956 = vmatpush1.msra.mxu0 0.0
    %957 = vmatprep.subr.mxu0 0.0
    %958 = vmatpush1.msra.mxu0 0.0
    %959 = vmatprep.subr.mxu0 0.0
    %960 = vmatpush1.msra.mxu0 0.0
    %961 = vmatprep.subr.mxu0 0.0
    %962 = vmatpush1.msra.mxu0 0.0
    %963 = vmatprep.subr.mxu0 0.0
    %964 = vmatpush1.msra.mxu0 0.0
    %965 = vmatprep.subr.mxu0 0.0
    %966 = vmatpush1.msra.mxu0 0.0
    %967 = vmatprep.subr.mxu0 0.0
    %968 = vmatpush1.msra.mxu0 0.0
    %969 = vmatprep.subr.mxu0 0.0
    %970 = vmatpush1.msra.mxu0 0.0
    %971 = vmatprep.mubr.f32.mxu0 0.0
    %972 = vmatmul.mubr.f32.gmra.mrb[0].mxu0 %v695
    %v973 = vpop.f32.mrb[0].mxu0
    %v974 = vadd.f32 %v689, %v973
    %v975 = vpop.f32.mrb[0].mxu0
    %976 = vdwg.mxu0
    %v978 = vsel %vm79, %v647, 0
    %980 = vmatprep.subr.mxu0 0.0
    %981 = vmatpush1.msra.mxu0 %v649
    %982 = vmatprep.subr.mxu0 0.0
    %983 = vmatpush1.msra.mxu0 %v650
    %984 = vmatprep.subr.mxu0 0.0
    %985 = vmatpush1.msra.mxu0 %v651
    %986 = vmatprep.subr.mxu0 0.0
    %987 = vmatpush1.msra.mxu0 %v652
    %988 = vmatprep.subr.mxu0 0.0
    %989 = vmatpush1.msra.mxu0 0.0
    %990 = vmatprep.subr.mxu0 0.0
    %991 = vmatpush1.msra.mxu0 0.0
    %992 = vmatprep.subr.mxu0 0.0
    %993 = vmatpush1.msra.mxu0 0.0
    %994 = vmatprep.subr.mxu0 0.0
    %995 = vmatpush1.msra.mxu0 0.0
    %996 = vmatprep.subr.mxu0 0.0
    %997 = vmatpush1.msra.mxu0 0.0
    %998 = vmatprep.subr.mxu0 0.0
    %999 = vmatpush1.msra.mxu0 0.0
    %1000 = vmatprep.subr.mxu0 0.0
    %1001 = vmatpush1.msra.mxu0 0.0
    %1002 = vmatprep.subr.mxu0 0.0
    %1003 = vmatpush1.msra.mxu0 0.0
    %1004 = vmatprep.subr.mxu0 0.0
    %1005 = vmatpush1.msra.mxu0 0.0
    %1006 = vmatprep.subr.mxu0 0.0
    %1007 = vmatpush1.msra.mxu0 0.0
    %1008 = vmatprep.subr.mxu0 0.0
    %1009 = vmatpush1.msra.mxu0 0.0
    %1010 = vmatprep.subr.mxu0 0.0
    %1011 = vmatpush1.msra.mxu0 0.0
    %1012 = vmatprep.subr.mxu0 0.0
    %1013 = vmatpush1.msra.mxu0 0.0
    %1014 = vmatprep.subr.mxu0 0.0
    %1015 = vmatpush1.msra.mxu0 0.0
    %1016 = vmatprep.subr.mxu0 0.0
    %1017 = vmatpush1.msra.mxu0 0.0
    %1018 = vmatprep.subr.mxu0 0.0
    %1019 = vmatpush1.msra.mxu0 0.0
    %1020 = vmatprep.subr.mxu0 0.0
    %1021 = vmatpush1.msra.mxu0 0.0
    %1022 = vmatprep.subr.mxu0 0.0
    %1023 = vmatpush1.msra.mxu0 0.0
    %1024 = vmatprep.subr.mxu0 0.0
    %1025 = vmatpush1.msra.mxu0 0.0
    %1026 = vmatprep.subr.mxu0 0.0
    %1027 = vmatpush1.msra.mxu0 0.0
    %1028 = vmatprep.subr.mxu0 0.0
    %1029 = vmatpush1.msra.mxu0 0.0
    %1030 = vmatprep.subr.mxu0 0.0
    %1031 = vmatpush1.msra.mxu0 0.0
    %1032 = vmatprep.subr.mxu0 0.0
    %1033 = vmatpush1.msra.mxu0 0.0
    %1034 = vmatprep.subr.mxu0 0.0
    %1035 = vmatpush1.msra.mxu0 0.0
    %1036 = vmatprep.subr.mxu0 0.0
    %1037 = vmatpush1.msra.mxu0 0.0
    %1038 = vmatprep.subr.mxu0 0.0
    %1039 = vmatpush1.msra.mxu0 0.0
    %1040 = vmatprep.subr.mxu0 0.0
    %1041 = vmatpush1.msra.mxu0 0.0
    %1042 = vmatprep.subr.mxu0 0.0
    %1043 = vmatpush1.msra.mxu0 0.0
    %1044 = vmatprep.mubr.f32.mxu0 0.0
    %1045 = vmatmul.mubr.f32.gmra.mrb[0].mxu0 %v978
    %v1046 = vpop.f32.mrb[0].mxu0
    %v1047 = vadd.f32 %v677, %v1046
    %v1048 = vpop.f32.mrb[0].mxu0
    %1049 = vdwg.mxu0
    %1050 = vmatprep.subr.mxu0 0.0
    %1051 = vmatpush1.msra.mxu0 %v653
    %1052 = vmatprep.subr.mxu0 0.0
    %1053 = vmatpush1.msra.mxu0 %v654
    %1054 = vmatprep.subr.mxu0 0.0
    %1055 = vmatpush1.msra.mxu0 %v655
    %1056 = vmatprep.subr.mxu0 0.0
    %1057 = vmatpush1.msra.mxu0 %v656
    %1058 = vmatprep.subr.mxu0 0.0
    %1059 = vmatpush1.msra.mxu0 0.0
    %1060 = vmatprep.subr.mxu0 0.0
    %1061 = vmatpush1.msra.mxu0 0.0
    %1062 = vmatprep.subr.mxu0 0.0
    %1063 = vmatpush1.msra.mxu0 0.0
    %1064 = vmatprep.subr.mxu0 0.0
    %1065 = vmatpush1.msra.mxu0 0.0
    %1066 = vmatprep.subr.mxu0 0.0
    %1067 = vmatpush1.msra.mxu0 0.0
    %1068 = vmatprep.subr.mxu0 0.0
    %1069 = vmatpush1.msra.mxu0 0.0
    %1070 = vmatprep.subr.mxu0 0.0
    %1071 = vmatpush1.msra.mxu0 0.0
    %1072 = vmatprep.subr.mxu0 0.0
    %1073 = vmatpush1.msra.mxu0 0.0
    %1074 = vmatprep.subr.mxu0 0.0
    %1075 = vmatpush1.msra.mxu0 0.0
    %1076 = vmatprep.subr.mxu0 0.0
    %1077 = vmatpush1.msra.mxu0 0.0
    %1078 = vmatprep.subr.mxu0 0.0
    %1079 = vmatpush1.msra.mxu0 0.0
    %1080 = vmatprep.subr.mxu0 0.0
    %1081 = vmatpush1.msra.mxu0 0.0
    %1082 = vmatprep.subr.mxu0 0.0
    %1083 = vmatpush1.msra.mxu0 0.0
    %1084 = vmatprep.subr.mxu0 0.0
    %1085 = vmatpush1.msra.mxu0 0.0
    %1086 = vmatprep.subr.mxu0 0.0
    %1087 = vmatpush1.msra.mxu0 0.0
    %1088 = vmatprep.subr.mxu0 0.0
    %1089 = vmatpush1.msra.mxu0 0.0
    %1090 = vmatprep.subr.mxu0 0.0
    %1091 = vmatpush1.msra.mxu0 0.0
    %1092 = vmatprep.subr.mxu0 0.0
    %1093 = vmatpush1.msra.mxu0 0.0
    %1094 = vmatprep.subr.mxu0 0.0
    %1095 = vmatpush1.msra.mxu0 0.0
    %1096 = vmatprep.subr.mxu0 0.0
    %1097 = vmatpush1.msra.mxu0 0.0
    %1098 = vmatprep.subr.mxu0 0.0
    %1099 = vmatpush1.msra.mxu0 0.0
    %1100 = vmatprep.subr.mxu0 0.0
    %1101 = vmatpush1.msra.mxu0 0.0
    %1102 = vmatprep.subr.mxu0 0.0
    %1103 = vmatpush1.msra.mxu0 0.0
    %1104 = vmatprep.subr.mxu0 0.0
    %1105 = vmatpush1.msra.mxu0 0.0
    %1106 = vmatprep.subr.mxu0 0.0
    %1107 = vmatpush1.msra.mxu0 0.0
    %1108 = vmatprep.subr.mxu0 0.0
    %1109 = vmatpush1.msra.mxu0 0.0
    %1110 = vmatprep.subr.mxu0 0.0
    %1111 = vmatpush1.msra.mxu0 0.0
    %1112 = vmatprep.subr.mxu0 0.0
    %1113 = vmatpush1.msra.mxu0 0.0
    %1114 = vmatprep.mubr.f32.mxu0 0.0
    %1115 = vmatmul.mubr.f32.gmra.mrb[0].mxu0 %v978
    %v1116 = vpop.f32.mrb[0].mxu0
    %v1117 = vadd.f32 %v681, %v1116
    %v1118 = vpop.f32.mrb[0].mxu0
    %1119 = vdwg.mxu0
    %1120 = vmatprep.subr.mxu0 0.0
    %1121 = vmatpush1.msra.mxu0 %v657
    %1122 = vmatprep.subr.mxu0 0.0
    %1123 = vmatpush1.msra.mxu0 %v658
    %1124 = vmatprep.subr.mxu0 0.0
    %1125 = vmatpush1.msra.mxu0 %v659
    %1126 = vmatprep.subr.mxu0 0.0
    %1127 = vmatpush1.msra.mxu0 %v660
    %1128 = vmatprep.subr.mxu0 0.0
    %1129 = vmatpush1.msra.mxu0 0.0
    %1130 = vmatprep.subr.mxu0 0.0
    %1131 = vmatpush1.msra.mxu0 0.0
    %1132 = vmatprep.subr.mxu0 0.0
    %1133 = vmatpush1.msra.mxu0 0.0
    %1134 = vmatprep.subr.mxu0 0.0
    %1135 = vmatpush1.msra.mxu0 0.0
    %1136 = vmatprep.subr.mxu0 0.0
    %1137 = vmatpush1.msra.mxu0 0.0
    %1138 = vmatprep.subr.mxu0 0.0
    %1139 = vmatpush1.msra.mxu0 0.0
    %1140 = vmatprep.subr.mxu0 0.0
    %1141 = vmatpush1.msra.mxu0 0.0
    %1142 = vmatprep.subr.mxu0 0.0
    %1143 = vmatpush1.msra.mxu0 0.0
    %1144 = vmatprep.subr.mxu0 0.0
    %1145 = vmatpush1.msra.mxu0 0.0
    %1146 = vmatprep.subr.mxu0 0.0
    %1147 = vmatpush1.msra.mxu0 0.0
    %1148 = vmatprep.subr.mxu0 0.0
    %1149 = vmatpush1.msra.mxu0 0.0
    %1150 = vmatprep.subr.mxu0 0.0
    %1151 = vmatpush1.msra.mxu0 0.0
    %1152 = vmatprep.subr.mxu0 0.0
    %1153 = vmatpush1.msra.mxu0 0.0
    %1154 = vmatprep.subr.mxu0 0.0
    %1155 = vmatpush1.msra.mxu0 0.0
    %1156 = vmatprep.subr.mxu0 0.0
    %1157 = vmatpush1.msra.mxu0 0.0
    %1158 = vmatprep.subr.mxu0 0.0
    %1159 = vmatpush1.msra.mxu0 0.0
    %1160 = vmatprep.subr.mxu0 0.0
    %1161 = vmatpush1.msra.mxu0 0.0
    %1162 = vmatprep.subr.mxu0 0.0
    %1163 = vmatpush1.msra.mxu0 0.0
    %1164 = vmatprep.subr.mxu0 0.0
    %1165 = vmatpush1.msra.mxu0 0.0
    %1166 = vmatprep.subr.mxu0 0.0
    %1167 = vmatpush1.msra.mxu0 0.0
    %1168 = vmatprep.subr.mxu0 0.0
    %1169 = vmatpush1.msra.mxu0 0.0
    %1170 = vmatprep.subr.mxu0 0.0
    %1171 = vmatpush1.msra.mxu0 0.0
    %1172 = vmatprep.subr.mxu0 0.0
    %1173 = vmatpush1.msra.mxu0 0.0
    %1174 = vmatprep.subr.mxu0 0.0
    %1175 = vmatpush1.msra.mxu0 0.0
    %1176 = vmatprep.subr.mxu0 0.0
    %1177 = vmatpush1.msra.mxu0 0.0
    %1178 = vmatprep.subr.mxu0 0.0
    %1179 = vmatpush1.msra.mxu0 0.0
    %1180 = vmatprep.subr.mxu0 0.0
    %1181 = vmatpush1.msra.mxu0 0.0
    %1182 = vmatprep.subr.mxu0 0.0
    %1183 = vmatpush1.msra.mxu0 0.0
    %1184 = vmatprep.mubr.f32.mxu0 0.0
    %1185 = vmatmul.mubr.f32.gmra.mrb[0].mxu0 %v978
    %v1186 = vpop.f32.mrb[0].mxu0
    %v1187 = vadd.f32 %v685, %v1186
    %v1188 = vpop.f32.mrb[0].mxu0
    %1189 = vdwg.mxu0
    %1190 = vmatprep.subr.mxu0 0.0
    %1191 = vmatpush1.msra.mxu0 %v661
    %1192 = vmatprep.subr.mxu0 0.0
    %1193 = vmatpush1.msra.mxu0 %v662
    %1194 = vmatprep.subr.mxu0 0.0
    %1195 = vmatpush1.msra.mxu0 %v663
    %1196 = vmatprep.subr.mxu0 0.0
    %1197 = vmatpush1.msra.mxu0 %v664
    %1198 = vmatprep.subr.mxu0 0.0
    %1199 = vmatpush1.msra.mxu0 0.0
    %1200 = vmatprep.subr.mxu0 0.0
    %1201 = vmatpush1.msra.mxu0 0.0
    %1202 = vmatprep.subr.mxu0 0.0
    %1203 = vmatpush1.msra.mxu0 0.0
    %1204 = vmatprep.subr.mxu0 0.0
    %1205 = vmatpush1.msra.mxu0 0.0
    %1206 = vmatprep.subr.mxu0 0.0
    %1207 = vmatpush1.msra.mxu0 0.0
    %1208 = vmatprep.subr.mxu0 0.0
    %1209 = vmatpush1.msra.mxu0 0.0
    %1210 = vmatprep.subr.mxu0 0.0
    %1211 = vmatpush1.msra.mxu0 0.0
    %1212 = vmatprep.subr.mxu0 0.0
    %1213 = vmatpush1.msra.mxu0 0.0
    %1214 = vmatprep.subr.mxu0 0.0
    %1215 = vmatpush1.msra.mxu0 0.0
    %1216 = vmatprep.subr.mxu0 0.0
    %1217 = vmatpush1.msra.mxu0 0.0
    %1218 = vmatprep.subr.mxu0 0.0
    %1219 = vmatpush1.msra.mxu0 0.0
    %1220 = vmatprep.subr.mxu0 0.0
    %1221 = vmatpush1.msra.mxu0 0.0
    %1222 = vmatprep.subr.mxu0 0.0
    %1223 = vmatpush1.msra.mxu0 0.0
    %1224 = vmatprep.subr.mxu0 0.0
    %1225 = vmatpush1.msra.mxu0 0.0
    %1226 = vmatprep.subr.mxu0 0.0
    %1227 = vmatpush1.msra.mxu0 0.0
    %1228 = vmatprep.subr.mxu0 0.0
    %1229 = vmatpush1.msra.mxu0 0.0
    %1230 = vmatprep.subr.mxu0 0.0
    %1231 = vmatpush1.msra.mxu0 0.0
    %1232 = vmatprep.subr.mxu0 0.0
    %1233 = vmatpush1.msra.mxu0 0.0
    %1234 = vmatprep.subr.mxu0 0.0
    %1235 = vmatpush1.msra.mxu0 0.0
    %1236 = vmatprep.subr.mxu0 0.0
    %1237 = vmatpush1.msra.mxu0 0.0
    %1238 = vmatprep.subr.mxu0 0.0
    %1239 = vmatpush1.msra.mxu0 0.0
    %1240 = vmatprep.subr.mxu0 0.0
    %1241 = vmatpush1.msra.mxu0 0.0
    %1242 = vmatprep.subr.mxu0 0.0
    %1243 = vmatpush1.msra.mxu0 0.0
    %1244 = vmatprep.subr.mxu0 0.0
    %1245 = vmatpush1.msra.mxu0 0.0
    %1246 = vmatprep.subr.mxu0 0.0
    %1247 = vmatpush1.msra.mxu0 0.0
    %1248 = vmatprep.subr.mxu0 0.0
    %1249 = vmatpush1.msra.mxu0 0.0
    %1250 = vmatprep.subr.mxu0 0.0
    %1251 = vmatpush1.msra.mxu0 0.0
    %1252 = vmatprep.subr.mxu0 0.0
    %1253 = vmatpush1.msra.mxu0 0.0
    %1254 = vmatprep.mubr.f32.mxu0 0.0
    %1255 = vmatmul.mubr.f32.gmra.mrb[0].mxu0 %v978
    %v1256 = vpop.f32.mrb[0].mxu0
    %v1257 = vadd.f32 %v689, %v1256
    %v1258 = vpop.f32.mrb[0].mxu0
    %1259 = vdwg.mxu0
    %v1260 = vld [vmem:[%s2] sm:$0xff]
    %v1261 = vld [vmem:[%s2 + $0x8] sm:$0xff]
    %s1262 = scalar_lea.vmem %s4, 256
    %v1263 = vld [vmem:[%s1262] sm:$0xff]
    %v1264 = vld [vmem:[%s1262 + $0x8] sm:$0xff]
    %v1265 = vld [vmem:[%s1262 + $0x10] sm:$0xff]
    %v1266 = vld [vmem:[%s1262 + $0x18] sm:$0xff]
    %v1267 = vld [vmem:[%s1262 + $0x20] sm:$0xff]
    %v1268 = vld [vmem:[%s1262 + $0x28] sm:$0xff]
    %v1269 = vld [vmem:[%s1262 + $0x30] sm:$0xff]
    %v1270 = vld [vmem:[%s1262 + $0x38] sm:$0xff]
    %v1271 = vld [vmem:[%s1262 + $0x40] sm:$0xff]
    %v1272 = vld [vmem:[%s1262 + $0x48] sm:$0xff]
    %v1273 = vld [vmem:[%s1262 + $0x50] sm:$0xff]
    %v1274 = vld [vmem:[%s1262 + $0x58] sm:$0xff]
    %v1275 = vld [vmem:[%s1262 + $0x60] sm:$0xff]
    %v1276 = vld [vmem:[%s1262 + $0x68] sm:$0xff]
    %v1277 = vld [vmem:[%s1262 + $0x70] sm:$0xff]
    %v1278 = vld [vmem:[%s1262 + $0x78] sm:$0xff]
    %s1279 = scalar_lea.vmem %s6, 8
    %v1280 = vld [vmem:[%s1279] sm:$0x1]
    %v1281 = vld [vmem:[%s1279 + $0x1] sm:$0x1]
    %v1282 = vld [vmem:[%s1279 + $0x2] sm:$0x1]
    %v1283 = vld [vmem:[%s1279 + $0x3] sm:$0x1]
    %v1288 = vlaneseq
    %v1289 = vshrl.u32 %v1288, 7
    %v1290 = vsub.s32 0, %v1289
    %v1291 = vrot.slane %v1280, %v1290
    %v1292 = vlaneseq
    %v1293 = vshrl.u32 %v1292, 7
    %v1294 = vsub.s32 0, %v1293
    %v1295 = vrot.slane %v1281, %v1294
    %v1296 = vlaneseq
    %v1297 = vshrl.u32 %v1296, 7
    %v1298 = vsub.s32 0, %v1297
    %v1299 = vrot.slane %v1282, %v1298
    %v1300 = vlaneseq
    %v1301 = vshrl.u32 %v1300, 7
    %v1302 = vsub.s32 0, %v1301
    %v1303 = vrot.slane %v1283, %v1302
    %v1309 = vsel %vm79, %v1260, 0
    %1311 = vmatprep.subr.mxu0 0.0
    %1312 = vmatpush1.msra.mxu0 %v1263
    %1313 = vmatprep.subr.mxu0 0.0
    %1314 = vmatpush1.msra.mxu0 %v1264
    %1315 = vmatprep.subr.mxu0 0.0
    %1316 = vmatpush1.msra.mxu0 %v1265
    %1317 = vmatprep.subr.mxu0 0.0
    %1318 = vmatpush1.msra.mxu0 %v1266
    %1319 = vmatprep.subr.mxu0 0.0
    %1320 = vmatpush1.msra.mxu0 0.0
    %1321 = vmatprep.subr.mxu0 0.0
    %1322 = vmatpush1.msra.mxu0 0.0
    %1323 = vmatprep.subr.mxu0 0.0
    %1324 = vmatpush1.msra.mxu0 0.0
    %1325 = vmatprep.subr.mxu0 0.0
    %1326 = vmatpush1.msra.mxu0 0.0
    %1327 = vmatprep.subr.mxu0 0.0
    %1328 = vmatpush1.msra.mxu0 0.0
    %1329 = vmatprep.subr.mxu0 0.0
    %1330 = vmatpush1.msra.mxu0 0.0
    %1331 = vmatprep.subr.mxu0 0.0
    %1332 = vmatpush1.msra.mxu0 0.0
    %1333 = vmatprep.subr.mxu0 0.0
    %1334 = vmatpush1.msra.mxu0 0.0
    %1335 = vmatprep.subr.mxu0 0.0
    %1336 = vmatpush1.msra.mxu0 0.0
    %1337 = vmatprep.subr.mxu0 0.0
    %1338 = vmatpush1.msra.mxu0 0.0
    %1339 = vmatprep.subr.mxu0 0.0
    %1340 = vmatpush1.msra.mxu0 0.0
    %1341 = vmatprep.subr.mxu0 0.0
    %1342 = vmatpush1.msra.mxu0 0.0
    %1343 = vmatprep.subr.mxu0 0.0
    %1344 = vmatpush1.msra.mxu0 0.0
    %1345 = vmatprep.subr.mxu0 0.0
    %1346 = vmatpush1.msra.mxu0 0.0
    %1347 = vmatprep.subr.mxu0 0.0
    %1348 = vmatpush1.msra.mxu0 0.0
    %1349 = vmatprep.subr.mxu0 0.0
    %1350 = vmatpush1.msra.mxu0 0.0
    %1351 = vmatprep.subr.mxu0 0.0
    %1352 = vmatpush1.msra.mxu0 0.0
    %1353 = vmatprep.subr.mxu0 0.0
    %1354 = vmatpush1.msra.mxu0 0.0
    %1355 = vmatprep.subr.mxu0 0.0
    %1356 = vmatpush1.msra.mxu0 0.0
    %1357 = vmatprep.subr.mxu0 0.0
    %1358 = vmatpush1.msra.mxu0 0.0
    %1359 = vmatprep.subr.mxu0 0.0
    %1360 = vmatpush1.msra.mxu0 0.0
    %1361 = vmatprep.subr.mxu0 0.0
    %1362 = vmatpush1.msra.mxu0 0.0
    %1363 = vmatprep.subr.mxu0 0.0
    %1364 = vmatpush1.msra.mxu0 0.0
    %1365 = vmatprep.subr.mxu0 0.0
    %1366 = vmatpush1.msra.mxu0 0.0
    %1367 = vmatprep.subr.mxu0 0.0
    %1368 = vmatpush1.msra.mxu0 0.0
    %1369 = vmatprep.subr.mxu0 0.0
    %1370 = vmatpush1.msra.mxu0 0.0
    %1371 = vmatprep.subr.mxu0 0.0
    %1372 = vmatpush1.msra.mxu0 0.0
    %1373 = vmatprep.subr.mxu0 0.0
    %1374 = vmatpush1.msra.mxu0 0.0
    %1375 = vmatprep.mubr.f32.mxu0 0.0
    %1376 = vmatmul.mubr.f32.gmra.mrb[0].mxu0 %v1309
    %v1377 = vpop.f32.mrb[0].mxu0
    %v1378 = vadd.f32 %v1291, %v1377
    %v1379 = vpop.f32.mrb[0].mxu0
    %1380 = vdwg.mxu0
    %1381 = vmatprep.subr.mxu0 0.0
    %1382 = vmatpush1.msra.mxu0 %v1267
    %1383 = vmatprep.subr.mxu0 0.0
    %1384 = vmatpush1.msra.mxu0 %v1268
    %1385 = vmatprep.subr.mxu0 0.0
    %1386 = vmatpush1.msra.mxu0 %v1269
    %1387 = vmatprep.subr.mxu0 0.0
    %1388 = vmatpush1.msra.mxu0 %v1270
    %1389 = vmatprep.subr.mxu0 0.0
    %1390 = vmatpush1.msra.mxu0 0.0
    %1391 = vmatprep.subr.mxu0 0.0
    %1392 = vmatpush1.msra.mxu0 0.0
    %1393 = vmatprep.subr.mxu0 0.0
    %1394 = vmatpush1.msra.mxu0 0.0
    %1395 = vmatprep.subr.mxu0 0.0
    %1396 = vmatpush1.msra.mxu0 0.0
    %1397 = vmatprep.subr.mxu0 0.0
    %1398 = vmatpush1.msra.mxu0 0.0
    %1399 = vmatprep.subr.mxu0 0.0
    %1400 = vmatpush1.msra.mxu0 0.0
    %1401 = vmatprep.subr.mxu0 0.0
    %1402 = vmatpush1.msra.mxu0 0.0
    %1403 = vmatprep.subr.mxu0 0.0
    %1404 = vmatpush1.msra.mxu0 0.0
    %1405 = vmatprep.subr.mxu0 0.0
    %1406 = vmatpush1.msra.mxu0 0.0
    %1407 = vmatprep.subr.mxu0 0.0
    %1408 = vmatpush1.msra.mxu0 0.0
    %1409 = vmatprep.subr.mxu0 0.0
    %1410 = vmatpush1.msra.mxu0 0.0
    %1411 = vmatprep.subr.mxu0 0.0
    %1412 = vmatpush1.msra.mxu0 0.0
    %1413 = vmatprep.subr.mxu0 0.0
    %1414 = vmatpush1.msra.mxu0 0.0
    %1415 = vmatprep.subr.mxu0 0.0
    %1416 = vmatpush1.msra.mxu0 0.0
    %1417 = vmatprep.subr.mxu0 0.0
    %1418 = vmatpush1.msra.mxu0 0.0
    %1419 = vmatprep.subr.mxu0 0.0
    %1420 = vmatpush1.msra.mxu0 0.0
    %1421 = vmatprep.subr.mxu0 0.0
    %1422 = vmatpush1.msra.mxu0 0.0
    %1423 = vmatprep.subr.mxu0 0.0
    %1424 = vmatpush1.msra.mxu0 0.0
    %1425 = vmatprep.subr.mxu0 0.0
    %1426 = vmatpush1.msra.mxu0 0.0
    %1427 = vmatprep.subr.mxu0 0.0
    %1428 = vmatpush1.msra.mxu0 0.0
    %1429 = vmatprep.subr.mxu0 0.0
    %1430 = vmatpush1.msra.mxu0 0.0
    %1431 = vmatprep.subr.mxu0 0.0
    %1432 = vmatpush1.msra.mxu0 0.0
    %1433 = vmatprep.subr.mxu0 0.0
    %1434 = vmatpush1.msra.mxu0 0.0
    %1435 = vmatprep.subr.mxu0 0.0
    %1436 = vmatpush1.msra.mxu0 0.0
    %1437 = vmatprep.subr.mxu0 0.0
    %1438 = vmatpush1.msra.mxu0 0.0
    %1439 = vmatprep.subr.mxu0 0.0
    %1440 = vmatpush1.msra.mxu0 0.0
    %1441 = vmatprep.subr.mxu0 0.0
    %1442 = vmatpush1.msra.mxu0 0.0
    %1443 = vmatprep.subr.mxu0 0.0
    %1444 = vmatpush1.msra.mxu0 0.0
    %1445 = vmatprep.mubr.f32.mxu0 0.0
    %1446 = vmatmul.mubr.f32.gmra.mrb[0].mxu0 %v1309
    %v1447 = vpop.f32.mrb[0].mxu0
    %v1448 = vadd.f32 %v1295, %v1447
    %v1449 = vpop.f32.mrb[0].mxu0
    %1450 = vdwg.mxu0
    %1451 = vmatprep.subr.mxu0 0.0
    %1452 = vmatpush1.msra.mxu0 %v1271
    %1453 = vmatprep.subr.mxu0 0.0
    %1454 = vmatpush1.msra.mxu0 %v1272
    %1455 = vmatprep.subr.mxu0 0.0
    %1456 = vmatpush1.msra.mxu0 %v1273
    %1457 = vmatprep.subr.mxu0 0.0
    %1458 = vmatpush1.msra.mxu0 %v1274
    %1459 = vmatprep.subr.mxu0 0.0
    %1460 = vmatpush1.msra.mxu0 0.0
    %1461 = vmatprep.subr.mxu0 0.0
    %1462 = vmatpush1.msra.mxu0 0.0
    %1463 = vmatprep.subr.mxu0 0.0
    %1464 = vmatpush1.msra.mxu0 0.0
    %1465 = vmatprep.subr.mxu0 0.0
    %1466 = vmatpush1.msra.mxu0 0.0
    %1467 = vmatprep.subr.mxu0 0.0
    %1468 = vmatpush1.msra.mxu0 0.0
    %1469 = vmatprep.subr.mxu0 0.0
    %1470 = vmatpush1.msra.mxu0 0.0
    %1471 = vmatprep.subr.mxu0 0.0
    %1472 = vmatpush1.msra.mxu0 0.0
    %1473 = vmatprep.subr.mxu0 0.0
    %1474 = vmatpush1.msra.mxu0 0.0
    %1475 = vmatprep.subr.mxu0 0.0
    %1476 = vmatpush1.msra.mxu0 0.0
    %1477 = vmatprep.subr.mxu0 0.0
    %1478 = vmatpush1.msra.mxu0 0.0
    %1479 = vmatprep.subr.mxu0 0.0
    %1480 = vmatpush1.msra.mxu0 0.0
    %1481 = vmatprep.subr.mxu0 0.0
    %1482 = vmatpush1.msra.mxu0 0.0
    %1483 = vmatprep.subr.mxu0 0.0
    %1484 = vmatpush1.msra.mxu0 0.0
    %1485 = vmatprep.subr.mxu0 0.0
    %1486 = vmatpush1.msra.mxu0 0.0
    %1487 = vmatprep.subr.mxu0 0.0
    %1488 = vmatpush1.msra.mxu0 0.0
    %1489 = vmatprep.subr.mxu0 0.0
    %1490 = vmatpush1.msra.mxu0 0.0
    %1491 = vmatprep.subr.mxu0 0.0
    %1492 = vmatpush1.msra.mxu0 0.0
    %1493 = vmatprep.subr.mxu0 0.0
    %1494 = vmatpush1.msra.mxu0 0.0
    %1495 = vmatprep.subr.mxu0 0.0
    %1496 = vmatpush1.msra.mxu0 0.0
    %1497 = vmatprep.subr.mxu0 0.0
    %1498 = vmatpush1.msra.mxu0 0.0
    %1499 = vmatprep.subr.mxu0 0.0
    %1500 = vmatpush1.msra.mxu0 0.0
    %1501 = vmatprep.subr.mxu0 0.0
    %1502 = vmatpush1.msra.mxu0 0.0
    %1503 = vmatprep.subr.mxu0 0.0
    %1504 = vmatpush1.msra.mxu0 0.0
    %1505 = vmatprep.subr.mxu0 0.0
    %1506 = vmatpush1.msra.mxu0 0.0
    %1507 = vmatprep.subr.mxu0 0.0
    %1508 = vmatpush1.msra.mxu0 0.0
    %1509 = vmatprep.subr.mxu0 0.0
    %1510 = vmatpush1.msra.mxu0 0.0
    %1511 = vmatprep.subr.mxu0 0.0
    %1512 = vmatpush1.msra.mxu0 0.0
    %1513 = vmatprep.subr.mxu0 0.0
    %1514 = vmatpush1.msra.mxu0 0.0
    %1515 = vmatprep.mubr.f32.mxu0 0.0
    %1516 = vmatmul.mubr.f32.gmra.mrb[0].mxu0 %v1309
    %v1517 = vpop.f32.mrb[0].mxu0
    %v1518 = vadd.f32 %v1299, %v1517
    %v1519 = vpop.f32.mrb[0].mxu0
    %1520 = vdwg.mxu0
    %1521 = vmatprep.subr.mxu0 0.0
    %1522 = vmatpush1.msra.mxu0 %v1275
    %1523 = vmatprep.subr.mxu0 0.0
    %1524 = vmatpush1.msra.mxu0 %v1276
    %1525 = vmatprep.subr.mxu0 0.0
    %1526 = vmatpush1.msra.mxu0 %v1277
    %1527 = vmatprep.subr.mxu0 0.0
    %1528 = vmatpush1.msra.mxu0 %v1278
    %1529 = vmatprep.subr.mxu0 0.0
    %1530 = vmatpush1.msra.mxu0 0.0
    %1531 = vmatprep.subr.mxu0 0.0
    %1532 = vmatpush1.msra.mxu0 0.0
    %1533 = vmatprep.subr.mxu0 0.0
    %1534 = vmatpush1.msra.mxu0 0.0
    %1535 = vmatprep.subr.mxu0 0.0
    %1536 = vmatpush1.msra.mxu0 0.0
    %1537 = vmatprep.subr.mxu0 0.0
    %1538 = vmatpush1.msra.mxu0 0.0
    %1539 = vmatprep.subr.mxu0 0.0
    %1540 = vmatpush1.msra.mxu0 0.0
    %1541 = vmatprep.subr.mxu0 0.0
    %1542 = vmatpush1.msra.mxu0 0.0
    %1543 = vmatprep.subr.mxu0 0.0
    %1544 = vmatpush1.msra.mxu0 0.0
    %1545 = vmatprep.subr.mxu0 0.0
    %1546 = vmatpush1.msra.mxu0 0.0
    %1547 = vmatprep.subr.mxu0 0.0
    %1548 = vmatpush1.msra.mxu0 0.0
    %1549 = vmatprep.subr.mxu0 0.0
    %1550 = vmatpush1.msra.mxu0 0.0
    %1551 = vmatprep.subr.mxu0 0.0
    %1552 = vmatpush1.msra.mxu0 0.0
    %1553 = vmatprep.subr.mxu0 0.0
    %1554 = vmatpush1.msra.mxu0 0.0
    %1555 = vmatprep.subr.mxu0 0.0
    %1556 = vmatpush1.msra.mxu0 0.0
    %1557 = vmatprep.subr.mxu0 0.0
    %1558 = vmatpush1.msra.mxu0 0.0
    %1559 = vmatprep.subr.mxu0 0.0
    %1560 = vmatpush1.msra.mxu0 0.0
    %1561 = vmatprep.subr.mxu0 0.0
    %1562 = vmatpush1.msra.mxu0 0.0
    %1563 = vmatprep.subr.mxu0 0.0
    %1564 = vmatpush1.msra.mxu0 0.0
    %1565 = vmatprep.subr.mxu0 0.0
    %1566 = vmatpush1.msra.mxu0 0.0
    %1567 = vmatprep.subr.mxu0 0.0
    %1568 = vmatpush1.msra.mxu0 0.0
    %1569 = vmatprep.subr.mxu0 0.0
    %1570 = vmatpush1.msra.mxu0 0.0
    %1571 = vmatprep.subr.mxu0 0.0
    %1572 = vmatpush1.msra.mxu0 0.0
    %1573 = vmatprep.subr.mxu0 0.0
    %1574 = vmatpush1.msra.mxu0 0.0
    %1575 = vmatprep.subr.mxu0 0.0
    %1576 = vmatpush1.msra.mxu0 0.0
    %1577 = vmatprep.subr.mxu0 0.0
    %1578 = vmatpush1.msra.mxu0 0.0
    %1579 = vmatprep.subr.mxu0 0.0
    %1580 = vmatpush1.msra.mxu0 0.0
    %1581 = vmatprep.subr.mxu0 0.0
    %1582 = vmatpush1.msra.mxu0 0.0
    %1583 = vmatprep.subr.mxu0 0.0
    %1584 = vmatpush1.msra.mxu0 0.0
    %1585 = vmatprep.mubr.f32.mxu0 0.0
    %1586 = vmatmul.mubr.f32.gmra.mrb[0].mxu0 %v1309
    %v1587 = vpop.f32.mrb[0].mxu0
    %v1588 = vadd.f32 %v1303, %v1587
    %v1589 = vpop.f32.mrb[0].mxu0
    %1590 = vdwg.mxu0
    %v1592 = vsel %vm79, %v1261, 0
    %1594 = vmatprep.subr.mxu0 0.0
    %1595 = vmatpush1.msra.mxu0 %v1263
    %1596 = vmatprep.subr.mxu0 0.0
    %1597 = vmatpush1.msra.mxu0 %v1264
    %1598 = vmatprep.subr.mxu0 0.0
    %1599 = vmatpush1.msra.mxu0 %v1265
    %1600 = vmatprep.subr.mxu0 0.0
    %1601 = vmatpush1.msra.mxu0 %v1266
    %1602 = vmatprep.subr.mxu0 0.0
    %1603 = vmatpush1.msra.mxu0 0.0
    %1604 = vmatprep.subr.mxu0 0.0
    %1605 = vmatpush1.msra.mxu0 0.0
    %1606 = vmatprep.subr.mxu0 0.0
    %1607 = vmatpush1.msra.mxu0 0.0
    %1608 = vmatprep.subr.mxu0 0.0
    %1609 = vmatpush1.msra.mxu0 0.0
    %1610 = vmatprep.subr.mxu0 0.0
    %1611 = vmatpush1.msra.mxu0 0.0
    %1612 = vmatprep.subr.mxu0 0.0
    %1613 = vmatpush1.msra.mxu0 0.0
    %1614 = vmatprep.subr.mxu0 0.0
    %1615 = vmatpush1.msra.mxu0 0.0
    %1616 = vmatprep.subr.mxu0 0.0
    %1617 = vmatpush1.msra.mxu0 0.0
    %1618 = vmatprep.subr.mxu0 0.0
    %1619 = vmatpush1.msra.mxu0 0.0
    %1620 = vmatprep.subr.mxu0 0.0
    %1621 = vmatpush1.msra.mxu0 0.0
    %1622 = vmatprep.subr.mxu0 0.0
    %1623 = vmatpush1.msra.mxu0 0.0
    %1624 = vmatprep.subr.mxu0 0.0
    %1625 = vmatpush1.msra.mxu0 0.0
    %1626 = vmatprep.subr.mxu0 0.0
    %1627 = vmatpush1.msra.mxu0 0.0
    %1628 = vmatprep.subr.mxu0 0.0
    %1629 = vmatpush1.msra.mxu0 0.0
    %1630 = vmatprep.subr.mxu0 0.0
    %1631 = vmatpush1.msra.mxu0 0.0
    %1632 = vmatprep.subr.mxu0 0.0
    %1633 = vmatpush1.msra.mxu0 0.0
    %1634 = vmatprep.subr.mxu0 0.0
    %1635 = vmatpush1.msra.mxu0 0.0
    %1636 = vmatprep.subr.mxu0 0.0
    %1637 = vmatpush1.msra.mxu0 0.0
    %1638 = vmatprep.subr.mxu0 0.0
    %1639 = vmatpush1.msra.mxu0 0.0
    %1640 = vmatprep.subr.mxu0 0.0
    %1641 = vmatpush1.msra.mxu0 0.0
    %1642 = vmatprep.subr.mxu0 0.0
    %1643 = vmatpush1.msra.mxu0 0.0
    %1644 = vmatprep.subr.mxu0 0.0
    %1645 = vmatpush1.msra.mxu0 0.0
    %1646 = vmatprep.subr.mxu0 0.0
    %1647 = vmatpush1.msra.mxu0 0.0
    %1648 = vmatprep.subr.mxu0 0.0
    %1649 = vmatpush1.msra.mxu0 0.0
    %1650 = vmatprep.subr.mxu0 0.0
    %1651 = vmatpush1.msra.mxu0 0.0
    %1652 = vmatprep.subr.mxu0 0.0
    %1653 = vmatpush1.msra.mxu0 0.0
    %1654 = vmatprep.subr.mxu0 0.0
    %1655 = vmatpush1.msra.mxu0 0.0
    %1656 = vmatprep.subr.mxu0 0.0
    %1657 = vmatpush1.msra.mxu0 0.0
    %1658 = vmatprep.mubr.f32.mxu0 0.0
    %1659 = vmatmul.mubr.f32.gmra.mrb[0].mxu0 %v1592
    %v1660 = vpop.f32.mrb[0].mxu0
    %v1661 = vadd.f32 %v1291, %v1660
    %v1662 = vpop.f32.mrb[0].mxu0
    %1663 = vdwg.mxu0
    %1664 = vmatprep.subr.mxu0 0.0
    %1665 = vmatpush1.msra.mxu0 %v1267
    %1666 = vmatprep.subr.mxu0 0.0
    %1667 = vmatpush1.msra.mxu0 %v1268
    %1668 = vmatprep.subr.mxu0 0.0
    %1669 = vmatpush1.msra.mxu0 %v1269
    %1670 = vmatprep.subr.mxu0 0.0
    %1671 = vmatpush1.msra.mxu0 %v1270
    %1672 = vmatprep.subr.mxu0 0.0
    %1673 = vmatpush1.msra.mxu0 0.0
    %1674 = vmatprep.subr.mxu0 0.0
    %1675 = vmatpush1.msra.mxu0 0.0
    %1676 = vmatprep.subr.mxu0 0.0
    %1677 = vmatpush1.msra.mxu0 0.0
    %1678 = vmatprep.subr.mxu0 0.0
    %1679 = vmatpush1.msra.mxu0 0.0
    %1680 = vmatprep.subr.mxu0 0.0
    %1681 = vmatpush1.msra.mxu0 0.0
    %1682 = vmatprep.subr.mxu0 0.0
    %1683 = vmatpush1.msra.mxu0 0.0
    %1684 = vmatprep.subr.mxu0 0.0
    %1685 = vmatpush1.msra.mxu0 0.0
    %1686 = vmatprep.subr.mxu0 0.0
    %1687 = vmatpush1.msra.mxu0 0.0
    %1688 = vmatprep.subr.mxu0 0.0
    %1689 = vmatpush1.msra.mxu0 0.0
    %1690 = vmatprep.subr.mxu0 0.0
    %1691 = vmatpush1.msra.mxu0 0.0
    %1692 = vmatprep.subr.mxu0 0.0
    %1693 = vmatpush1.msra.mxu0 0.0
    %1694 = vmatprep.subr.mxu0 0.0
    %1695 = vmatpush1.msra.mxu0 0.0
    %1696 = vmatprep.subr.mxu0 0.0
    %1697 = vmatpush1.msra.mxu0 0.0
    %1698 = vmatprep.subr.mxu0 0.0
    %1699 = vmatpush1.msra.mxu0 0.0
    %1700 = vmatprep.subr.mxu0 0.0
    %1701 = vmatpush1.msra.mxu0 0.0
    %1702 = vmatprep.subr.mxu0 0.0
    %1703 = vmatpush1.msra.mxu0 0.0
    %1704 = vmatprep.subr.mxu0 0.0
    %1705 = vmatpush1.msra.mxu0 0.0
    %1706 = vmatprep.subr.mxu0 0.0
    %1707 = vmatpush1.msra.mxu0 0.0
    %1708 = vmatprep.subr.mxu0 0.0
    %1709 = vmatpush1.msra.mxu0 0.0
    %1710 = vmatprep.subr.mxu0 0.0
    %1711 = vmatpush1.msra.mxu0 0.0
    %1712 = vmatprep.subr.mxu0 0.0
    %1713 = vmatpush1.msra.mxu0 0.0
    %1714 = vmatprep.subr.mxu0 0.0
    %1715 = vmatpush1.msra.mxu0 0.0
    %1716 = vmatprep.subr.mxu0 0.0
    %1717 = vmatpush1.msra.mxu0 0.0
    %1718 = vmatprep.subr.mxu0 0.0
    %1719 = vmatpush1.msra.mxu0 0.0
    %1720 = vmatprep.subr.mxu0 0.0
    %1721 = vmatpush1.msra.mxu0 0.0
    %1722 = vmatprep.subr.mxu0 0.0
    %1723 = vmatpush1.msra.mxu0 0.0
    %1724 = vmatprep.subr.mxu0 0.0
    %1725 = vmatpush1.msra.mxu0 0.0
    %1726 = vmatprep.subr.mxu0 0.0
    %1727 = vmatpush1.msra.mxu0 0.0
    %1728 = vmatprep.mubr.f32.mxu0 0.0
    %1729 = vmatmul.mubr.f32.gmra.mrb[0].mxu0 %v1592
    %v1730 = vpop.f32.mrb[0].mxu0
    %v1731 = vadd.f32 %v1295, %v1730
    %v1732 = vpop.f32.mrb[0].mxu0
    %1733 = vdwg.mxu0
    %1734 = vmatprep.subr.mxu0 0.0
    %1735 = vmatpush1.msra.mxu0 %v1271
    %1736 = vmatprep.subr.mxu0 0.0
    %1737 = vmatpush1.msra.mxu0 %v1272
    %1738 = vmatprep.subr.mxu0 0.0
    %1739 = vmatpush1.msra.mxu0 %v1273
    %1740 = vmatprep.subr.mxu0 0.0
    %1741 = vmatpush1.msra.mxu0 %v1274
    %1742 = vmatprep.subr.mxu0 0.0
    %1743 = vmatpush1.msra.mxu0 0.0
    %1744 = vmatprep.subr.mxu0 0.0
    %1745 = vmatpush1.msra.mxu0 0.0
    %1746 = vmatprep.subr.mxu0 0.0
    %1747 = vmatpush1.msra.mxu0 0.0
    %1748 = vmatprep.subr.mxu0 0.0
    %1749 = vmatpush1.msra.mxu0 0.0
    %1750 = vmatprep.subr.mxu0 0.0
    %1751 = vmatpush1.msra.mxu0 0.0
    %1752 = vmatprep.subr.mxu0 0.0
    %1753 = vmatpush1.msra.mxu0 0.0
    %1754 = vmatprep.subr.mxu0 0.0
    %1755 = vmatpush1.msra.mxu0 0.0
    %1756 = vmatprep.subr.mxu0 0.0
    %1757 = vmatpush1.msra.mxu0 0.0
    %1758 = vmatprep.subr.mxu0 0.0
    %1759 = vmatpush1.msra.mxu0 0.0
    %1760 = vmatprep.subr.mxu0 0.0
    %1761 = vmatpush1.msra.mxu0 0.0
    %1762 = vmatprep.subr.mxu0 0.0
    %1763 = vmatpush1.msra.mxu0 0.0
    %1764 = vmatprep.subr.mxu0 0.0
    %1765 = vmatpush1.msra.mxu0 0.0
    %1766 = vmatprep.subr.mxu0 0.0
    %1767 = vmatpush1.msra.mxu0 0.0
    %1768 = vmatprep.subr.mxu0 0.0
    %1769 = vmatpush1.msra.mxu0 0.0
    %1770 = vmatprep.subr.mxu0 0.0
    %1771 = vmatpush1.msra.mxu0 0.0
    %1772 = vmatprep.subr.mxu0 0.0
    %1773 = vmatpush1.msra.mxu0 0.0
    %1774 = vmatprep.subr.mxu0 0.0
    %1775 = vmatpush1.msra.mxu0 0.0
    %1776 = vmatprep.subr.mxu0 0.0
    %1777 = vmatpush1.msra.mxu0 0.0
    %1778 = vmatprep.subr.mxu0 0.0
    %1779 = vmatpush1.msra.mxu0 0.0
    %1780 = vmatprep.subr.mxu0 0.0
    %1781 = vmatpush1.msra.mxu0 0.0
    %1782 = vmatprep.subr.mxu0 0.0
    %1783 = vmatpush1.msra.mxu0 0.0
    %1784 = vmatprep.subr.mxu0 0.0
    %1785 = vmatpush1.msra.mxu0 0.0
    %1786 = vmatprep.subr.mxu0 0.0
    %1787 = vmatpush1.msra.mxu0 0.0
    %1788 = vmatprep.subr.mxu0 0.0
    %1789 = vmatpush1.msra.mxu0 0.0
    %1790 = vmatprep.subr.mxu0 0.0
    %1791 = vmatpush1.msra.mxu0 0.0
    %1792 = vmatprep.subr.mxu0 0.0
    %1793 = vmatpush1.msra.mxu0 0.0
    %1794 = vmatprep.subr.mxu0 0.0
    %1795 = vmatpush1.msra.mxu0 0.0
    %1796 = vmatprep.subr.mxu0 0.0
    %1797 = vmatpush1.msra.mxu0 0.0
    %1798 = vmatprep.mubr.f32.mxu0 0.0
    %1799 = vmatmul.mubr.f32.gmra.mrb[0].mxu0 %v1592
    %v1800 = vpop.f32.mrb[0].mxu0
    %v1801 = vadd.f32 %v1299, %v1800
    %v1802 = vpop.f32.mrb[0].mxu0
    %1803 = vdwg.mxu0
    %1804 = vmatprep.subr.mxu0 0.0
    %1805 = vmatpush1.msra.mxu0 %v1275
    %1806 = vmatprep.subr.mxu0 0.0
    %1807 = vmatpush1.msra.mxu0 %v1276
    %1808 = vmatprep.subr.mxu0 0.0
    %1809 = vmatpush1.msra.mxu0 %v1277
    %1810 = vmatprep.subr.mxu0 0.0
    %1811 = vmatpush1.msra.mxu0 %v1278
    %1812 = vmatprep.subr.mxu0 0.0
    %1813 = vmatpush1.msra.mxu0 0.0
    %1814 = vmatprep.subr.mxu0 0.0
    %1815 = vmatpush1.msra.mxu0 0.0
    %1816 = vmatprep.subr.mxu0 0.0
    %1817 = vmatpush1.msra.mxu0 0.0
    %1818 = vmatprep.subr.mxu0 0.0
    %1819 = vmatpush1.msra.mxu0 0.0
    %1820 = vmatprep.subr.mxu0 0.0
    %1821 = vmatpush1.msra.mxu0 0.0
    %1822 = vmatprep.subr.mxu0 0.0
    %1823 = vmatpush1.msra.mxu0 0.0
    %1824 = vmatprep.subr.mxu0 0.0
    %1825 = vmatpush1.msra.mxu0 0.0
    %1826 = vmatprep.subr.mxu0 0.0
    %1827 = vmatpush1.msra.mxu0 0.0
    %1828 = vmatprep.subr.mxu0 0.0
    %1829 = vmatpush1.msra.mxu0 0.0
    %1830 = vmatprep.subr.mxu0 0.0
    %1831 = vmatpush1.msra.mxu0 0.0
    %1832 = vmatprep.subr.mxu0 0.0
    %1833 = vmatpush1.msra.mxu0 0.0
    %1834 = vmatprep.subr.mxu0 0.0
    %1835 = vmatpush1.msra.mxu0 0.0
    %1836 = vmatprep.subr.mxu0 0.0
    %1837 = vmatpush1.msra.mxu0 0.0
    %1838 = vmatprep.subr.mxu0 0.0
    %1839 = vmatpush1.msra.mxu0 0.0
    %1840 = vmatprep.subr.mxu0 0.0
    %1841 = vmatpush1.msra.mxu0 0.0
    %1842 = vmatprep.subr.mxu0 0.0
    %1843 = vmatpush1.msra.mxu0 0.0
    %1844 = vmatprep.subr.mxu0 0.0
    %1845 = vmatpush1.msra.mxu0 0.0
    %1846 = vmatprep.subr.mxu0 0.0
    %1847 = vmatpush1.msra.mxu0 0.0
    %1848 = vmatprep.subr.mxu0 0.0
    %1849 = vmatpush1.msra.mxu0 0.0
    %1850 = vmatprep.subr.mxu0 0.0
    %1851 = vmatpush1.msra.mxu0 0.0
    %1852 = vmatprep.subr.mxu0 0.0
    %1853 = vmatpush1.msra.mxu0 0.0
    %1854 = vmatprep.subr.mxu0 0.0
    %1855 = vmatpush1.msra.mxu0 0.0
    %1856 = vmatprep.subr.mxu0 0.0
    %1857 = vmatpush1.msra.mxu0 0.0
    %1858 = vmatprep.subr.mxu0 0.0
    %1859 = vmatpush1.msra.mxu0 0.0
    %1860 = vmatprep.subr.mxu0 0.0
    %1861 = vmatpush1.msra.mxu0 0.0
    %1862 = vmatprep.subr.mxu0 0.0
    %1863 = vmatpush1.msra.mxu0 0.0
    %1864 = vmatprep.subr.mxu0 0.0
    %1865 = vmatpush1.msra.mxu0 0.0
    %1866 = vmatprep.subr.mxu0 0.0
    %1867 = vmatpush1.msra.mxu0 0.0
    %1868 = vmatprep.mubr.f32.mxu0 0.0
    %1869 = vmatmul.mubr.f32.gmra.mrb[0].mxu0 %v1592
    %v1870 = vpop.f32.mrb[0].mxu0
    %v1871 = vadd.f32 %v1303, %v1870
    %v1872 = vpop.f32.mrb[0].mxu0
    %1873 = vdwg.mxu0
    %v1874 = vld [vmem:[%s3] sm:$0xff]
    %v1875 = vld [vmem:[%s3 + $0x8] sm:$0xff]
    %vm1876 = vcmask 64512
    %v1878 = vsel %vm1876, %v150, 0
    %v1881 = vsel %vm1876, %v764, 0
    %1883 = vmatprep.subr.mxu0 0.0
    %1884 = vmatpush1.xpose.msra.mxu0 %v1881
    %1885 = vmatprep.subr.mxu0 0.0
    %1886 = vmatpush1.xpose.msra.mxu0 0.0
    %1887 = vmatprep.subr.mxu0 0.0
    %1888 = vmatpush1.xpose.msra.mxu0 0.0
    %1889 = vmatprep.subr.mxu0 0.0
    %1890 = vmatpush1.xpose.msra.mxu0 0.0
    %1891 = vmatprep.subr.mxu0 0.0
    %1892 = vmatpush1.xpose.msra.mxu0 0.0
    %1893 = vmatprep.subr.mxu0 0.0
    %1894 = vmatpush1.xpose.msra.mxu0 0.0
    %1895 = vmatprep.subr.mxu0 0.0
    %1896 = vmatpush1.xpose.msra.mxu0 0.0
    %1897 = vmatprep.subr.mxu0 0.0
    %1898 = vmatpush1.xpose.msra.mxu0 0.0
    %1899 = vmatprep.subr.mxu0 0.0
    %1900 = vmatpush1.xpose.msra.mxu0 0.0
    %1901 = vmatprep.subr.mxu0 0.0
    %1902 = vmatpush1.xpose.msra.mxu0 0.0
    %1903 = vmatprep.subr.mxu0 0.0
    %1904 = vmatpush1.xpose.msra.mxu0 0.0
    %1905 = vmatprep.subr.mxu0 0.0
    %1906 = vmatpush1.xpose.msra.mxu0 0.0
    %1907 = vmatprep.subr.mxu0 0.0
    %1908 = vmatpush1.xpose.msra.mxu0 0.0
    %1909 = vmatprep.subr.mxu0 0.0
    %1910 = vmatpush1.xpose.msra.mxu0 0.0
    %1911 = vmatprep.subr.mxu0 0.0
    %1912 = vmatpush1.xpose.msra.mxu0 0.0
    %1913 = vmatprep.subr.mxu0 0.0
    %1914 = vmatpush1.xpose.msra.mxu0 0.0
    %1915 = vmatprep.subr.mxu0 0.0
    %1916 = vmatpush1.xpose.msra.mxu0 0.0
    %1917 = vmatprep.subr.mxu0 0.0
    %1918 = vmatpush1.xpose.msra.mxu0 0.0
    %1919 = vmatprep.subr.mxu0 0.0
    %1920 = vmatpush1.xpose.msra.mxu0 0.0
    %1921 = vmatprep.subr.mxu0 0.0
    %1922 = vmatpush1.xpose.msra.mxu0 0.0
    %1923 = vmatprep.subr.mxu0 0.0
    %1924 = vmatpush1.xpose.msra.mxu0 0.0
    %1925 = vmatprep.subr.mxu0 0.0
    %1926 = vmatpush1.xpose.msra.mxu0 0.0
    %1927 = vmatprep.subr.mxu0 0.0
    %1928 = vmatpush1.xpose.msra.mxu0 0.0
    %1929 = vmatprep.subr.mxu0 0.0
    %1930 = vmatpush1.xpose.msra.mxu0 0.0
    %1931 = vmatprep.subr.mxu0 0.0
    %1932 = vmatpush1.xpose.msra.mxu0 0.0
    %1933 = vmatprep.subr.mxu0 0.0
    %1934 = vmatpush1.xpose.msra.mxu0 0.0
    %1935 = vmatprep.subr.mxu0 0.0
    %1936 = vmatpush1.xpose.msra.mxu0 0.0
    %1937 = vmatprep.subr.mxu0 0.0
    %1938 = vmatpush1.xpose.msra.mxu0 0.0
    %1939 = vmatprep.subr.mxu0 0.0
    %1940 = vmatpush1.xpose.msra.mxu0 0.0
    %1941 = vmatprep.subr.mxu0 0.0
    %1942 = vmatpush1.xpose.msra.mxu0 0.0
    %1943 = vmatprep.subr.mxu0 0.0
    %1944 = vmatpush1.xpose.msra.mxu0 0.0
    %1945 = vmatprep.subr.mxu0 0.0
    %1946 = vmatpush1.xpose.msra.mxu0 0.0
    %1947 = vmatprep.mubr.f32.mxu0 0.0
    %1948 = vmatmul.mubr.f32.gmra.mrb[0].mxu0 %v1878
    %v1949 = vpop.f32.mrb[0].mxu0
    %v1950 = vadd.f32 %v1874, %v1949
    %v1951 = vpop.f32.mrb[0].mxu0
    %1952 = vdwg.mxu0
    %v1954 = vsel %vm1876, %v220, 0
    %v1957 = vsel %vm1876, %v834, 0
    %1959 = vmatprep.subr.mxu0 0.0
    %1960 = vmatpush1.xpose.msra.mxu0 %v1957
    %1961 = vmatprep.subr.mxu0 0.0
    %1962 = vmatpush1.xpose.msra.mxu0 0.0
    %1963 = vmatprep.subr.mxu0 0.0
    %1964 = vmatpush1.xpose.msra.mxu0 0.0
    %1965 = vmatprep.subr.mxu0 0.0
    %1966 = vmatpush1.xpose.msra.mxu0 0.0
    %1967 = vmatprep.subr.mxu0 0.0
    %1968 = vmatpush1.xpose.msra.mxu0 0.0
    %1969 = vmatprep.subr.mxu0 0.0
    %1970 = vmatpush1.xpose.msra.mxu0 0.0
    %1971 = vmatprep.subr.mxu0 0.0
    %1972 = vmatpush1.xpose.msra.mxu0 0.0
    %1973 = vmatprep.subr.mxu0 0.0
    %1974 = vmatpush1.xpose.msra.mxu0 0.0
    %1975 = vmatprep.subr.mxu0 0.0
    %1976 = vmatpush1.xpose.msra.mxu0 0.0
    %1977 = vmatprep.subr.mxu0 0.0
    %1978 = vmatpush1.xpose.msra.mxu0 0.0
    %1979 = vmatprep.subr.mxu0 0.0
    %1980 = vmatpush1.xpose.msra.mxu0 0.0
    %1981 = vmatprep.subr.mxu0 0.0
    %1982 = vmatpush1.xpose.msra.mxu0 0.0
    %1983 = vmatprep.subr.mxu0 0.0
    %1984 = vmatpush1.xpose.msra.mxu0 0.0
    %1985 = vmatprep.subr.mxu0 0.0
    %1986 = vmatpush1.xpose.msra.mxu0 0.0
    %1987 = vmatprep.subr.mxu0 0.0
    %1988 = vmatpush1.xpose.msra.mxu0 0.0
    %1989 = vmatprep.subr.mxu0 0.0
    %1990 = vmatpush1.xpose.msra.mxu0 0.0
    %1991 = vmatprep.subr.mxu0 0.0
    %1992 = vmatpush1.xpose.msra.mxu0 0.0
    %1993 = vmatprep.subr.mxu0 0.0
    %1994 = vmatpush1.xpose.msra.mxu0 0.0
    %1995 = vmatprep.subr.mxu0 0.0
    %1996 = vmatpush1.xpose.msra.mxu0 0.0
    %1997 = vmatprep.subr.mxu0 0.0
    %1998 = vmatpush1.xpose.msra.mxu0 0.0
    %1999 = vmatprep.subr.mxu0 0.0
    %2000 = vmatpush1.xpose.msra.mxu0 0.0
    %2001 = vmatprep.subr.mxu0 0.0
    %2002 = vmatpush1.xpose.msra.mxu0 0.0
    %2003 = vmatprep.subr.mxu0 0.0
    %2004 = vmatpush1.xpose.msra.mxu0 0.0
    %2005 = vmatprep.subr.mxu0 0.0
    %2006 = vmatpush1.xpose.msra.mxu0 0.0
    %2007 = vmatprep.subr.mxu0 0.0
    %2008 = vmatpush1.xpose.msra.mxu0 0.0
    %2009 = vmatprep.subr.mxu0 0.0
    %2010 = vmatpush1.xpose.msra.mxu0 0.0
    %2011 = vmatprep.subr.mxu0 0.0
    %2012 = vmatpush1.xpose.msra.mxu0 0.0
    %2013 = vmatprep.subr.mxu0 0.0
    %2014 = vmatpush1.xpose.msra.mxu0 0.0
    %2015 = vmatprep.subr.mxu0 0.0
    %2016 = vmatpush1.xpose.msra.mxu0 0.0
    %2017 = vmatprep.subr.mxu0 0.0
    %2018 = vmatpush1.xpose.msra.mxu0 0.0
    %2019 = vmatprep.subr.mxu0 0.0
    %2020 = vmatpush1.xpose.msra.mxu0 0.0
    %2021 = vmatprep.subr.mxu0 0.0
    %2022 = vmatpush1.xpose.msra.mxu0 0.0
    %2023 = vmatprep.mubr.f32.mxu0 0.0
    %2024 = vmatmul.mubr.f32.gmra.mrb[0].mxu0 %v1954
    %v2025 = vpop.f32.mrb[0].mxu0
    %v2026 = vadd.f32 %v1874, %v2025
    %v2027 = vpop.f32.mrb[0].mxu0
    %2028 = vdwg.mxu0
    %v2030 = vsel %vm1876, %v290, 0
    %v2033 = vsel %vm1876, %v904, 0
    %2035 = vmatprep.subr.mxu0 0.0
    %2036 = vmatpush1.xpose.msra.mxu0 %v2033
    %2037 = vmatprep.subr.mxu0 0.0
    %2038 = vmatpush1.xpose.msra.mxu0 0.0
    %2039 = vmatprep.subr.mxu0 0.0
    %2040 = vmatpush1.xpose.msra.mxu0 0.0
    %2041 = vmatprep.subr.mxu0 0.0
    %2042 = vmatpush1.xpose.msra.mxu0 0.0
    %2043 = vmatprep.subr.mxu0 0.0
    %2044 = vmatpush1.xpose.msra.mxu0 0.0
    %2045 = vmatprep.subr.mxu0 0.0
    %2046 = vmatpush1.xpose.msra.mxu0 0.0
    %2047 = vmatprep.subr.mxu0 0.0
    %2048 = vmatpush1.xpose.msra.mxu0 0.0
    %2049 = vmatprep.subr.mxu0 0.0
    %2050 = vmatpush1.xpose.msra.mxu0 0.0
    %2051 = vmatprep.subr.mxu0 0.0
    %2052 = vmatpush1.xpose.msra.mxu0 0.0
    %2053 = vmatprep.subr.mxu0 0.0
    %2054 = vmatpush1.xpose.msra.mxu0 0.0
    %2055 = vmatprep.subr.mxu0 0.0
    %2056 = vmatpush1.xpose.msra.mxu0 0.0
    %2057 = vmatprep.subr.mxu0 0.0
    %2058 = vmatpush1.xpose.msra.mxu0 0.0
    %2059 = vmatprep.subr.mxu0 0.0
    %2060 = vmatpush1.xpose.msra.mxu0 0.0
    %2061 = vmatprep.subr.mxu0 0.0
    %2062 = vmatpush1.xpose.msra.mxu0 0.0
    %2063 = vmatprep.subr.mxu0 0.0
    %2064 = vmatpush1.xpose.msra.mxu0 0.0
    %2065 = vmatprep.subr.mxu0 0.0
    %2066 = vmatpush1.xpose.msra.mxu0 0.0
    %2067 = vmatprep.subr.mxu0 0.0
    %2068 = vmatpush1.xpose.msra.mxu0 0.0
    %2069 = vmatprep.subr.mxu0 0.0
    %2070 = vmatpush1.xpose.msra.mxu0 0.0
    %2071 = vmatprep.subr.mxu0 0.0
    %2072 = vmatpush1.xpose.msra.mxu0 0.0
    %2073 = vmatprep.subr.mxu0 0.0
    %2074 = vmatpush1.xpose.msra.mxu0 0.0
    %2075 = vmatprep.subr.mxu0 0.0
    %2076 = vmatpush1.xpose.msra.mxu0 0.0
    %2077 = vmatprep.subr.mxu0 0.0
    %2078 = vmatpush1.xpose.msra.mxu0 0.0
    %2079 = vmatprep.subr.mxu0 0.0
    %2080 = vmatpush1.xpose.msra.mxu0 0.0
    %2081 = vmatprep.subr.mxu0 0.0
    %2082 = vmatpush1.xpose.msra.mxu0 0.0
    %2083 = vmatprep.subr.mxu0 0.0
    %2084 = vmatpush1.xpose.msra.mxu0 0.0
    %2085 = vmatprep.subr.mxu0 0.0
    %2086 = vmatpush1.xpose.msra.mxu0 0.0
    %2087 = vmatprep.subr.mxu0 0.0
    %2088 = vmatpush1.xpose.msra.mxu0 0.0
    %2089 = vmatprep.subr.mxu0 0.0
    %2090 = vmatpush1.xpose.msra.mxu0 0.0
    %2091 = vmatprep.subr.mxu0 0.0
    %2092 = vmatpush1.xpose.msra.mxu0 0.0
    %2093 = vmatprep.subr.mxu0 0.0
    %2094 = vmatpush1.xpose.msra.mxu0 0.0
    %2095 = vmatprep.subr.mxu0 0.0
    %2096 = vmatpush1.xpose.msra.mxu0 0.0
    %2097 = vmatprep.subr.mxu0 0.0
    %2098 = vmatpush1.xpose.msra.mxu0 0.0
    %2099 = vmatprep.mubr.f32.mxu0 0.0
    %2100 = vmatmul.mubr.f32.gmra.mrb[0].mxu0 %v2030
    %v2101 = vpop.f32.mrb[0].mxu0
    %v2102 = vadd.f32 %v1874, %v2101
    %v2103 = vpop.f32.mrb[0].mxu0
    %2104 = vdwg.mxu0
    %v2106 = vsel %vm1876, %v360, 0
    %v2109 = vsel %vm1876, %v974, 0
    %2111 = vmatprep.subr.mxu0 0.0
    %2112 = vmatpush1.xpose.msra.mxu0 %v2109
    %2113 = vmatprep.subr.mxu0 0.0
    %2114 = vmatpush1.xpose.msra.mxu0 0.0
    %2115 = vmatprep.subr.mxu0 0.0
    %2116 = vmatpush1.xpose.msra.mxu0 0.0
    %2117 = vmatprep.subr.mxu0 0.0
    %2118 = vmatpush1.xpose.msra.mxu0 0.0
    %2119 = vmatprep.subr.mxu0 0.0
    %2120 = vmatpush1.xpose.msra.mxu0 0.0
    %2121 = vmatprep.subr.mxu0 0.0
    %2122 = vmatpush1.xpose.msra.mxu0 0.0
    %2123 = vmatprep.subr.mxu0 0.0
    %2124 = vmatpush1.xpose.msra.mxu0 0.0
    %2125 = vmatprep.subr.mxu0 0.0
    %2126 = vmatpush1.xpose.msra.mxu0 0.0
    %2127 = vmatprep.subr.mxu0 0.0
    %2128 = vmatpush1.xpose.msra.mxu0 0.0
    %2129 = vmatprep.subr.mxu0 0.0
    %2130 = vmatpush1.xpose.msra.mxu0 0.0
    %2131 = vmatprep.subr.mxu0 0.0
    %2132 = vmatpush1.xpose.msra.mxu0 0.0
    %2133 = vmatprep.subr.mxu0 0.0
    %2134 = vmatpush1.xpose.msra.mxu0 0.0
    %2135 = vmatprep.subr.mxu0 0.0
    %2136 = vmatpush1.xpose.msra.mxu0 0.0
    %2137 = vmatprep.subr.mxu0 0.0
    %2138 = vmatpush1.xpose.msra.mxu0 0.0
    %2139 = vmatprep.subr.mxu0 0.0
    %2140 = vmatpush1.xpose.msra.mxu0 0.0
    %2141 = vmatprep.subr.mxu0 0.0
    %2142 = vmatpush1.xpose.msra.mxu0 0.0
    %2143 = vmatprep.subr.mxu0 0.0
    %2144 = vmatpush1.xpose.msra.mxu0 0.0
    %2145 = vmatprep.subr.mxu0 0.0
    %2146 = vmatpush1.xpose.msra.mxu0 0.0
    %2147 = vmatprep.subr.mxu0 0.0
    %2148 = vmatpush1.xpose.msra.mxu0 0.0
    %2149 = vmatprep.subr.mxu0 0.0
    %2150 = vmatpush1.xpose.msra.mxu0 0.0
    %2151 = vmatprep.subr.mxu0 0.0
    %2152 = vmatpush1.xpose.msra.mxu0 0.0
    %2153 = vmatprep.subr.mxu0 0.0
    %2154 = vmatpush1.xpose.msra.mxu0 0.0
    %2155 = vmatprep.subr.mxu0 0.0
    %2156 = vmatpush1.xpose.msra.mxu0 0.0
    %2157 = vmatprep.subr.mxu0 0.0
    %2158 = vmatpush1.xpose.msra.mxu0 0.0
    %2159 = vmatprep.subr.mxu0 0.0
    %2160 = vmatpush1.xpose.msra.mxu0 0.0
    %2161 = vmatprep.subr.mxu0 0.0
    %2162 = vmatpush1.xpose.msra.mxu0 0.0
    %2163 = vmatprep.subr.mxu0 0.0
    %2164 = vmatpush1.xpose.msra.mxu0 0.0
    %2165 = vmatprep.subr.mxu0 0.0
    %2166 = vmatpush1.xpose.msra.mxu0 0.0
    %2167 = vmatprep.subr.mxu0 0.0
    %2168 = vmatpush1.xpose.msra.mxu0 0.0
    %2169 = vmatprep.subr.mxu0 0.0
    %2170 = vmatpush1.xpose.msra.mxu0 0.0
    %2171 = vmatprep.subr.mxu0 0.0
    %2172 = vmatpush1.xpose.msra.mxu0 0.0
    %2173 = vmatprep.subr.mxu0 0.0
    %2174 = vmatpush1.xpose.msra.mxu0 0.0
    %2175 = vmatprep.mubr.f32.mxu0 0.0
    %2176 = vmatmul.mubr.f32.gmra.mrb[0].mxu0 %v2106
    %v2177 = vpop.f32.mrb[0].mxu0
    %v2178 = vadd.f32 %v1874, %v2177
    %v2179 = vpop.f32.mrb[0].mxu0
    %2180 = vdwg.mxu0
    %v2182 = vsel %vm1876, %v433, 0
    %v2185 = vsel %vm1876, %v1047, 0
    %2187 = vmatprep.subr.mxu0 0.0
    %2188 = vmatpush1.xpose.msra.mxu0 %v2185
    %2189 = vmatprep.subr.mxu0 0.0
    %2190 = vmatpush1.xpose.msra.mxu0 0.0
    %2191 = vmatprep.subr.mxu0 0.0
    %2192 = vmatpush1.xpose.msra.mxu0 0.0
    %2193 = vmatprep.subr.mxu0 0.0
    %2194 = vmatpush1.xpose.msra.mxu0 0.0
    %2195 = vmatprep.subr.mxu0 0.0
    %2196 = vmatpush1.xpose.msra.mxu0 0.0
    %2197 = vmatprep.subr.mxu0 0.0
    %2198 = vmatpush1.xpose.msra.mxu0 0.0
    %2199 = vmatprep.subr.mxu0 0.0
    %2200 = vmatpush1.xpose.msra.mxu0 0.0
    %2201 = vmatprep.subr.mxu0 0.0
    %2202 = vmatpush1.xpose.msra.mxu0 0.0
    %2203 = vmatprep.subr.mxu0 0.0
    %2204 = vmatpush1.xpose.msra.mxu0 0.0
    %2205 = vmatprep.subr.mxu0 0.0
    %2206 = vmatpush1.xpose.msra.mxu0 0.0
    %2207 = vmatprep.subr.mxu0 0.0
    %2208 = vmatpush1.xpose.msra.mxu0 0.0
    %2209 = vmatprep.subr.mxu0 0.0
    %2210 = vmatpush1.xpose.msra.mxu0 0.0
    %2211 = vmatprep.subr.mxu0 0.0
    %2212 = vmatpush1.xpose.msra.mxu0 0.0
    %2213 = vmatprep.subr.mxu0 0.0
    %2214 = vmatpush1.xpose.msra.mxu0 0.0
    %2215 = vmatprep.subr.mxu0 0.0
    %2216 = vmatpush1.xpose.msra.mxu0 0.0
    %2217 = vmatprep.subr.mxu0 0.0
    %2218 = vmatpush1.xpose.msra.mxu0 0.0
    %2219 = vmatprep.subr.mxu0 0.0
    %2220 = vmatpush1.xpose.msra.mxu0 0.0
    %2221 = vmatprep.subr.mxu0 0.0
    %2222 = vmatpush1.xpose.msra.mxu0 0.0
    %2223 = vmatprep.subr.mxu0 0.0
    %2224 = vmatpush1.xpose.msra.mxu0 0.0
    %2225 = vmatprep.subr.mxu0 0.0
    %2226 = vmatpush1.xpose.msra.mxu0 0.0
    %2227 = vmatprep.subr.mxu0 0.0
    %2228 = vmatpush1.xpose.msra.mxu0 0.0
    %2229 = vmatprep.subr.mxu0 0.0
    %2230 = vmatpush1.xpose.msra.mxu0 0.0
    %2231 = vmatprep.subr.mxu0 0.0
    %2232 = vmatpush1.xpose.msra.mxu0 0.0
    %2233 = vmatprep.subr.mxu0 0.0
    %2234 = vmatpush1.xpose.msra.mxu0 0.0
    %2235 = vmatprep.subr.mxu0 0.0
    %2236 = vmatpush1.xpose.msra.mxu0 0.0
    %2237 = vmatprep.subr.mxu0 0.0
    %2238 = vmatpush1.xpose.msra.mxu0 0.0
    %2239 = vmatprep.subr.mxu0 0.0
    %2240 = vmatpush1.xpose.msra.mxu0 0.0
    %2241 = vmatprep.subr.mxu0 0.0
    %2242 = vmatpush1.xpose.msra.mxu0 0.0
    %2243 = vmatprep.subr.mxu0 0.0
    %2244 = vmatpush1.xpose.msra.mxu0 0.0
    %2245 = vmatprep.subr.mxu0 0.0
    %2246 = vmatpush1.xpose.msra.mxu0 0.0
    %2247 = vmatprep.subr.mxu0 0.0
    %2248 = vmatpush1.xpose.msra.mxu0 0.0
    %2249 = vmatprep.subr.mxu0 0.0
    %2250 = vmatpush1.xpose.msra.mxu0 0.0
    %2251 = vmatprep.mubr.f32.mxu0 0.0
    %2252 = vmatmul.mubr.f32.gmra.mrb[0].mxu0 %v2182
    %v2253 = vpop.f32.mrb[0].mxu0
    %v2254 = vadd.f32 %v1875, %v2253
    %v2255 = vpop.f32.mrb[0].mxu0
    %2256 = vdwg.mxu0
    %v2258 = vsel %vm1876, %v503, 0
    %v2261 = vsel %vm1876, %v1117, 0
    %2263 = vmatprep.subr.mxu0 0.0
    %2264 = vmatpush1.xpose.msra.mxu0 %v2261
    %2265 = vmatprep.subr.mxu0 0.0
    %2266 = vmatpush1.xpose.msra.mxu0 0.0
    %2267 = vmatprep.subr.mxu0 0.0
    %2268 = vmatpush1.xpose.msra.mxu0 0.0
    %2269 = vmatprep.subr.mxu0 0.0
    %2270 = vmatpush1.xpose.msra.mxu0 0.0
    %2271 = vmatprep.subr.mxu0 0.0
    %2272 = vmatpush1.xpose.msra.mxu0 0.0
    %2273 = vmatprep.subr.mxu0 0.0
    %2274 = vmatpush1.xpose.msra.mxu0 0.0
    %2275 = vmatprep.subr.mxu0 0.0
    %2276 = vmatpush1.xpose.msra.mxu0 0.0
    %2277 = vmatprep.subr.mxu0 0.0
    %2278 = vmatpush1.xpose.msra.mxu0 0.0
    %2279 = vmatprep.subr.mxu0 0.0
    %2280 = vmatpush1.xpose.msra.mxu0 0.0
    %2281 = vmatprep.subr.mxu0 0.0
    %2282 = vmatpush1.xpose.msra.mxu0 0.0
    %2283 = vmatprep.subr.mxu0 0.0
    %2284 = vmatpush1.xpose.msra.mxu0 0.0
    %2285 = vmatprep.subr.mxu0 0.0
    %2286 = vmatpush1.xpose.msra.mxu0 0.0
    %2287 = vmatprep.subr.mxu0 0.0
    %2288 = vmatpush1.xpose.msra.mxu0 0.0
    %2289 = vmatprep.subr.mxu0 0.0
    %2290 = vmatpush1.xpose.msra.mxu0 0.0
    %2291 = vmatprep.subr.mxu0 0.0
    %2292 = vmatpush1.xpose.msra.mxu0 0.0
    %2293 = vmatprep.subr.mxu0 0.0
    %2294 = vmatpush1.xpose.msra.mxu0 0.0
    %2295 = vmatprep.subr.mxu0 0.0
    %2296 = vmatpush1.xpose.msra.mxu0 0.0
    %2297 = vmatprep.subr.mxu0 0.0
    %2298 = vmatpush1.xpose.msra.mxu0 0.0
    %2299 = vmatprep.subr.mxu0 0.0
    %2300 = vmatpush1.xpose.msra.mxu0 0.0
    %2301 = vmatprep.subr.mxu0 0.0
    %2302 = vmatpush1.xpose.msra.mxu0 0.0
    %2303 = vmatprep.subr.mxu0 0.0
    %2304 = vmatpush1.xpose.msra.mxu0 0.0
    %2305 = vmatprep.subr.mxu0 0.0
    %2306 = vmatpush1.xpose.msra.mxu0 0.0
    %2307 = vmatprep.subr.mxu0 0.0
    %2308 = vmatpush1.xpose.msra.mxu0 0.0
    %2309 = vmatprep.subr.mxu0 0.0
    %2310 = vmatpush1.xpose.msra.mxu0 0.0
    %2311 = vmatprep.subr.mxu0 0.0
    %2312 = vmatpush1.xpose.msra.mxu0 0.0
    %2313 = vmatprep.subr.mxu0 0.0
    %2314 = vmatpush1.xpose.msra.mxu0 0.0
    %2315 = vmatprep.subr.mxu0 0.0
    %2316 = vmatpush1.xpose.msra.mxu0 0.0
    %2317 = vmatprep.subr.mxu0 0.0
    %2318 = vmatpush1.xpose.msra.mxu0 0.0
    %2319 = vmatprep.subr.mxu0 0.0
    %2320 = vmatpush1.xpose.msra.mxu0 0.0
    %2321 = vmatprep.subr.mxu0 0.0
    %2322 = vmatpush1.xpose.msra.mxu0 0.0
    %2323 = vmatprep.subr.mxu0 0.0
    %2324 = vmatpush1.xpose.msra.mxu0 0.0
    %2325 = vmatprep.subr.mxu0 0.0
    %2326 = vmatpush1.xpose.msra.mxu0 0.0
    %2327 = vmatprep.mubr.f32.mxu0 0.0
    %2328 = vmatmul.mubr.f32.gmra.mrb[0].mxu0 %v2258
    %v2329 = vpop.f32.mrb[0].mxu0
    %v2330 = vadd.f32 %v1875, %v2329
    %v2331 = vpop.f32.mrb[0].mxu0
    %2332 = vdwg.mxu0
    %v2334 = vsel %vm1876, %v573, 0
    %v2337 = vsel %vm1876, %v1187, 0
    %2339 = vmatprep.subr.mxu0 0.0
    %2340 = vmatpush1.xpose.msra.mxu0 %v2337
    %2341 = vmatprep.subr.mxu0 0.0
    %2342 = vmatpush1.xpose.msra.mxu0 0.0
    %2343 = vmatprep.subr.mxu0 0.0
    %2344 = vmatpush1.xpose.msra.mxu0 0.0
    %2345 = vmatprep.subr.mxu0 0.0
    %2346 = vmatpush1.xpose.msra.mxu0 0.0
    %2347 = vmatprep.subr.mxu0 0.0
    %2348 = vmatpush1.xpose.msra.mxu0 0.0
    %2349 = vmatprep.subr.mxu0 0.0
    %2350 = vmatpush1.xpose.msra.mxu0 0.0
    %2351 = vmatprep.subr.mxu0 0.0
    %2352 = vmatpush1.xpose.msra.mxu0 0.0
    %2353 = vmatprep.subr.mxu0 0.0
    %2354 = vmatpush1.xpose.msra.mxu0 0.0
    %2355 = vmatprep.subr.mxu0 0.0
    %2356 = vmatpush1.xpose.msra.mxu0 0.0
    %2357 = vmatprep.subr.mxu0 0.0
    %2358 = vmatpush1.xpose.msra.mxu0 0.0
    %2359 = vmatprep.subr.mxu0 0.0
    %2360 = vmatpush1.xpose.msra.mxu0 0.0
    %2361 = vmatprep.subr.mxu0 0.0
    %2362 = vmatpush1.xpose.msra.mxu0 0.0
    %2363 = vmatprep.subr.mxu0 0.0
    %2364 = vmatpush1.xpose.msra.mxu0 0.0
    %2365 = vmatprep.subr.mxu0 0.0
    %2366 = vmatpush1.xpose.msra.mxu0 0.0
    %2367 = vmatprep.subr.mxu0 0.0
    %2368 = vmatpush1.xpose.msra.mxu0 0.0
    %2369 = vmatprep.subr.mxu0 0.0
    %2370 = vmatpush1.xpose.msra.mxu0 0.0
    %2371 = vmatprep.subr.mxu0 0.0
    %2372 = vmatpush1.xpose.msra.mxu0 0.0
    %2373 = vmatprep.subr.mxu0 0.0
    %2374 = vmatpush1.xpose.msra.mxu0 0.0
    %2375 = vmatprep.subr.mxu0 0.0
    %2376 = vmatpush1.xpose.msra.mxu0 0.0
    %2377 = vmatprep.subr.mxu0 0.0
    %2378 = vmatpush1.xpose.msra.mxu0 0.0
    %2379 = vmatprep.subr.mxu0 0.0
    %2380 = vmatpush1.xpose.msra.mxu0 0.0
    %2381 = vmatprep.subr.mxu0 0.0
    %2382 = vmatpush1.xpose.msra.mxu0 0.0
    %2383 = vmatprep.subr.mxu0 0.0
    %2384 = vmatpush1.xpose.msra.mxu0 0.0
    %2385 = vmatprep.subr.mxu0 0.0
    %2386 = vmatpush1.xpose.msra.mxu0 0.0
    %2387 = vmatprep.subr.mxu0 0.0
    %2388 = vmatpush1.xpose.msra.mxu0 0.0
    %2389 = vmatprep.subr.mxu0 0.0
    %2390 = vmatpush1.xpose.msra.mxu0 0.0
    %2391 = vmatprep.subr.mxu0 0.0
    %2392 = vmatpush1.xpose.msra.mxu0 0.0
    %2393 = vmatprep.subr.mxu0 0.0
    %2394 = vmatpush1.xpose.msra.mxu0 0.0
    %2395 = vmatprep.subr.mxu0 0.0
    %2396 = vmatpush1.xpose.msra.mxu0 0.0
    %2397 = vmatprep.subr.mxu0 0.0
    %2398 = vmatpush1.xpose.msra.mxu0 0.0
    %2399 = vmatprep.subr.mxu0 0.0
    %2400 = vmatpush1.xpose.msra.mxu0 0.0
    %2401 = vmatprep.subr.mxu0 0.0
    %2402 = vmatpush1.xpose.msra.mxu0 0.0
    %2403 = vmatprep.mubr.f32.mxu0 0.0
    %2404 = vmatmul.mubr.f32.gmra.mrb[0].mxu0 %v2334
    %v2405 = vpop.f32.mrb[0].mxu0
    %v2406 = vadd.f32 %v1875, %v2405
    %v2407 = vpop.f32.mrb[0].mxu0
    %2408 = vdwg.mxu0
    %v2410 = vsel %vm1876, %v643, 0
    %v2413 = vsel %vm1876, %v1257, 0
    %2415 = vmatprep.subr.mxu0 0.0
    %2416 = vmatpush1.xpose.msra.mxu0 %v2413
    %2417 = vmatprep.subr.mxu0 0.0
    %2418 = vmatpush1.xpose.msra.mxu0 0.0
    %2419 = vmatprep.subr.mxu0 0.0
    %2420 = vmatpush1.xpose.msra.mxu0 0.0
    %2421 = vmatprep.subr.mxu0 0.0
    %2422 = vmatpush1.xpose.msra.mxu0 0.0
    %2423 = vmatprep.subr.mxu0 0.0
    %2424 = vmatpush1.xpose.msra.mxu0 0.0
    %2425 = vmatprep.subr.mxu0 0.0
    %2426 = vmatpush1.xpose.msra.mxu0 0.0
    %2427 = vmatprep.subr.mxu0 0.0
    %2428 = vmatpush1.xpose.msra.mxu0 0.0
    %2429 = vmatprep.subr.mxu0 0.0
    %2430 = vmatpush1.xpose.msra.mxu0 0.0
    %2431 = vmatprep.subr.mxu0 0.0
    %2432 = vmatpush1.xpose.msra.mxu0 0.0
    %2433 = vmatprep.subr.mxu0 0.0
    %2434 = vmatpush1.xpose.msra.mxu0 0.0
    %2435 = vmatprep.subr.mxu0 0.0
    %2436 = vmatpush1.xpose.msra.mxu0 0.0
    %2437 = vmatprep.subr.mxu0 0.0
    %2438 = vmatpush1.xpose.msra.mxu0 0.0
    %2439 = vmatprep.subr.mxu0 0.0
    %2440 = vmatpush1.xpose.msra.mxu0 0.0
    %2441 = vmatprep.subr.mxu0 0.0
    %2442 = vmatpush1.xpose.msra.mxu0 0.0
    %2443 = vmatprep.subr.mxu0 0.0
    %2444 = vmatpush1.xpose.msra.mxu0 0.0
    %2445 = vmatprep.subr.mxu0 0.0
    %2446 = vmatpush1.xpose.msra.mxu0 0.0
    %2447 = vmatprep.subr.mxu0 0.0
    %2448 = vmatpush1.xpose.msra.mxu0 0.0
    %2449 = vmatprep.subr.mxu0 0.0
    %2450 = vmatpush1.xpose.msra.mxu0 0.0
    %2451 = vmatprep.subr.mxu0 0.0
    %2452 = vmatpush1.xpose.msra.mxu0 0.0
    %2453 = vmatprep.subr.mxu0 0.0
    %2454 = vmatpush1.xpose.msra.mxu0 0.0
    %2455 = vmatprep.subr.mxu0 0.0
    %2456 = vmatpush1.xpose.msra.mxu0 0.0
    %2457 = vmatprep.subr.mxu0 0.0
    %2458 = vmatpush1.xpose.msra.mxu0 0.0
    %2459 = vmatprep.subr.mxu0 0.0
    %2460 = vmatpush1.xpose.msra.mxu0 0.0
    %2461 = vmatprep.subr.mxu0 0.0
    %2462 = vmatpush1.xpose.msra.mxu0 0.0
    %2463 = vmatprep.subr.mxu0 0.0
    %2464 = vmatpush1.xpose.msra.mxu0 0.0
    %2465 = vmatprep.subr.mxu0 0.0
    %2466 = vmatpush1.xpose.msra.mxu0 0.0
    %2467 = vmatprep.subr.mxu0 0.0
    %2468 = vmatpush1.xpose.msra.mxu0 0.0
    %2469 = vmatprep.subr.mxu0 0.0
    %2470 = vmatpush1.xpose.msra.mxu0 0.0
    %2471 = vmatprep.subr.mxu0 0.0
    %2472 = vmatpush1.xpose.msra.mxu0 0.0
    %2473 = vmatprep.subr.mxu0 0.0
    %2474 = vmatpush1.xpose.msra.mxu0 0.0
    %2475 = vmatprep.subr.mxu0 0.0
    %2476 = vmatpush1.xpose.msra.mxu0 0.0
    %2477 = vmatprep.subr.mxu0 0.0
    %2478 = vmatpush1.xpose.msra.mxu0 0.0
    %2479 = vmatprep.mubr.f32.mxu0 0.0
    %2480 = vmatmul.mubr.f32.gmra.mrb[0].mxu0 %v2410
    %v2481 = vpop.f32.mrb[0].mxu0
    %v2482 = vadd.f32 %v1875, %v2481
    %v2483 = vpop.f32.mrb[0].mxu0
    %2484 = vdwg.mxu0
    %v2485 = vsel %vm1876, %v1950, -inf
    %2486 = vmax.xlane.f32.xlu0 %v2485
    %v2487 = vpop.xlane.xlu0 %2486
    %v2488 = vsel %vm1876, %v2026, -inf
    %2489 = vmax.xlane.f32.xlu0 %v2488
    %v2490 = vpop.xlane.xlu0 %2489
    %v2491 = vsel %vm1876, %v2102, -inf
    %2492 = vmax.xlane.f32.xlu0 %v2491
    %v2493 = vpop.xlane.xlu0 %2492
    %v2494 = vsel %vm1876, %v2178, -inf
    %2495 = vmax.xlane.f32.xlu0 %v2494
    %v2496 = vpop.xlane.xlu0 %2495
    %v2497 = vsel %vm1876, %v2254, -inf
    %2498 = vmax.xlane.f32.xlu0 %v2497
    %v2499 = vpop.xlane.xlu0 %2498
    %v2500 = vsel %vm1876, %v2330, -inf
    %2501 = vmax.xlane.f32.xlu0 %v2500
    %v2502 = vpop.xlane.xlu0 %2501
    %v2503 = vsel %vm1876, %v2406, -inf
    %2504 = vmax.xlane.f32.xlu0 %v2503
    %v2505 = vpop.xlane.xlu0 %2504
    %v2506 = vsel %vm1876, %v2482, -inf
    %2507 = vmax.xlane.f32.xlu0 %v2506
    %v2508 = vpop.xlane.xlu0 %2507
    %v2509 = vsub.f32 %v1950, %v2487
    %v2510 = vsub.f32 %v2026, %v2490
    %v2511 = vsub.f32 %v2102, %v2493
    %v2512 = vsub.f32 %v2178, %v2496
    %v2513 = vsub.f32 %v2254, %v2499
    %v2514 = vsub.f32 %v2330, %v2502
    %v2515 = vsub.f32 %v2406, %v2505
    %v2516 = vsub.f32 %v2482, %v2508
    %v2517 = vmul.f32 %v2509, 1.442695
    %v2518 = vpow.pop %v2517
    %v2519 = vmul.f32 %v2510, 1.442695
    %v2520 = vpow.pop %v2519
    %v2521 = vmul.f32 %v2511, 1.442695
    %v2522 = vpow.pop %v2521
    %v2523 = vmul.f32 %v2512, 1.442695
    %v2524 = vpow.pop %v2523
    %v2525 = vmul.f32 %v2513, 1.442695
    %v2526 = vpow.pop %v2525
    %v2527 = vmul.f32 %v2514, 1.442695
    %v2528 = vpow.pop %v2527
    %v2529 = vmul.f32 %v2515, 1.442695
    %v2530 = vpow.pop %v2529
    %v2531 = vmul.f32 %v2516, 1.442695
    %v2532 = vpow.pop %v2531
    %v2533 = vsel %vm1876, %v2518, 0.0
    %2534 = vadd.xlane.f32.xlu0 %v2533
    %v2535 = vpop.xlane.xlu0 %2534
    %v2536 = vsel %vm1876, %v2520, 0.0
    %2537 = vadd.xlane.f32.xlu0 %v2536
    %v2538 = vpop.xlane.xlu0 %2537
    %v2539 = vsel %vm1876, %v2522, 0.0
    %2540 = vadd.xlane.f32.xlu0 %v2539
    %v2541 = vpop.xlane.xlu0 %2540
    %v2542 = vsel %vm1876, %v2524, 0.0
    %2543 = vadd.xlane.f32.xlu0 %v2542
    %v2544 = vpop.xlane.xlu0 %2543
    %v2545 = vsel %vm1876, %v2526, 0.0
    %2546 = vadd.xlane.f32.xlu0 %v2545
    %v2547 = vpop.xlane.xlu0 %2546
    %v2548 = vsel %vm1876, %v2528, 0.0
    %2549 = vadd.xlane.f32.xlu0 %v2548
    %v2550 = vpop.xlane.xlu0 %2549
    %v2551 = vsel %vm1876, %v2530, 0.0
    %2552 = vadd.xlane.f32.xlu0 %v2551
    %v2553 = vpop.xlane.xlu0 %2552
    %v2554 = vsel %vm1876, %v2532, 0.0
    %2555 = vadd.xlane.f32.xlu0 %v2554
    %v2556 = vpop.xlane.xlu0 %2555
    %v2557 = vrcp.pop %v2535
    %v2558 = vrcp.pop %v2538
    %v2559 = vrcp.pop %v2541
    %v2560 = vrcp.pop %v2544
    %v2561 = vrcp.pop %v2547
    %v2562 = vrcp.pop %v2550
    %v2563 = vrcp.pop %v2553
    %v2564 = vrcp.pop %v2556
    %v2565 = vmul.f32 %v2518, %v2557
    %v2566 = vmul.f32 %v2520, %v2558
    %v2567 = vmul.f32 %v2522, %v2559
    %v2568 = vmul.f32 %v2524, %v2560
    %v2569 = vmul.f32 %v2526, %v2561
    %v2570 = vmul.f32 %v2528, %v2562
    %v2571 = vmul.f32 %v2530, %v2563
    %v2572 = vmul.f32 %v2532, %v2564
    %2573 = vst.msk [vmem:[#allocation4] sm:$0xff] %vm1876, %v2565
    %2574 = vst.msk [vmem:[#allocation4 + $0x8] sm:$0xff] %vm1876, %v2566
    %2575 = vst.msk [vmem:[#allocation4 + $0x10] sm:$0xff] %vm1876, %v2567
    %2576 = vst.msk [vmem:[#allocation4 + $0x18] sm:$0xff] %vm1876, %v2568
    %2577 = vst.msk [vmem:[#allocation4 + $0x20] sm:$0xff] %vm1876, %v2569
    %2578 = vst.msk [vmem:[#allocation4 + $0x28] sm:$0xff] %vm1876, %v2570
    %2579 = vst.msk [vmem:[#allocation4 + $0x30] sm:$0xff] %vm1876, %v2571
    %2580 = vst.msk [vmem:[#allocation4 + $0x38] sm:$0xff] %vm1876, %v2572
    %v2582 = vsel %vm1876, %v2565, 0
    %2584 = vmatprep.subr.mxu0 0.0
    %2585 = vmatpush1.msra.mxu0 %v1378
    %2586 = vmatprep.subr.mxu0 0.0
    %2587 = vmatpush1.msra.mxu0 0.0
    %2588 = vmatprep.subr.mxu0 0.0
    %2589 = vmatpush1.msra.mxu0 0.0
    %2590 = vmatprep.subr.mxu0 0.0
    %2591 = vmatpush1.msra.mxu0 0.0
    %2592 = vmatprep.subr.mxu0 0.0
    %2593 = vmatpush1.msra.mxu0 0.0
    %2594 = vmatprep.subr.mxu0 0.0
    %2595 = vmatpush1.msra.mxu0 0.0
    %2596 = vmatprep.subr.mxu0 0.0
    %2597 = vmatpush1.msra.mxu0 0.0
    %2598 = vmatprep.subr.mxu0 0.0
    %2599 = vmatpush1.msra.mxu0 0.0
    %2600 = vmatprep.subr.mxu0 0.0
    %2601 = vmatpush1.msra.mxu0 0.0
    %2602 = vmatprep.subr.mxu0 0.0
    %2603 = vmatpush1.msra.mxu0 0.0
    %2604 = vmatprep.subr.mxu0 0.0
    %2605 = vmatpush1.msra.mxu0 0.0
    %2606 = vmatprep.subr.mxu0 0.0
    %2607 = vmatpush1.msra.mxu0 0.0
    %2608 = vmatprep.subr.mxu0 0.0
    %2609 = vmatpush1.msra.mxu0 0.0
    %2610 = vmatprep.subr.mxu0 0.0
    %2611 = vmatpush1.msra.mxu0 0.0
    %2612 = vmatprep.subr.mxu0 0.0
    %2613 = vmatpush1.msra.mxu0 0.0
    %2614 = vmatprep.subr.mxu0 0.0
    %2615 = vmatpush1.msra.mxu0 0.0
    %2616 = vmatprep.subr.mxu0 0.0
    %2617 = vmatpush1.msra.mxu0 0.0
    %2618 = vmatprep.subr.mxu0 0.0
    %2619 = vmatpush1.msra.mxu0 0.0
    %2620 = vmatprep.subr.mxu0 0.0
    %2621 = vmatpush1.msra.mxu0 0.0
    %2622 = vmatprep.subr.mxu0 0.0
    %2623 = vmatpush1.msra.mxu0 0.0
    %2624 = vmatprep.subr.mxu0 0.0
    %2625 = vmatpush1.msra.mxu0 0.0
    %2626 = vmatprep.subr.mxu0 0.0
    %2627 = vmatpush1.msra.mxu0 0.0
    %2628 = vmatprep.subr.mxu0 0.0
    %2629 = vmatpush1.msra.mxu0 0.0
    %2630 = vmatprep.subr.mxu0 0.0
    %2631 = vmatpush1.msra.mxu0 0.0
    %2632 = vmatprep.subr.mxu0 0.0
    %2633 = vmatpush1.msra.mxu0 0.0
    %2634 = vmatprep.subr.mxu0 0.0
    %2635 = vmatpush1.msra.mxu0 0.0
    %2636 = vmatprep.subr.mxu0 0.0
    %2637 = vmatpush1.msra.mxu0 0.0
    %2638 = vmatprep.subr.mxu0 0.0
    %2639 = vmatpush1.msra.mxu0 0.0
    %2640 = vmatprep.subr.mxu0 0.0
    %2641 = vmatpush1.msra.mxu0 0.0
    %2642 = vmatprep.subr.mxu0 0.0
    %2643 = vmatpush1.msra.mxu0 0.0
    %2644 = vmatprep.subr.mxu0 0.0
    %2645 = vmatpush1.msra.mxu0 0.0
    %2646 = vmatprep.subr.mxu0 0.0
    %2647 = vmatpush1.msra.mxu0 0.0
    %2648 = vmatprep.mubr.f32.mxu0 0.0
    %2649 = vmatmul.mubr.f32.gmra.mrb[0].mxu0 %v2582
    %v2650 = vpop.f32.mrb[0].mxu0
    %v2651 = vadd.f32 0.0, %v2650
    %v2652 = vpop.f32.mrb[0].mxu0
    %2653 = vdwg.mxu0
    %v2655 = vsel %vm1876, %v2566, 0
    %2657 = vmatprep.subr.mxu0 0.0
    %2658 = vmatpush1.msra.mxu0 %v1448
    %2659 = vmatprep.subr.mxu0 0.0
    %2660 = vmatpush1.msra.mxu0 0.0
    %2661 = vmatprep.subr.mxu0 0.0
    %2662 = vmatpush1.msra.mxu0 0.0
    %2663 = vmatprep.subr.mxu0 0.0
    %2664 = vmatpush1.msra.mxu0 0.0
    %2665 = vmatprep.subr.mxu0 0.0
    %2666 = vmatpush1.msra.mxu0 0.0
    %2667 = vmatprep.subr.mxu0 0.0
    %2668 = vmatpush1.msra.mxu0 0.0
    %2669 = vmatprep.subr.mxu0 0.0
    %2670 = vmatpush1.msra.mxu0 0.0
    %2671 = vmatprep.subr.mxu0 0.0
    %2672 = vmatpush1.msra.mxu0 0.0
    %2673 = vmatprep.subr.mxu0 0.0
    %2674 = vmatpush1.msra.mxu0 0.0
    %2675 = vmatprep.subr.mxu0 0.0
    %2676 = vmatpush1.msra.mxu0 0.0
    %2677 = vmatprep.subr.mxu0 0.0
    %2678 = vmatpush1.msra.mxu0 0.0
    %2679 = vmatprep.subr.mxu0 0.0
    %2680 = vmatpush1.msra.mxu0 0.0
    %2681 = vmatprep.subr.mxu0 0.0
    %2682 = vmatpush1.msra.mxu0 0.0
    %2683 = vmatprep.subr.mxu0 0.0
    %2684 = vmatpush1.msra.mxu0 0.0
    %2685 = vmatprep.subr.mxu0 0.0
    %2686 = vmatpush1.msra.mxu0 0.0
    %2687 = vmatprep.subr.mxu0 0.0
    %2688 = vmatpush1.msra.mxu0 0.0
    %2689 = vmatprep.subr.mxu0 0.0
    %2690 = vmatpush1.msra.mxu0 0.0
    %2691 = vmatprep.subr.mxu0 0.0
    %2692 = vmatpush1.msra.mxu0 0.0
    %2693 = vmatprep.subr.mxu0 0.0
    %2694 = vmatpush1.msra.mxu0 0.0
    %2695 = vmatprep.subr.mxu0 0.0
    %2696 = vmatpush1.msra.mxu0 0.0
    %2697 = vmatprep.subr.mxu0 0.0
    %2698 = vmatpush1.msra.mxu0 0.0
    %2699 = vmatprep.subr.mxu0 0.0
    %2700 = vmatpush1.msra.mxu0 0.0
    %2701 = vmatprep.subr.mxu0 0.0
    %2702 = vmatpush1.msra.mxu0 0.0
    %2703 = vmatprep.subr.mxu0 0.0
    %2704 = vmatpush1.msra.mxu0 0.0
    %2705 = vmatprep.subr.mxu0 0.0
    %2706 = vmatpush1.msra.mxu0 0.0
    %2707 = vmatprep.subr.mxu0 0.0
    %2708 = vmatpush1.msra.mxu0 0.0
    %2709 = vmatprep.subr.mxu0 0.0
    %2710 = vmatpush1.msra.mxu0 0.0
    %2711 = vmatprep.subr.mxu0 0.0
    %2712 = vmatpush1.msra.mxu0 0.0
    %2713 = vmatprep.subr.mxu0 0.0
    %2714 = vmatpush1.msra.mxu0 0.0
    %2715 = vmatprep.subr.mxu0 0.0
    %2716 = vmatpush1.msra.mxu0 0.0
    %2717 = vmatprep.subr.mxu0 0.0
    %2718 = vmatpush1.msra.mxu0 0.0
    %2719 = vmatprep.subr.mxu0 0.0
    %2720 = vmatpush1.msra.mxu0 0.0
    %2721 = vmatprep.mubr.f32.mxu0 0.0
    %2722 = vmatmul.mubr.f32.gmra.mrb[0].mxu0 %v2655
    %v2723 = vpop.f32.mrb[0].mxu0
    %v2724 = vadd.f32 0.0, %v2723
    %v2725 = vpop.f32.mrb[0].mxu0
    %2726 = vdwg.mxu0
    %v2728 = vsel %vm1876, %v2567, 0
    %2730 = vmatprep.subr.mxu0 0.0
    %2731 = vmatpush1.msra.mxu0 %v1518
    %2732 = vmatprep.subr.mxu0 0.0
    %2733 = vmatpush1.msra.mxu0 0.0
    %2734 = vmatprep.subr.mxu0 0.0
    %2735 = vmatpush1.msra.mxu0 0.0
    %2736 = vmatprep.subr.mxu0 0.0
    %2737 = vmatpush1.msra.mxu0 0.0
    %2738 = vmatprep.subr.mxu0 0.0
    %2739 = vmatpush1.msra.mxu0 0.0
    %2740 = vmatprep.subr.mxu0 0.0
    %2741 = vmatpush1.msra.mxu0 0.0
    %2742 = vmatprep.subr.mxu0 0.0
    %2743 = vmatpush1.msra.mxu0 0.0
    %2744 = vmatprep.subr.mxu0 0.0
    %2745 = vmatpush1.msra.mxu0 0.0
    %2746 = vmatprep.subr.mxu0 0.0
    %2747 = vmatpush1.msra.mxu0 0.0
    %2748 = vmatprep.subr.mxu0 0.0
    %2749 = vmatpush1.msra.mxu0 0.0
    %2750 = vmatprep.subr.mxu0 0.0
    %2751 = vmatpush1.msra.mxu0 0.0
    %2752 = vmatprep.subr.mxu0 0.0
    %2753 = vmatpush1.msra.mxu0 0.0
    %2754 = vmatprep.subr.mxu0 0.0
    %2755 = vmatpush1.msra.mxu0 0.0
    %2756 = vmatprep.subr.mxu0 0.0
    %2757 = vmatpush1.msra.mxu0 0.0
    %2758 = vmatprep.subr.mxu0 0.0
    %2759 = vmatpush1.msra.mxu0 0.0
    %2760 = vmatprep.subr.mxu0 0.0
    %2761 = vmatpush1.msra.mxu0 0.0
    %2762 = vmatprep.subr.mxu0 0.0
    %2763 = vmatpush1.msra.mxu0 0.0
    %2764 = vmatprep.subr.mxu0 0.0
    %2765 = vmatpush1.msra.mxu0 0.0
    %2766 = vmatprep.subr.mxu0 0.0
    %2767 = vmatpush1.msra.mxu0 0.0
    %2768 = vmatprep.subr.mxu0 0.0
    %2769 = vmatpush1.msra.mxu0 0.0
    %2770 = vmatprep.subr.mxu0 0.0
    %2771 = vmatpush1.msra.mxu0 0.0
    %2772 = vmatprep.subr.mxu0 0.0
    %2773 = vmatpush1.msra.mxu0 0.0
    %2774 = vmatprep.subr.mxu0 0.0
    %2775 = vmatpush1.msra.mxu0 0.0
    %2776 = vmatprep.subr.mxu0 0.0
    %2777 = vmatpush1.msra.mxu0 0.0
    %2778 = vmatprep.subr.mxu0 0.0
    %2779 = vmatpush1.msra.mxu0 0.0
    %2780 = vmatprep.subr.mxu0 0.0
    %2781 = vmatpush1.msra.mxu0 0.0
    %2782 = vmatprep.subr.mxu0 0.0
    %2783 = vmatpush1.msra.mxu0 0.0
    %2784 = vmatprep.subr.mxu0 0.0
    %2785 = vmatpush1.msra.mxu0 0.0
    %2786 = vmatprep.subr.mxu0 0.0
    %2787 = vmatpush1.msra.mxu0 0.0
    %2788 = vmatprep.subr.mxu0 0.0
    %2789 = vmatpush1.msra.mxu0 0.0
    %2790 = vmatprep.subr.mxu0 0.0
    %2791 = vmatpush1.msra.mxu0 0.0
    %2792 = vmatprep.subr.mxu0 0.0
    %2793 = vmatpush1.msra.mxu0 0.0
    %2794 = vmatprep.mubr.f32.mxu0 0.0
    %2795 = vmatmul.mubr.f32.gmra.mrb[0].mxu0 %v2728
    %v2796 = vpop.f32.mrb[0].mxu0
    %v2797 = vadd.f32 0.0, %v2796
    %v2798 = vpop.f32.mrb[0].mxu0
    %2799 = vdwg.mxu0
    %v2801 = vsel %vm1876, %v2568, 0
    %2803 = vmatprep.subr.mxu0 0.0
    %2804 = vmatpush1.msra.mxu0 %v1588
    %2805 = vmatprep.subr.mxu0 0.0
    %2806 = vmatpush1.msra.mxu0 0.0
    %2807 = vmatprep.subr.mxu0 0.0
    %2808 = vmatpush1.msra.mxu0 0.0
    %2809 = vmatprep.subr.mxu0 0.0
    %2810 = vmatpush1.msra.mxu0 0.0
    %2811 = vmatprep.subr.mxu0 0.0
    %2812 = vmatpush1.msra.mxu0 0.0
    %2813 = vmatprep.subr.mxu0 0.0
    %2814 = vmatpush1.msra.mxu0 0.0
    %2815 = vmatprep.subr.mxu0 0.0
    %2816 = vmatpush1.msra.mxu0 0.0
    %2817 = vmatprep.subr.mxu0 0.0
    %2818 = vmatpush1.msra.mxu0 0.0
    %2819 = vmatprep.subr.mxu0 0.0
    %2820 = vmatpush1.msra.mxu0 0.0
    %2821 = vmatprep.subr.mxu0 0.0
    %2822 = vmatpush1.msra.mxu0 0.0
    %2823 = vmatprep.subr.mxu0 0.0
    %2824 = vmatpush1.msra.mxu0 0.0
    %2825 = vmatprep.subr.mxu0 0.0
    %2826 = vmatpush1.msra.mxu0 0.0
    %2827 = vmatprep.subr.mxu0 0.0
    %2828 = vmatpush1.msra.mxu0 0.0
    %2829 = vmatprep.subr.mxu0 0.0
    %2830 = vmatpush1.msra.mxu0 0.0
    %2831 = vmatprep.subr.mxu0 0.0
    %2832 = vmatpush1.msra.mxu0 0.0
    %2833 = vmatprep.subr.mxu0 0.0
    %2834 = vmatpush1.msra.mxu0 0.0
    %2835 = vmatprep.subr.mxu0 0.0
    %2836 = vmatpush1.msra.mxu0 0.0
    %2837 = vmatprep.subr.mxu0 0.0
    %2838 = vmatpush1.msra.mxu0 0.0
    %2839 = vmatprep.subr.mxu0 0.0
    %2840 = vmatpush1.msra.mxu0 0.0
    %2841 = vmatprep.subr.mxu0 0.0
    %2842 = vmatpush1.msra.mxu0 0.0
    %2843 = vmatprep.subr.mxu0 0.0
    %2844 = vmatpush1.msra.mxu0 0.0
    %2845 = vmatprep.subr.mxu0 0.0
    %2846 = vmatpush1.msra.mxu0 0.0
    %2847 = vmatprep.subr.mxu0 0.0
    %2848 = vmatpush1.msra.mxu0 0.0
    %2849 = vmatprep.subr.mxu0 0.0
    %2850 = vmatpush1.msra.mxu0 0.0
    %2851 = vmatprep.subr.mxu0 0.0
    %2852 = vmatpush1.msra.mxu0 0.0
    %2853 = vmatprep.subr.mxu0 0.0
    %2854 = vmatpush1.msra.mxu0 0.0
    %2855 = vmatprep.subr.mxu0 0.0
    %2856 = vmatpush1.msra.mxu0 0.0
    %2857 = vmatprep.subr.mxu0 0.0
    %2858 = vmatpush1.msra.mxu0 0.0
    %2859 = vmatprep.subr.mxu0 0.0
    %2860 = vmatpush1.msra.mxu0 0.0
    %2861 = vmatprep.subr.mxu0 0.0
    %2862 = vmatpush1.msra.mxu0 0.0
    %2863 = vmatprep.subr.mxu0 0.0
    %2864 = vmatpush1.msra.mxu0 0.0
    %2865 = vmatprep.subr.mxu0 0.0
    %2866 = vmatpush1.msra.mxu0 0.0
    %2867 = vmatprep.mubr.f32.mxu0 0.0
    %2868 = vmatmul.mubr.f32.gmra.mrb[0].mxu0 %v2801
    %v2869 = vpop.f32.mrb[0].mxu0
    %v2870 = vadd.f32 0.0, %v2869
    %v2871 = vpop.f32.mrb[0].mxu0
    %2872 = vdwg.mxu0
    %v2874 = vsel %vm1876, %v2569, 0
    %2876 = vmatprep.subr.mxu0 0.0
    %2877 = vmatpush1.msra.mxu0 %v1661
    %2878 = vmatprep.subr.mxu0 0.0
    %2879 = vmatpush1.msra.mxu0 0.0
    %2880 = vmatprep.subr.mxu0 0.0
    %2881 = vmatpush1.msra.mxu0 0.0
    %2882 = vmatprep.subr.mxu0 0.0
    %2883 = vmatpush1.msra.mxu0 0.0
    %2884 = vmatprep.subr.mxu0 0.0
    %2885 = vmatpush1.msra.mxu0 0.0
    %2886 = vmatprep.subr.mxu0 0.0
    %2887 = vmatpush1.msra.mxu0 0.0
    %2888 = vmatprep.subr.mxu0 0.0
    %2889 = vmatpush1.msra.mxu0 0.0
    %2890 = vmatprep.subr.mxu0 0.0
    %2891 = vmatpush1.msra.mxu0 0.0
    %2892 = vmatprep.subr.mxu0 0.0
    %2893 = vmatpush1.msra.mxu0 0.0
    %2894 = vmatprep.subr.mxu0 0.0
    %2895 = vmatpush1.msra.mxu0 0.0
    %2896 = vmatprep.subr.mxu0 0.0
    %2897 = vmatpush1.msra.mxu0 0.0
    %2898 = vmatprep.subr.mxu0 0.0
    %2899 = vmatpush1.msra.mxu0 0.0
    %2900 = vmatprep.subr.mxu0 0.0
    %2901 = vmatpush1.msra.mxu0 0.0
    %2902 = vmatprep.subr.mxu0 0.0
    %2903 = vmatpush1.msra.mxu0 0.0
    %2904 = vmatprep.subr.mxu0 0.0
    %2905 = vmatpush1.msra.mxu0 0.0
    %2906 = vmatprep.subr.mxu0 0.0
    %2907 = vmatpush1.msra.mxu0 0.0
    %2908 = vmatprep.subr.mxu0 0.0
    %2909 = vmatpush1.msra.mxu0 0.0
    %2910 = vmatprep.subr.mxu0 0.0
    %2911 = vmatpush1.msra.mxu0 0.0
    %2912 = vmatprep.subr.mxu0 0.0
    %2913 = vmatpush1.msra.mxu0 0.0
    %2914 = vmatprep.subr.mxu0 0.0
    %2915 = vmatpush1.msra.mxu0 0.0
    %2916 = vmatprep.subr.mxu0 0.0
    %2917 = vmatpush1.msra.mxu0 0.0
    %2918 = vmatprep.subr.mxu0 0.0
    %2919 = vmatpush1.msra.mxu0 0.0
    %2920 = vmatprep.subr.mxu0 0.0
    %2921 = vmatpush1.msra.mxu0 0.0
    %2922 = vmatprep.subr.mxu0 0.0
    %2923 = vmatpush1.msra.mxu0 0.0
    %2924 = vmatprep.subr.mxu0 0.0
    %2925 = vmatpush1.msra.mxu0 0.0
    %2926 = vmatprep.subr.mxu0 0.0
    %2927 = vmatpush1.msra.mxu0 0.0
    %2928 = vmatprep.subr.mxu0 0.0
    %2929 = vmatpush1.msra.mxu0 0.0
    %2930 = vmatprep.subr.mxu0 0.0
    %2931 = vmatpush1.msra.mxu0 0.0
    %2932 = vmatprep.subr.mxu0 0.0
    %2933 = vmatpush1.msra.mxu0 0.0
    %2934 = vmatprep.subr.mxu0 0.0
    %2935 = vmatpush1.msra.mxu0 0.0
    %2936 = vmatprep.subr.mxu0 0.0
    %2937 = vmatpush1.msra.mxu0 0.0
    %2938 = vmatprep.subr.mxu0 0.0
    %2939 = vmatpush1.msra.mxu0 0.0
    %2940 = vmatprep.mubr.f32.mxu0 0.0
    %2941 = vmatmul.mubr.f32.gmra.mrb[0].mxu0 %v2874
    %v2942 = vpop.f32.mrb[0].mxu0
    %v2943 = vadd.f32 0.0, %v2942
    %v2944 = vpop.f32.mrb[0].mxu0
    %2945 = vdwg.mxu0
    %v2947 = vsel %vm1876, %v2570, 0
    %2949 = vmatprep.subr.mxu0 0.0
    %2950 = vmatpush1.msra.mxu0 %v1731
    %2951 = vmatprep.subr.mxu0 0.0
    %2952 = vmatpush1.msra.mxu0 0.0
    %2953 = vmatprep.subr.mxu0 0.0
    %2954 = vmatpush1.msra.mxu0 0.0
    %2955 = vmatprep.subr.mxu0 0.0
    %2956 = vmatpush1.msra.mxu0 0.0
    %2957 = vmatprep.subr.mxu0 0.0
    %2958 = vmatpush1.msra.mxu0 0.0
    %2959 = vmatprep.subr.mxu0 0.0
    %2960 = vmatpush1.msra.mxu0 0.0
    %2961 = vmatprep.subr.mxu0 0.0
    %2962 = vmatpush1.msra.mxu0 0.0
    %2963 = vmatprep.subr.mxu0 0.0
    %2964 = vmatpush1.msra.mxu0 0.0
    %2965 = vmatprep.subr.mxu0 0.0
    %2966 = vmatpush1.msra.mxu0 0.0
    %2967 = vmatprep.subr.mxu0 0.0
    %2968 = vmatpush1.msra.mxu0 0.0
    %2969 = vmatprep.subr.mxu0 0.0
    %2970 = vmatpush1.msra.mxu0 0.0
    %2971 = vmatprep.subr.mxu0 0.0
    %2972 = vmatpush1.msra.mxu0 0.0
    %2973 = vmatprep.subr.mxu0 0.0
    %2974 = vmatpush1.msra.mxu0 0.0
    %2975 = vmatprep.subr.mxu0 0.0
    %2976 = vmatpush1.msra.mxu0 0.0
    %2977 = vmatprep.subr.mxu0 0.0
    %2978 = vmatpush1.msra.mxu0 0.0
    %2979 = vmatprep.subr.mxu0 0.0
    %2980 = vmatpush1.msra.mxu0 0.0
    %2981 = vmatprep.subr.mxu0 0.0
    %2982 = vmatpush1.msra.mxu0 0.0
    %2983 = vmatprep.subr.mxu0 0.0
    %2984 = vmatpush1.msra.mxu0 0.0
    %2985 = vmatprep.subr.mxu0 0.0
    %2986 = vmatpush1.msra.mxu0 0.0
    %2987 = vmatprep.subr.mxu0 0.0
    %2988 = vmatpush1.msra.mxu0 0.0
    %2989 = vmatprep.subr.mxu0 0.0
    %2990 = vmatpush1.msra.mxu0 0.0
    %2991 = vmatprep.subr.mxu0 0.0
    %2992 = vmatpush1.msra.mxu0 0.0
    %2993 = vmatprep.subr.mxu0 0.0
    %2994 = vmatpush1.msra.mxu0 0.0
    %2995 = vmatprep.subr.mxu0 0.0
    %2996 = vmatpush1.msra.mxu0 0.0
    %2997 = vmatprep.subr.mxu0 0.0
    %2998 = vmatpush1.msra.mxu0 0.0
    %2999 = vmatprep.subr.mxu0 0.0
    %3000 = vmatpush1.msra.mxu0 0.0
    %3001 = vmatprep.subr.mxu0 0.0
    %3002 = vmatpush1.msra.mxu0 0.0
    %3003 = vmatprep.subr.mxu0 0.0
    %3004 = vmatpush1.msra.mxu0 0.0
    %3005 = vmatprep.subr.mxu0 0.0
    %3006 = vmatpush1.msra.mxu0 0.0
    %3007 = vmatprep.subr.mxu0 0.0
    %3008 = vmatpush1.msra.mxu0 0.0
    %3009 = vmatprep.subr.mxu0 0.0
    %3010 = vmatpush1.msra.mxu0 0.0
    %3011 = vmatprep.subr.mxu0 0.0
    %3012 = vmatpush1.msra.mxu0 0.0
    %3013 = vmatprep.mubr.f32.mxu0 0.0
    %3014 = vmatmul.mubr.f32.gmra.mrb[0].mxu0 %v2947
    %v3015 = vpop.f32.mrb[0].mxu0
    %v3016 = vadd.f32 0.0, %v3015
    %v3017 = vpop.f32.mrb[0].mxu0
    %3018 = vdwg.mxu0
    %v3020 = vsel %vm1876, %v2571, 0
    %3022 = vmatprep.subr.mxu0 0.0
    %3023 = vmatpush1.msra.mxu0 %v1801
    %3024 = vmatprep.subr.mxu0 0.0
    %3025 = vmatpush1.msra.mxu0 0.0
    %3026 = vmatprep.subr.mxu0 0.0
    %3027 = vmatpush1.msra.mxu0 0.0
    %3028 = vmatprep.subr.mxu0 0.0
    %3029 = vmatpush1.msra.mxu0 0.0
    %3030 = vmatprep.subr.mxu0 0.0
    %3031 = vmatpush1.msra.mxu0 0.0
    %3032 = vmatprep.subr.mxu0 0.0
    %3033 = vmatpush1.msra.mxu0 0.0
    %3034 = vmatprep.subr.mxu0 0.0
    %3035 = vmatpush1.msra.mxu0 0.0
    %3036 = vmatprep.subr.mxu0 0.0
    %3037 = vmatpush1.msra.mxu0 0.0
    %3038 = vmatprep.subr.mxu0 0.0
    %3039 = vmatpush1.msra.mxu0 0.0
    %3040 = vmatprep.subr.mxu0 0.0
    %3041 = vmatpush1.msra.mxu0 0.0
    %3042 = vmatprep.subr.mxu0 0.0
    %3043 = vmatpush1.msra.mxu0 0.0
    %3044 = vmatprep.subr.mxu0 0.0
    %3045 = vmatpush1.msra.mxu0 0.0
    %3046 = vmatprep.subr.mxu0 0.0
    %3047 = vmatpush1.msra.mxu0 0.0
    %3048 = vmatprep.subr.mxu0 0.0
    %3049 = vmatpush1.msra.mxu0 0.0
    %3050 = vmatprep.subr.mxu0 0.0
    %3051 = vmatpush1.msra.mxu0 0.0
    %3052 = vmatprep.subr.mxu0 0.0
    %3053 = vmatpush1.msra.mxu0 0.0
    %3054 = vmatprep.subr.mxu0 0.0
    %3055 = vmatpush1.msra.mxu0 0.0
    %3056 = vmatprep.subr.mxu0 0.0
    %3057 = vmatpush1.msra.mxu0 0.0
    %3058 = vmatprep.subr.mxu0 0.0
    %3059 = vmatpush1.msra.mxu0 0.0
    %3060 = vmatprep.subr.mxu0 0.0
    %3061 = vmatpush1.msra.mxu0 0.0
    %3062 = vmatprep.subr.mxu0 0.0
    %3063 = vmatpush1.msra.mxu0 0.0
    %3064 = vmatprep.subr.mxu0 0.0
    %3065 = vmatpush1.msra.mxu0 0.0
    %3066 = vmatprep.subr.mxu0 0.0
    %3067 = vmatpush1.msra.mxu0 0.0
    %3068 = vmatprep.subr.mxu0 0.0
    %3069 = vmatpush1.msra.mxu0 0.0
    %3070 = vmatprep.subr.mxu0 0.0
    %3071 = vmatpush1.msra.mxu0 0.0
    %3072 = vmatprep.subr.mxu0 0.0
    %3073 = vmatpush1.msra.mxu0 0.0
    %3074 = vmatprep.subr.mxu0 0.0
    %3075 = vmatpush1.msra.mxu0 0.0
    %3076 = vmatprep.subr.mxu0 0.0
    %3077 = vmatpush1.msra.mxu0 0.0
    %3078 = vmatprep.subr.mxu0 0.0
    %3079 = vmatpush1.msra.mxu0 0.0
    %3080 = vmatprep.subr.mxu0 0.0
    %3081 = vmatpush1.msra.mxu0 0.0
    %3082 = vmatprep.subr.mxu0 0.0
    %3083 = vmatpush1.msra.mxu0 0.0
    %3084 = vmatprep.subr.mxu0 0.0
    %3085 = vmatpush1.msra.mxu0 0.0
    %3086 = vmatprep.mubr.f32.mxu0 0.0
    %3087 = vmatmul.mubr.f32.gmra.mrb[0].mxu0 %v3020
    %v3088 = vpop.f32.mrb[0].mxu0
    %v3089 = vadd.f32 0.0, %v3088
    %v3090 = vpop.f32.mrb[0].mxu0
    %3091 = vdwg.mxu0
    %v3093 = vsel %vm1876, %v2572, 0
    %3095 = vmatprep.subr.mxu0 0.0
    %3096 = vmatpush1.msra.mxu0 %v1871
    %3097 = vmatprep.subr.mxu0 0.0
    %3098 = vmatpush1.msra.mxu0 0.0
    %3099 = vmatprep.subr.mxu0 0.0
    %3100 = vmatpush1.msra.mxu0 0.0
    %3101 = vmatprep.subr.mxu0 0.0
    %3102 = vmatpush1.msra.mxu0 0.0
    %3103 = vmatprep.subr.mxu0 0.0
    %3104 = vmatpush1.msra.mxu0 0.0
    %3105 = vmatprep.subr.mxu0 0.0
    %3106 = vmatpush1.msra.mxu0 0.0
    %3107 = vmatprep.subr.mxu0 0.0
    %3108 = vmatpush1.msra.mxu0 0.0
    %3109 = vmatprep.subr.mxu0 0.0
    %3110 = vmatpush1.msra.mxu0 0.0
    %3111 = vmatprep.subr.mxu0 0.0
    %3112 = vmatpush1.msra.mxu0 0.0
    %3113 = vmatprep.subr.mxu0 0.0
    %3114 = vmatpush1.msra.mxu0 0.0
    %3115 = vmatprep.subr.mxu0 0.0
    %3116 = vmatpush1.msra.mxu0 0.0
    %3117 = vmatprep.subr.mxu0 0.0
    %3118 = vmatpush1.msra.mxu0 0.0
    %3119 = vmatprep.subr.mxu0 0.0
    %3120 = vmatpush1.msra.mxu0 0.0
    %3121 = vmatprep.subr.mxu0 0.0
    %3122 = vmatpush1.msra.mxu0 0.0
    %3123 = vmatprep.subr.mxu0 0.0
    %3124 = vmatpush1.msra.mxu0 0.0
    %3125 = vmatprep.subr.mxu0 0.0
    %3126 = vmatpush1.msra.mxu0 0.0
    %3127 = vmatprep.subr.mxu0 0.0
    %3128 = vmatpush1.msra.mxu0 0.0
    %3129 = vmatprep.subr.mxu0 0.0
    %3130 = vmatpush1.msra.mxu0 0.0
    %3131 = vmatprep.subr.mxu0 0.0
    %3132 = vmatpush1.msra.mxu0 0.0
    %3133 = vmatprep.subr.mxu0 0.0
    %3134 = vmatpush1.msra.mxu0 0.0
    %3135 = vmatprep.subr.mxu0 0.0
    %3136 = vmatpush1.msra.mxu0 0.0
    %3137 = vmatprep.subr.mxu0 0.0
    %3138 = vmatpush1.msra.mxu0 0.0
    %3139 = vmatprep.subr.mxu0 0.0
    %3140 = vmatpush1.msra.mxu0 0.0
    %3141 = vmatprep.subr.mxu0 0.0
    %3142 = vmatpush1.msra.mxu0 0.0
    %3143 = vmatprep.subr.mxu0 0.0
    %3144 = vmatpush1.msra.mxu0 0.0
    %3145 = vmatprep.subr.mxu0 0.0
    %3146 = vmatpush1.msra.mxu0 0.0
    %3147 = vmatprep.subr.mxu0 0.0
    %3148 = vmatpush1.msra.mxu0 0.0
    %3149 = vmatprep.subr.mxu0 0.0
    %3150 = vmatpush1.msra.mxu0 0.0
    %3151 = vmatprep.subr.mxu0 0.0
    %3152 = vmatpush1.msra.mxu0 0.0
    %3153 = vmatprep.subr.mxu0 0.0
    %3154 = vmatpush1.msra.mxu0 0.0
    %3155 = vmatprep.subr.mxu0 0.0
    %3156 = vmatpush1.msra.mxu0 0.0
    %3157 = vmatprep.subr.mxu0 0.0
    %3158 = vmatpush1.msra.mxu0 0.0
    %3159 = vmatprep.mubr.f32.mxu0 0.0
    %3160 = vmatmul.mubr.f32.gmra.mrb[0].mxu0 %v3093
    %v3161 = vpop.f32.mrb[0].mxu0
    %v3162 = vadd.f32 0.0, %v3161
    %v3163 = vpop.f32.mrb[0].mxu0
    %3164 = vdwg.mxu0
    %v3165 = vld [vmem:[%s5] sm:$0xff]
    %v3166 = vld [vmem:[%s5 + $0x8] sm:$0xff]
    %v3167 = vld [vmem:[%s5 + $0x10] sm:$0xff]
    %v3168 = vld [vmem:[%s5 + $0x18] sm:$0xff]
    %v3170 = vsel %vm1876, %v2651, 0
    %3172 = vmatprep.subr.mxu0 0.0
    %3173 = vmatpush1.msra.mxu0 %v3165
    %3174 = vmatprep.subr.mxu0 0.0
    %3175 = vmatpush1.msra.mxu0 0.0
    %3176 = vmatprep.subr.mxu0 0.0
    %3177 = vmatpush1.msra.mxu0 0.0
    %3178 = vmatprep.subr.mxu0 0.0
    %3179 = vmatpush1.msra.mxu0 0.0
    %3180 = vmatprep.subr.mxu0 0.0
    %3181 = vmatpush1.msra.mxu0 0.0
    %3182 = vmatprep.subr.mxu0 0.0
    %3183 = vmatpush1.msra.mxu0 0.0
    %3184 = vmatprep.subr.mxu0 0.0
    %3185 = vmatpush1.msra.mxu0 0.0
    %3186 = vmatprep.subr.mxu0 0.0
    %3187 = vmatpush1.msra.mxu0 0.0
    %3188 = vmatprep.subr.mxu0 0.0
    %3189 = vmatpush1.msra.mxu0 0.0
    %3190 = vmatprep.subr.mxu0 0.0
    %3191 = vmatpush1.msra.mxu0 0.0
    %3192 = vmatprep.subr.mxu0 0.0
    %3193 = vmatpush1.msra.mxu0 0.0
    %3194 = vmatprep.subr.mxu0 0.0
    %3195 = vmatpush1.msra.mxu0 0.0
    %3196 = vmatprep.subr.mxu0 0.0
    %3197 = vmatpush1.msra.mxu0 0.0
    %3198 = vmatprep.subr.mxu0 0.0
    %3199 = vmatpush1.msra.mxu0 0.0
    %3200 = vmatprep.subr.mxu0 0.0
    %3201 = vmatpush1.msra.mxu0 0.0
    %3202 = vmatprep.subr.mxu0 0.0
    %3203 = vmatpush1.msra.mxu0 0.0
    %3204 = vmatprep.subr.mxu0 0.0
    %3205 = vmatpush1.msra.mxu0 0.0
    %3206 = vmatprep.subr.mxu0 0.0
    %3207 = vmatpush1.msra.mxu0 0.0
    %3208 = vmatprep.subr.mxu0 0.0
    %3209 = vmatpush1.msra.mxu0 0.0
    %3210 = vmatprep.subr.mxu0 0.0
    %3211 = vmatpush1.msra.mxu0 0.0
    %3212 = vmatprep.subr.mxu0 0.0
    %3213 = vmatpush1.msra.mxu0 0.0
    %3214 = vmatprep.subr.mxu0 0.0
    %3215 = vmatpush1.msra.mxu0 0.0
    %3216 = vmatprep.subr.mxu0 0.0
    %3217 = vmatpush1.msra.mxu0 0.0
    %3218 = vmatprep.subr.mxu0 0.0
    %3219 = vmatpush1.msra.mxu0 0.0
    %3220 = vmatprep.subr.mxu0 0.0
    %3221 = vmatpush1.msra.mxu0 0.0
    %3222 = vmatprep.subr.mxu0 0.0
    %3223 = vmatpush1.msra.mxu0 0.0
    %3224 = vmatprep.subr.mxu0 0.0
    %3225 = vmatpush1.msra.mxu0 0.0
    %3226 = vmatprep.subr.mxu0 0.0
    %3227 = vmatpush1.msra.mxu0 0.0
    %3228 = vmatprep.subr.mxu0 0.0
    %3229 = vmatpush1.msra.mxu0 0.0
    %3230 = vmatprep.subr.mxu0 0.0
    %3231 = vmatpush1.msra.mxu0 0.0
    %3232 = vmatprep.subr.mxu0 0.0
    %3233 = vmatpush1.msra.mxu0 0.0
    %3234 = vmatprep.subr.mxu0 0.0
    %3235 = vmatpush1.msra.mxu0 0.0
    %3236 = vmatprep.mubr.f32.mxu0 0.0
    %3237 = vmatmul.mubr.f32.gmra.mrb[0].mxu0 %v3170
    %v3238 = vpop.f32.mrb[0].mxu0
    %v3239 = vadd.f32 0.0, %v3238
    %v3240 = vpop.f32.mrb[0].mxu0
    %3241 = vdwg.mxu0
    %v3243 = vsel %vm1876, %v2724, 0
    %3245 = vmatprep.subr.mxu0 0.0
    %3246 = vmatpush1.msra.mxu0 %v3166
    %3247 = vmatprep.subr.mxu0 0.0
    %3248 = vmatpush1.msra.mxu0 0.0
    %3249 = vmatprep.subr.mxu0 0.0
    %3250 = vmatpush1.msra.mxu0 0.0
    %3251 = vmatprep.subr.mxu0 0.0
    %3252 = vmatpush1.msra.mxu0 0.0
    %3253 = vmatprep.subr.mxu0 0.0
    %3254 = vmatpush1.msra.mxu0 0.0
    %3255 = vmatprep.subr.mxu0 0.0
    %3256 = vmatpush1.msra.mxu0 0.0
    %3257 = vmatprep.subr.mxu0 0.0
    %3258 = vmatpush1.msra.mxu0 0.0
    %3259 = vmatprep.subr.mxu0 0.0
    %3260 = vmatpush1.msra.mxu0 0.0
    %3261 = vmatprep.subr.mxu0 0.0
    %3262 = vmatpush1.msra.mxu0 0.0
    %3263 = vmatprep.subr.mxu0 0.0
    %3264 = vmatpush1.msra.mxu0 0.0
    %3265 = vmatprep.subr.mxu0 0.0
    %3266 = vmatpush1.msra.mxu0 0.0
    %3267 = vmatprep.subr.mxu0 0.0
    %3268 = vmatpush1.msra.mxu0 0.0
    %3269 = vmatprep.subr.mxu0 0.0
    %3270 = vmatpush1.msra.mxu0 0.0
    %3271 = vmatprep.subr.mxu0 0.0
    %3272 = vmatpush1.msra.mxu0 0.0
    %3273 = vmatprep.subr.mxu0 0.0
    %3274 = vmatpush1.msra.mxu0 0.0
    %3275 = vmatprep.subr.mxu0 0.0
    %3276 = vmatpush1.msra.mxu0 0.0
    %3277 = vmatprep.subr.mxu0 0.0
    %3278 = vmatpush1.msra.mxu0 0.0
    %3279 = vmatprep.subr.mxu0 0.0
    %3280 = vmatpush1.msra.mxu0 0.0
    %3281 = vmatprep.subr.mxu0 0.0
    %3282 = vmatpush1.msra.mxu0 0.0
    %3283 = vmatprep.subr.mxu0 0.0
    %3284 = vmatpush1.msra.mxu0 0.0
    %3285 = vmatprep.subr.mxu0 0.0
    %3286 = vmatpush1.msra.mxu0 0.0
    %3287 = vmatprep.subr.mxu0 0.0
    %3288 = vmatpush1.msra.mxu0 0.0
    %3289 = vmatprep.subr.mxu0 0.0
    %3290 = vmatpush1.msra.mxu0 0.0
    %3291 = vmatprep.subr.mxu0 0.0
    %3292 = vmatpush1.msra.mxu0 0.0
    %3293 = vmatprep.subr.mxu0 0.0
    %3294 = vmatpush1.msra.mxu0 0.0
    %3295 = vmatprep.subr.mxu0 0.0
    %3296 = vmatpush1.msra.mxu0 0.0
    %3297 = vmatprep.subr.mxu0 0.0
    %3298 = vmatpush1.msra.mxu0 0.0
    %3299 = vmatprep.subr.mxu0 0.0
    %3300 = vmatpush1.msra.mxu0 0.0
    %3301 = vmatprep.subr.mxu0 0.0
    %3302 = vmatpush1.msra.mxu0 0.0
    %3303 = vmatprep.subr.mxu0 0.0
    %3304 = vmatpush1.msra.mxu0 0.0
    %3305 = vmatprep.subr.mxu0 0.0
    %3306 = vmatpush1.msra.mxu0 0.0
    %3307 = vmatprep.subr.mxu0 0.0
    %3308 = vmatpush1.msra.mxu0 0.0
    %3309 = vmatprep.mubr.f32.mxu0 0.0
    %3310 = vmatmul.mubr.f32.gmra.mrb[0].mxu0 %v3243
    %v3311 = vpop.f32.mrb[0].mxu0
    %v3312 = vadd.f32 0.0, %v3311
    %v3313 = vpop.f32.mrb[0].mxu0
    %3314 = vdwg.mxu0
    %v3316 = vsel %vm1876, %v2797, 0
    %3318 = vmatprep.subr.mxu0 0.0
    %3319 = vmatpush1.msra.mxu0 %v3167
    %3320 = vmatprep.subr.mxu0 0.0
    %3321 = vmatpush1.msra.mxu0 0.0
    %3322 = vmatprep.subr.mxu0 0.0
    %3323 = vmatpush1.msra.mxu0 0.0
    %3324 = vmatprep.subr.mxu0 0.0
    %3325 = vmatpush1.msra.mxu0 0.0
    %3326 = vmatprep.subr.mxu0 0.0
    %3327 = vmatpush1.msra.mxu0 0.0
    %3328 = vmatprep.subr.mxu0 0.0
    %3329 = vmatpush1.msra.mxu0 0.0
    %3330 = vmatprep.subr.mxu0 0.0
    %3331 = vmatpush1.msra.mxu0 0.0
    %3332 = vmatprep.subr.mxu0 0.0
    %3333 = vmatpush1.msra.mxu0 0.0
    %3334 = vmatprep.subr.mxu0 0.0
    %3335 = vmatpush1.msra.mxu0 0.0
    %3336 = vmatprep.subr.mxu0 0.0
    %3337 = vmatpush1.msra.mxu0 0.0
    %3338 = vmatprep.subr.mxu0 0.0
    %3339 = vmatpush1.msra.mxu0 0.0
    %3340 = vmatprep.subr.mxu0 0.0
    %3341 = vmatpush1.msra.mxu0 0.0
    %3342 = vmatprep.subr.mxu0 0.0
    %3343 = vmatpush1.msra.mxu0 0.0
    %3344 = vmatprep.subr.mxu0 0.0
    %3345 = vmatpush1.msra.mxu0 0.0
    %3346 = vmatprep.subr.mxu0 0.0
    %3347 = vmatpush1.msra.mxu0 0.0
    %3348 = vmatprep.subr.mxu0 0.0
    %3349 = vmatpush1.msra.mxu0 0.0
    %3350 = vmatprep.subr.mxu0 0.0
    %3351 = vmatpush1.msra.mxu0 0.0
    %3352 = vmatprep.subr.mxu0 0.0
    %3353 = vmatpush1.msra.mxu0 0.0
    %3354 = vmatprep.subr.mxu0 0.0
    %3355 = vmatpush1.msra.mxu0 0.0
    %3356 = vmatprep.subr.mxu0 0.0
    %3357 = vmatpush1.msra.mxu0 0.0
    %3358 = vmatprep.subr.mxu0 0.0
    %3359 = vmatpush1.msra.mxu0 0.0
    %3360 = vmatprep.subr.mxu0 0.0
    %3361 = vmatpush1.msra.mxu0 0.0
    %3362 = vmatprep.subr.mxu0 0.0
    %3363 = vmatpush1.msra.mxu0 0.0
    %3364 = vmatprep.subr.mxu0 0.0
    %3365 = vmatpush1.msra.mxu0 0.0
    %3366 = vmatprep.subr.mxu0 0.0
    %3367 = vmatpush1.msra.mxu0 0.0
    %3368 = vmatprep.subr.mxu0 0.0
    %3369 = vmatpush1.msra.mxu0 0.0
    %3370 = vmatprep.subr.mxu0 0.0
    %3371 = vmatpush1.msra.mxu0 0.0
    %3372 = vmatprep.subr.mxu0 0.0
    %3373 = vmatpush1.msra.mxu0 0.0
    %3374 = vmatprep.subr.mxu0 0.0
    %3375 = vmatpush1.msra.mxu0 0.0
    %3376 = vmatprep.subr.mxu0 0.0
    %3377 = vmatpush1.msra.mxu0 0.0
    %3378 = vmatprep.subr.mxu0 0.0
    %3379 = vmatpush1.msra.mxu0 0.0
    %3380 = vmatprep.subr.mxu0 0.0
    %3381 = vmatpush1.msra.mxu0 0.0
    %3382 = vmatprep.mubr.f32.mxu0 0.0
    %3383 = vmatmul.mubr.f32.gmra.mrb[0].mxu0 %v3316
    %v3384 = vpop.f32.mrb[0].mxu0
    %v3385 = vadd.f32 0.0, %v3384
    %v3386 = vpop.f32.mrb[0].mxu0
    %3387 = vdwg.mxu0
    %v3389 = vsel %vm1876, %v2870, 0
    %3391 = vmatprep.subr.mxu0 0.0
    %3392 = vmatpush1.msra.mxu0 %v3168
    %3393 = vmatprep.subr.mxu0 0.0
    %3394 = vmatpush1.msra.mxu0 0.0
    %3395 = vmatprep.subr.mxu0 0.0
    %3396 = vmatpush1.msra.mxu0 0.0
    %3397 = vmatprep.subr.mxu0 0.0
    %3398 = vmatpush1.msra.mxu0 0.0
    %3399 = vmatprep.subr.mxu0 0.0
    %3400 = vmatpush1.msra.mxu0 0.0
    %3401 = vmatprep.subr.mxu0 0.0
    %3402 = vmatpush1.msra.mxu0 0.0
    %3403 = vmatprep.subr.mxu0 0.0
    %3404 = vmatpush1.msra.mxu0 0.0
    %3405 = vmatprep.subr.mxu0 0.0
    %3406 = vmatpush1.msra.mxu0 0.0
    %3407 = vmatprep.subr.mxu0 0.0
    %3408 = vmatpush1.msra.mxu0 0.0
    %3409 = vmatprep.subr.mxu0 0.0
    %3410 = vmatpush1.msra.mxu0 0.0
    %3411 = vmatprep.subr.mxu0 0.0
    %3412 = vmatpush1.msra.mxu0 0.0
    %3413 = vmatprep.subr.mxu0 0.0
    %3414 = vmatpush1.msra.mxu0 0.0
    %3415 = vmatprep.subr.mxu0 0.0
    %3416 = vmatpush1.msra.mxu0 0.0
    %3417 = vmatprep.subr.mxu0 0.0
    %3418 = vmatpush1.msra.mxu0 0.0
    %3419 = vmatprep.subr.mxu0 0.0
    %3420 = vmatpush1.msra.mxu0 0.0
    %3421 = vmatprep.subr.mxu0 0.0
    %3422 = vmatpush1.msra.mxu0 0.0
    %3423 = vmatprep.subr.mxu0 0.0
    %3424 = vmatpush1.msra.mxu0 0.0
    %3425 = vmatprep.subr.mxu0 0.0
    %3426 = vmatpush1.msra.mxu0 0.0
    %3427 = vmatprep.subr.mxu0 0.0
    %3428 = vmatpush1.msra.mxu0 0.0
    %3429 = vmatprep.subr.mxu0 0.0
    %3430 = vmatpush1.msra.mxu0 0.0
    %3431 = vmatprep.subr.mxu0 0.0
    %3432 = vmatpush1.msra.mxu0 0.0
    %3433 = vmatprep.subr.mxu0 0.0
    %3434 = vmatpush1.msra.mxu0 0.0
    %3435 = vmatprep.subr.mxu0 0.0
    %3436 = vmatpush1.msra.mxu0 0.0
    %3437 = vmatprep.subr.mxu0 0.0
    %3438 = vmatpush1.msra.mxu0 0.0
    %3439 = vmatprep.subr.mxu0 0.0
    %3440 = vmatpush1.msra.mxu0 0.0
    %3441 = vmatprep.subr.mxu0 0.0
    %3442 = vmatpush1.msra.mxu0 0.0
    %3443 = vmatprep.subr.mxu0 0.0
    %3444 = vmatpush1.msra.mxu0 0.0
    %3445 = vmatprep.subr.mxu0 0.0
    %3446 = vmatpush1.msra.mxu0 0.0
    %3447 = vmatprep.subr.mxu0 0.0
    %3448 = vmatpush1.msra.mxu0 0.0
    %3449 = vmatprep.subr.mxu0 0.0
    %3450 = vmatpush1.msra.mxu0 0.0
    %3451 = vmatprep.subr.mxu0 0.0
    %3452 = vmatpush1.msra.mxu0 0.0
    %3453 = vmatprep.subr.mxu0 0.0
    %3454 = vmatpush1.msra.mxu0 0.0
    %3455 = vmatprep.mubr.f32.mxu0 0.0
    %3456 = vmatmul.mubr.f32.gmra.mrb[0].mxu0 %v3389
    %v3457 = vpop.f32.mrb[0].mxu0
    %v3458 = vadd.f32 0.0, %v3457
    %v3459 = vpop.f32.mrb[0].mxu0
    %3460 = vdwg.mxu0
    %v3462 = vsel %vm1876, %v2943, 0
    %3464 = vmatprep.subr.mxu0 0.0
    %3465 = vmatpush1.msra.mxu0 %v3165
    %3466 = vmatprep.subr.mxu0 0.0
    %3467 = vmatpush1.msra.mxu0 0.0
    %3468 = vmatprep.subr.mxu0 0.0
    %3469 = vmatpush1.msra.mxu0 0.0
    %3470 = vmatprep.subr.mxu0 0.0
    %3471 = vmatpush1.msra.mxu0 0.0
    %3472 = vmatprep.subr.mxu0 0.0
    %3473 = vmatpush1.msra.mxu0 0.0
    %3474 = vmatprep.subr.mxu0 0.0
    %3475 = vmatpush1.msra.mxu0 0.0
    %3476 = vmatprep.subr.mxu0 0.0
    %3477 = vmatpush1.msra.mxu0 0.0
    %3478 = vmatprep.subr.mxu0 0.0
    %3479 = vmatpush1.msra.mxu0 0.0
    %3480 = vmatprep.subr.mxu0 0.0
    %3481 = vmatpush1.msra.mxu0 0.0
    %3482 = vmatprep.subr.mxu0 0.0
    %3483 = vmatpush1.msra.mxu0 0.0
    %3484 = vmatprep.subr.mxu0 0.0
    %3485 = vmatpush1.msra.mxu0 0.0
    %3486 = vmatprep.subr.mxu0 0.0
    %3487 = vmatpush1.msra.mxu0 0.0
    %3488 = vmatprep.subr.mxu0 0.0
    %3489 = vmatpush1.msra.mxu0 0.0
    %3490 = vmatprep.subr.mxu0 0.0
    %3491 = vmatpush1.msra.mxu0 0.0
    %3492 = vmatprep.subr.mxu0 0.0
    %3493 = vmatpush1.msra.mxu0 0.0
    %3494 = vmatprep.subr.mxu0 0.0
    %3495 = vmatpush1.msra.mxu0 0.0
    %3496 = vmatprep.subr.mxu0 0.0
    %3497 = vmatpush1.msra.mxu0 0.0
    %3498 = vmatprep.subr.mxu0 0.0
    %3499 = vmatpush1.msra.mxu0 0.0
    %3500 = vmatprep.subr.mxu0 0.0
    %3501 = vmatpush1.msra.mxu0 0.0
    %3502 = vmatprep.subr.mxu0 0.0
    %3503 = vmatpush1.msra.mxu0 0.0
    %3504 = vmatprep.subr.mxu0 0.0
    %3505 = vmatpush1.msra.mxu0 0.0
    %3506 = vmatprep.subr.mxu0 0.0
    %3507 = vmatpush1.msra.mxu0 0.0
    %3508 = vmatprep.subr.mxu0 0.0
    %3509 = vmatpush1.msra.mxu0 0.0
    %3510 = vmatprep.subr.mxu0 0.0
    %3511 = vmatpush1.msra.mxu0 0.0
    %3512 = vmatprep.subr.mxu0 0.0
    %3513 = vmatpush1.msra.mxu0 0.0
    %3514 = vmatprep.subr.mxu0 0.0
    %3515 = vmatpush1.msra.mxu0 0.0
    %3516 = vmatprep.subr.mxu0 0.0
    %3517 = vmatpush1.msra.mxu0 0.0
    %3518 = vmatprep.subr.mxu0 0.0
    %3519 = vmatpush1.msra.mxu0 0.0
    %3520 = vmatprep.subr.mxu0 0.0
    %3521 = vmatpush1.msra.mxu0 0.0
    %3522 = vmatprep.subr.mxu0 0.0
    %3523 = vmatpush1.msra.mxu0 0.0
    %3524 = vmatprep.subr.mxu0 0.0
    %3525 = vmatpush1.msra.mxu0 0.0
    %3526 = vmatprep.subr.mxu0 0.0
    %3527 = vmatpush1.msra.mxu0 0.0
    %3528 = vmatprep.mubr.f32.mxu0 0.0
    %3529 = vmatmul.mubr.f32.gmra.mrb[0].mxu0 %v3462
    %v3530 = vpop.f32.mrb[0].mxu0
    %v3531 = vadd.f32 0.0, %v3530
    %v3532 = vpop.f32.mrb[0].mxu0
    %3533 = vdwg.mxu0
    %v3535 = vsel %vm1876, %v3016, 0
    %3537 = vmatprep.subr.mxu0 0.0
    %3538 = vmatpush1.msra.mxu0 %v3166
    %3539 = vmatprep.subr.mxu0 0.0
    %3540 = vmatpush1.msra.mxu0 0.0
    %3541 = vmatprep.subr.mxu0 0.0
    %3542 = vmatpush1.msra.mxu0 0.0
    %3543 = vmatprep.subr.mxu0 0.0
    %3544 = vmatpush1.msra.mxu0 0.0
    %3545 = vmatprep.subr.mxu0 0.0
    %3546 = vmatpush1.msra.mxu0 0.0
    %3547 = vmatprep.subr.mxu0 0.0
    %3548 = vmatpush1.msra.mxu0 0.0
    %3549 = vmatprep.subr.mxu0 0.0
    %3550 = vmatpush1.msra.mxu0 0.0
    %3551 = vmatprep.subr.mxu0 0.0
    %3552 = vmatpush1.msra.mxu0 0.0
    %3553 = vmatprep.subr.mxu0 0.0
    %3554 = vmatpush1.msra.mxu0 0.0
    %3555 = vmatprep.subr.mxu0 0.0
    %3556 = vmatpush1.msra.mxu0 0.0
    %3557 = vmatprep.subr.mxu0 0.0
    %3558 = vmatpush1.msra.mxu0 0.0
    %3559 = vmatprep.subr.mxu0 0.0
    %3560 = vmatpush1.msra.mxu0 0.0
    %3561 = vmatprep.subr.mxu0 0.0
    %3562 = vmatpush1.msra.mxu0 0.0
    %3563 = vmatprep.subr.mxu0 0.0
    %3564 = vmatpush1.msra.mxu0 0.0
    %3565 = vmatprep.subr.mxu0 0.0
    %3566 = vmatpush1.msra.mxu0 0.0
    %3567 = vmatprep.subr.mxu0 0.0
    %3568 = vmatpush1.msra.mxu0 0.0
    %3569 = vmatprep.subr.mxu0 0.0
    %3570 = vmatpush1.msra.mxu0 0.0
    %3571 = vmatprep.subr.mxu0 0.0
    %3572 = vmatpush1.msra.mxu0 0.0
    %3573 = vmatprep.subr.mxu0 0.0
    %3574 = vmatpush1.msra.mxu0 0.0
    %3575 = vmatprep.subr.mxu0 0.0
    %3576 = vmatpush1.msra.mxu0 0.0
    %3577 = vmatprep.subr.mxu0 0.0
    %3578 = vmatpush1.msra.mxu0 0.0
    %3579 = vmatprep.subr.mxu0 0.0
    %3580 = vmatpush1.msra.mxu0 0.0
    %3581 = vmatprep.subr.mxu0 0.0
    %3582 = vmatpush1.msra.mxu0 0.0
    %3583 = vmatprep.subr.mxu0 0.0
    %3584 = vmatpush1.msra.mxu0 0.0
    %3585 = vmatprep.subr.mxu0 0.0
    %3586 = vmatpush1.msra.mxu0 0.0
    %3587 = vmatprep.subr.mxu0 0.0
    %3588 = vmatpush1.msra.mxu0 0.0
    %3589 = vmatprep.subr.mxu0 0.0
    %3590 = vmatpush1.msra.mxu0 0.0
    %3591 = vmatprep.subr.mxu0 0.0
    %3592 = vmatpush1.msra.mxu0 0.0
    %3593 = vmatprep.subr.mxu0 0.0
    %3594 = vmatpush1.msra.mxu0 0.0
    %3595 = vmatprep.subr.mxu0 0.0
    %3596 = vmatpush1.msra.mxu0 0.0
    %3597 = vmatprep.subr.mxu0 0.0
    %3598 = vmatpush1.msra.mxu0 0.0
    %3599 = vmatprep.subr.mxu0 0.0
    %3600 = vmatpush1.msra.mxu0 0.0
    %3601 = vmatprep.mubr.f32.mxu0 0.0
    %3602 = vmatmul.mubr.f32.gmra.mrb[0].mxu0 %v3535
    %v3603 = vpop.f32.mrb[0].mxu0
    %v3604 = vadd.f32 0.0, %v3603
    %v3605 = vpop.f32.mrb[0].mxu0
    %3606 = vdwg.mxu0
    %v3608 = vsel %vm1876, %v3089, 0
    %3610 = vmatprep.subr.mxu0 0.0
    %3611 = vmatpush1.msra.mxu0 %v3167
    %3612 = vmatprep.subr.mxu0 0.0
    %3613 = vmatpush1.msra.mxu0 0.0
    %3614 = vmatprep.subr.mxu0 0.0
    %3615 = vmatpush1.msra.mxu0 0.0
    %3616 = vmatprep.subr.mxu0 0.0
    %3617 = vmatpush1.msra.mxu0 0.0
    %3618 = vmatprep.subr.mxu0 0.0
    %3619 = vmatpush1.msra.mxu0 0.0
    %3620 = vmatprep.subr.mxu0 0.0
    %3621 = vmatpush1.msra.mxu0 0.0
    %3622 = vmatprep.subr.mxu0 0.0
    %3623 = vmatpush1.msra.mxu0 0.0
    %3624 = vmatprep.subr.mxu0 0.0
    %3625 = vmatpush1.msra.mxu0 0.0
    %3626 = vmatprep.subr.mxu0 0.0
    %3627 = vmatpush1.msra.mxu0 0.0
    %3628 = vmatprep.subr.mxu0 0.0
    %3629 = vmatpush1.msra.mxu0 0.0
    %3630 = vmatprep.subr.mxu0 0.0
    %3631 = vmatpush1.msra.mxu0 0.0
    %3632 = vmatprep.subr.mxu0 0.0
    %3633 = vmatpush1.msra.mxu0 0.0
    %3634 = vmatprep.subr.mxu0 0.0
    %3635 = vmatpush1.msra.mxu0 0.0
    %3636 = vmatprep.subr.mxu0 0.0
    %3637 = vmatpush1.msra.mxu0 0.0
    %3638 = vmatprep.subr.mxu0 0.0
    %3639 = vmatpush1.msra.mxu0 0.0
    %3640 = vmatprep.subr.mxu0 0.0
    %3641 = vmatpush1.msra.mxu0 0.0
    %3642 = vmatprep.subr.mxu0 0.0
    %3643 = vmatpush1.msra.mxu0 0.0
    %3644 = vmatprep.subr.mxu0 0.0
    %3645 = vmatpush1.msra.mxu0 0.0
    %3646 = vmatprep.subr.mxu0 0.0
    %3647 = vmatpush1.msra.mxu0 0.0
    %3648 = vmatprep.subr.mxu0 0.0
    %3649 = vmatpush1.msra.mxu0 0.0
    %3650 = vmatprep.subr.mxu0 0.0
    %3651 = vmatpush1.msra.mxu0 0.0
    %3652 = vmatprep.subr.mxu0 0.0
    %3653 = vmatpush1.msra.mxu0 0.0
    %3654 = vmatprep.subr.mxu0 0.0
    %3655 = vmatpush1.msra.mxu0 0.0
    %3656 = vmatprep.subr.mxu0 0.0
    %3657 = vmatpush1.msra.mxu0 0.0
    %3658 = vmatprep.subr.mxu0 0.0
    %3659 = vmatpush1.msra.mxu0 0.0
    %3660 = vmatprep.subr.mxu0 0.0
    %3661 = vmatpush1.msra.mxu0 0.0
    %3662 = vmatprep.subr.mxu0 0.0
    %3663 = vmatpush1.msra.mxu0 0.0
    %3664 = vmatprep.subr.mxu0 0.0
    %3665 = vmatpush1.msra.mxu0 0.0
    %3666 = vmatprep.subr.mxu0 0.0
    %3667 = vmatpush1.msra.mxu0 0.0
    %3668 = vmatprep.subr.mxu0 0.0
    %3669 = vmatpush1.msra.mxu0 0.0
    %3670 = vmatprep.subr.mxu0 0.0
    %3671 = vmatpush1.msra.mxu0 0.0
    %3672 = vmatprep.subr.mxu0 0.0
    %3673 = vmatpush1.msra.mxu0 0.0
    %3674 = vmatprep.mubr.f32.mxu0 0.0
    %3675 = vmatmul.mubr.f32.gmra.mrb[0].mxu0 %v3608
    %v3676 = vpop.f32.mrb[0].mxu0
    %v3677 = vadd.f32 0.0, %v3676
    %v3678 = vpop.f32.mrb[0].mxu0
    %3679 = vdwg.mxu0
    %v3681 = vsel %vm1876, %v3162, 0
    %3683 = vmatprep.subr.mxu0 0.0
    %3684 = vmatpush1.msra.mxu0 %v3168
    %3685 = vmatprep.subr.mxu0 0.0
    %3686 = vmatpush1.msra.mxu0 0.0
    %3687 = vmatprep.subr.mxu0 0.0
    %3688 = vmatpush1.msra.mxu0 0.0
    %3689 = vmatprep.subr.mxu0 0.0
    %3690 = vmatpush1.msra.mxu0 0.0
    %3691 = vmatprep.subr.mxu0 0.0
    %3692 = vmatpush1.msra.mxu0 0.0
    %3693 = vmatprep.subr.mxu0 0.0
    %3694 = vmatpush1.msra.mxu0 0.0
    %3695 = vmatprep.subr.mxu0 0.0
    %3696 = vmatpush1.msra.mxu0 0.0
    %3697 = vmatprep.subr.mxu0 0.0
    %3698 = vmatpush1.msra.mxu0 0.0
    %3699 = vmatprep.subr.mxu0 0.0
    %3700 = vmatpush1.msra.mxu0 0.0
    %3701 = vmatprep.subr.mxu0 0.0
    %3702 = vmatpush1.msra.mxu0 0.0
    %3703 = vmatprep.subr.mxu0 0.0
    %3704 = vmatpush1.msra.mxu0 0.0
    %3705 = vmatprep.subr.mxu0 0.0
    %3706 = vmatpush1.msra.mxu0 0.0
    %3707 = vmatprep.subr.mxu0 0.0
    %3708 = vmatpush1.msra.mxu0 0.0
    %3709 = vmatprep.subr.mxu0 0.0
    %3710 = vmatpush1.msra.mxu0 0.0
    %3711 = vmatprep.subr.mxu0 0.0
    %3712 = vmatpush1.msra.mxu0 0.0
    %3713 = vmatprep.subr.mxu0 0.0
    %3714 = vmatpush1.msra.mxu0 0.0
    %3715 = vmatprep.subr.mxu0 0.0
    %3716 = vmatpush1.msra.mxu0 0.0
    %3717 = vmatprep.subr.mxu0 0.0
    %3718 = vmatpush1.msra.mxu0 0.0
    %3719 = vmatprep.subr.mxu0 0.0
    %3720 = vmatpush1.msra.mxu0 0.0
    %3721 = vmatprep.subr.mxu0 0.0
    %3722 = vmatpush1.msra.mxu0 0.0
    %3723 = vmatprep.subr.mxu0 0.0
    %3724 = vmatpush1.msra.mxu0 0.0
    %3725 = vmatprep.subr.mxu0 0.0
    %3726 = vmatpush1.msra.mxu0 0.0
    %3727 = vmatprep.subr.mxu0 0.0
    %3728 = vmatpush1.msra.mxu0 0.0
    %3729 = vmatprep.subr.mxu0 0.0
    %3730 = vmatpush1.msra.mxu0 0.0
    %3731 = vmatprep.subr.mxu0 0.0
    %3732 = vmatpush1.msra.mxu0 0.0
    %3733 = vmatprep.subr.mxu0 0.0
    %3734 = vmatpush1.msra.mxu0 0.0
    %3735 = vmatprep.subr.mxu0 0.0
    %3736 = vmatpush1.msra.mxu0 0.0
    %3737 = vmatprep.subr.mxu0 0.0
    %3738 = vmatpush1.msra.mxu0 0.0
    %3739 = vmatprep.subr.mxu0 0.0
    %3740 = vmatpush1.msra.mxu0 0.0
    %3741 = vmatprep.subr.mxu0 0.0
    %3742 = vmatpush1.msra.mxu0 0.0
    %3743 = vmatprep.subr.mxu0 0.0
    %3744 = vmatpush1.msra.mxu0 0.0
    %3745 = vmatprep.subr.mxu0 0.0
    %3746 = vmatpush1.msra.mxu0 0.0
    %3747 = vmatprep.mubr.f32.mxu0 0.0
    %3748 = vmatmul.mubr.f32.gmra.mrb[0].mxu0 %v3681
    %v3749 = vpop.f32.mrb[0].mxu0
    %v3750 = vadd.f32 0.0, %v3749
    %v3751 = vpop.f32.mrb[0].mxu0
    %3752 = vdwg.mxu0
    %v3753 = vadd.f32 %v3239, %v3312
    %v3754 = vadd.f32 %v3531, %v3604
    %v3755 = vadd.f32 %v3753, %v3385
    %v3756 = vadd.f32 %v3754, %v3677
    %v3757 = vadd.f32 %v3755, %v3458
    %v3758 = vadd.f32 %v3756, %v3750
    %v3759 = vld [vmem:[%s7] sm:$0x1]
    %v3761 = vlaneseq
    %v3762 = vshrl.u32 %v3761, 7
    %v3763 = vsub.s32 0, %v3762
    %v3764 = vrot.slane %v3759, %v3763
    %v3766 = vadd.f32 %v3757, %v3764
    %v3767 = vadd.f32 %v3758, %v3764
    %3768 = vst.msk [vmem:[#allocation2] sm:$0xff] %vm79, %v3766
    %3769 = vst.msk [vmem:[#allocation2 + $0x8] sm:$0xff] %vm79, %v3767
    // Predicated region
    $region34: #{tpu_custom_call.1} parent=1 // pred_check
      _
    $region35: #{tpu_custom_call.1} parent=1 // pred_check_branch
      %3771 = sbr.rel (0) target = $region37
    $region36: #{tpu_custom_call.1} parent=1 // pred_region
      %s3773 = ssub.s32 256, 256
      %3774 = vsyncadd [#allocation3], %s3773
      %s3775 = sshll.u32 [#allocation2], 4
      %s3776 = int_to_ptr.vmem [resolvable:$true] %s3775
      %3781 = dma.vmem_to_hbm [thread:$0]  %s3776, 256, %s8, [#allocation3], 128, 128, 8
    $region37: #{tpu_custom_call.1} parent=1 // pred_fallthru
      _
    // Predicated region
    $region38: #{tpu_custom_call.1} parent=1 // pred_check
      _
    $region39: #{tpu_custom_call.1} parent=1 // pred_check_branch
      %3783 = sbr.rel (0) target = $region41
    $region40: #{tpu_custom_call.1} parent=1 // pred_region
      %s3785 = ssub.s32 1024, 1024
      %3786 = vsyncadd [#allocation5], %s3785
      %s3787 = sshll.u32 [#allocation4], 4
      %s3788 = int_to_ptr.vmem [resolvable:$true] %s3787
      %3793 = dma.vmem_to_hbm [thread:$0]  %s3788, 1024, %s9, [#allocation5], 128, 128, 8
    $region41: #{tpu_custom_call.1} parent=1 // pred_fallthru
      _
    // Predicated region
    $region42: #{tpu_custom_call.1} parent=1 // pred_check
      _
    $region43: #{tpu_custom_call.1} parent=1 // pred_check_branch
      %3795 = sbr.rel (0) target = $region45
    $region44: #{tpu_custom_call.1} parent=1 // pred_region
      %3796 = dma.done [#allocation3], 256
    $region45: #{tpu_custom_call.1} parent=1 // pred_fallthru
      _
    // Predicated region
    $region46: #{tpu_custom_call.1} parent=1 // pred_check
      _
    $region47: #{tpu_custom_call.1} parent=1 // pred_check_branch
      %3798 = sbr.rel (0) target = $region49
    $region48: #{tpu_custom_call.1} parent=1 // pred_region
      %3799 = dma.done [#allocation5], 1024
    $region49: #{tpu_custom_call.1} parent=1 // pred_fallthru
      _
    %3800 = vsyncpa [#allocation3], 1
    %3801 = vsyncpa [#allocation5], 1

</llo_original>
